<compile_context>
chip_gen: v7x
topology: tpu7x:2x2x1
jax: 0.10.0
libtpu: 0.0.40
codegen_flags: <defaults>
</compile_context>

<pallas_src>
import functools

import jax
import jax.numpy as jnp
from jax.experimental import pallas as pl
from jax.experimental.pallas import tpu as pltpu


def _round_up(a, b):
    return (a + b - 1) // b * b


# ----------------------------------------------------------------------------- kernel
def _sage_layer_kernel(a_ref, hk_ref, hm_ref, wcat_ref, b_ref, alpha_ref,
                       *rest, mode):
    """One SAGE layer tile: grid = (row tiles mi, neighbor tiles ki).

    mode == "first": out = (h_self @ W_skip + b_skip) + PReLU(sage(h))   (== fc_skip(x)+h1)
    mode == "mid"  : out = h_self + PReLU(sage(h))                       (== z + h_next)
    mode == "last" : out = PReLU(sage(h))
    """
    if mode == "first":
        wskip_ref, bskip_ref, o_ref, acc_ref = rest
    else:
        o_ref, acc_ref = rest

    ki = pl.program_id(1)

    @pl.when(ki == 0)
    def _init():
        acc_ref[...] = jnp.zeros_like(acc_ref)

    # Mean-neighbor aggregation: accumulate A[mi, ki] @ h[ki, :] in f32 on the MXU.
    acc_ref[...] += jnp.dot(a_ref[...], hk_ref[...],
                            preferred_element_type=jnp.float32)

    @pl.when(ki == pl.num_programs(1) - 1)
    def _finalize():
        agg = acc_ref[...].astype(jnp.bfloat16)          # (tm, F)
        h_self = hm_ref[...]                             # (tm, F) bf16
        # Fused weight matmul: [agg | h_self] @ [W_l; W_r]  -> one MXU push, 2x K.
        cat = jnp.concatenate([agg, h_self], axis=-1)    # (tm, 2F)
        z = jnp.dot(cat, wcat_ref[...],
                    preferred_element_type=jnp.float32) + b_ref[...]
        alpha = alpha_ref[0, 0]
        h = jnp.where(z >= 0, z, alpha * z)              # PReLU (cmp+select+mul)
        if mode == "first":
            skip = (jnp.dot(h_self, wskip_ref[...],
                            preferred_element_type=jnp.float32) + bskip_ref[...])
            out = skip + h
        elif mode == "mid":
            out = h_self.astype(jnp.float32) + h
        else:
            out = h
        o_ref[...] = out.astype(o_ref.dtype)


def _sage_layer(a_bf, h_in, w_cat, b, alpha, *, mode, out_dtype, tile,
                wskip=None, bskip=None):
    n_pad = a_bf.shape[0]
    f_in = h_in.shape[1]
    f_out = w_cat.shape[1]
    tm = tk = tile
    assert n_pad % tm == 0 and n_pad % tk == 0
    grid = (n_pad // tm, n_pad // tk)

    in_specs = [
        pl.BlockSpec((tm, tk), lambda mi, ki: (mi, ki)),          # A tile (bf16)
        pl.BlockSpec((tk, f_in), lambda mi, ki: (ki, 0)),         # h rows for aggregation
        pl.BlockSpec((tm, f_in), lambda mi, ki: (mi, 0)),         # h rows for root term
        pl.BlockSpec((2 * f_in, f_out), lambda mi, ki: (0, 0)),   # fused [W_l; W_r]
        pl.BlockSpec((1, f_out), lambda mi, ki: (0, 0)),          # bias (f32)
        pl.BlockSpec((1, 1), lambda mi, ki: (0, 0),
                     memory_space=pltpu.MemorySpace.SMEM),        # PReLU alpha scalar
    ]
    args = [a_bf, h_in, h_in, w_cat, b, alpha]
    if mode == "first":
        in_specs += [pl.BlockSpec((f_in, f_out), lambda mi, ki: (0, 0)),   # W_skip
                     pl.BlockSpec((1, f_out), lambda mi, ki: (0, 0))]      # b_skip
        args += [wskip, bskip]

    return pl.pallas_call(
        functools.partial(_sage_layer_kernel, mode=mode),
        out_shape=jax.ShapeDtypeStruct((n_pad, f_out), out_dtype),
        grid=grid,
        in_specs=in_specs,
        out_specs=pl.BlockSpec((tm, f_out), lambda mi, ki: (mi, 0)),
        scratch_shapes=[pltpu.VMEM((tm, f_in), jnp.float32)],     # agg accumulator
        compiler_params=pltpu.CompilerParams(
            dimension_semantics=("parallel", "arbitrary"),
            vmem_limit_bytes=32 * 1024 * 1024),                   # safe on v5e/v6e/v7x
    )(*args)


# ----------------------------------------------------------------------------- forward
def graph_skip_forward(x, edge_index, params, *, tile=256):
    """x: (N, in_ft) f32, edge_index: (2, E) int32, tile: node tile (multiple of 128)."""
    assert tile % 128 == 0
    N, in_ft = x.shape
    out_ft = params["w_skip"].shape[1]
    f_in = _round_up(in_ft, 128)      # lane-dense feature dims
    f_out = _round_up(out_ft, 128)
    n_pad = _round_up(N, tile)

    # Dense row-normalized adjacency so mean aggregation is a matmul; built f32,
    # stored bf16 (halves HBM traffic, doubles MXU rate; 1/deg rounds fine in bf16).
    # TODO(synk): replace dense A@h with block-sparse gathered aggregation via
    # PrefetchScalarGridSpec neighbor lists so empty tiles are skipped at large N.
    src, dst = edge_index[0], edge_index[1]
    A = jnp.zeros((n_pad, n_pad), jnp.float32).at[dst, src].add(1.0)
    deg = A.sum(axis=1, keepdims=True)
    A = (A * jnp.where(deg > 0, 1.0 / jnp.maximum(deg, 1.0), 0.0)).astype(jnp.bfloat16)

    def pad2(a, r, c):
        return jnp.pad(a, ((0, r - a.shape[0]), (0, c - a.shape[1])))

    bf = jnp.bfloat16
    x_p = pad2(x.astype(jnp.float32), n_pad, f_in).astype(bf)
    w_skip = pad2(params["w_skip"], f_in, f_out).astype(bf)
    b_skip = pad2(params["b_skip"], 1, f_out)
    wcat1 = jnp.concatenate([pad2(params["w1_l"], f_in, f_out),
                             pad2(params["w1_r"], f_in, f_out)], axis=0).astype(bf)
    wcat2 = jnp.concatenate([pad2(params["w2_l"], f_out, f_out),
                             pad2(params["w2_r"], f_out, f_out)], axis=0).astype(bf)
    wcat3 = jnp.concatenate([pad2(params["w3_l"], f_out, f_out),
                             pad2(params["w3_r"], f_out, f_out)], axis=0).astype(bf)
    b1 = pad2(params["b1"], 1, f_out)
    b2 = pad2(params["b2"], 1, f_out)
    b3 = pad2(params["b3"], 1, f_out)
    alpha = params["alpha"].reshape(1, 1).astype(jnp.float32)

    # layer 1: z2 = fc_skip(x) + PReLU(conv1(x))
    z2 = _sage_layer(A, x_p, wcat1, b1, alpha, mode="first", out_dtype=bf,
                     tile=tile, wskip=w_skip, bskip=b_skip)
    # layer 2: z3 = z2 + PReLU(conv2(z2))   (== fc_skip(x) + h1 + h2)
    z3 = _sage_layer(A, z2, wcat2, b2, alpha, mode="mid", out_dtype=bf, tile=tile)
    # layer 3: h3 = PReLU(conv3(z3))
    h3 = _sage_layer(A, z3, wcat3, b3, alpha, mode="last", out_dtype=jnp.float32,
                     tile=tile)
    return h3[:N, :out_ft]


# ----------------------------------------------------------------------------- params
def init_params(key, in_ft, out_ft):
    """Deterministic synthetic init (xavier-uniform-style); weights stored (in, out)."""
    def glorot(k, fan_in, fan_out):
        lim = (6.0 / (fan_in + fan_out)) ** 0.5
        return jax.random.uniform(k, (fan_in, fan_out), jnp.float32, -lim, lim)

    ks = jax.random.split(key, 7)
    zeros_out = jnp.zeros((1, out_ft), jnp.float32)
    return {
        "w_skip": glorot(ks[0], in_ft, out_ft), "b_skip": zeros_out,   # fc_skip bias -> 0.0
        "w1_l": glorot(ks[1], in_ft, out_ft), "w1_r": glorot(ks[2], in_ft, out_ft), "b1": zeros_out,
        "w2_l": glorot(ks[3], out_ft, out_ft), "w2_r": glorot(ks[4], out_ft, out_ft), "b2": zeros_out,
        "w3_l": glorot(ks[5], out_ft, out_ft), "w3_r": glorot(ks[6], out_ft, out_ft), "b3": zeros_out,
        "alpha": jnp.full((1, 1), 0.25, jnp.float32),                  # PReLU default
    }


# ----------------------------------------------------------------------------- references
def _reference(x, edge_index, params):
    """Pure-JAX f32 reference (module semantics)."""
    N = x.shape[0]
    src, dst = edge_index[0], edge_index[1]
    A = jnp.zeros((N, N), jnp.float32).at[dst, src].add(1.0)
    deg = A.sum(axis=1, keepdims=True)
    A = A * jnp.where(deg > 0, 1.0 / jnp.maximum(deg, 1.0), 0.0)
    a = params["alpha"][0, 0]
    prelu = lambda z: jnp.where(z >= 0, z, a * z)
    sage = lambda h, wl, wr, b: (A @ h) @ wl + h @ wr + b
    skip = x @ params["w_skip"] + params["b_skip"]
    h1 = prelu(sage(x, params["w1_l"], params["w1_r"], params["b1"]))
    h2 = prelu(sage(skip + h1, params["w2_l"], params["w2_r"], params["b2"]))
    h3 = prelu(sage(skip + h1 + h2, params["w3_l"], params["w3_r"], params["b3"]))
    return h3


def _reference_bf16(x, edge_index, params):
    """Emulates the kernel's bf16 cast points (f32 accumulation) for a tight check."""
    N = x.shape[0]
    src, dst = edge_index[0], edge_index[1]
    A = jnp.zeros((N, N), jnp.float32).at[dst, src].add(1.0)
    deg = A.sum(axis=1, keepdims=True)
    A = (A * jnp.where(deg > 0, 1.0 / jnp.maximum(deg, 1.0), 0.0)).astype(jnp.bfloat16)
    bfc = lambda w: w.astype(jnp.bfloat16)
    dot = lambda p, q: jnp.dot(p, q, preferred_element_type=jnp.float32)
    a = params["alpha"][0, 0]
    prelu = lambda z: jnp.where(z >= 0, z, a * z)

    def sage(h_bf, wl, wr, b):
        agg = dot(A, h_bf).astype(jnp.bfloat16)
        cat = jnp.concatenate([agg, h_bf], axis=-1)
        wcat = jnp.concatenate([bfc(wl), bfc(wr)], axis=0)
        return prelu(dot(cat, wcat) + b)

    x_bf = bfc(x)
    skip = dot(x_bf, bfc(params["w_skip"])) + params["b_skip"]
    h1 = sage(x_bf, params["w1_l"], params["w1_r"], params["b1"])
    z2 = (skip + h1).astype(jnp.bfloat16)
    h2 = sage(z2, params["w2_l"], params["w2_r"], params["b2"])
    z3 = (z2.astype(jnp.float32) + h2).astype(jnp.bfloat16)
    h3 = sage(z3, params["w3_l"], params["w3_r"], params["b3"])
    return h3


# ----------------------------------------------------------------------------- demo
if __name__ == "__main__":
    # Small graph, but big enough (with tile=128) to exercise a 3x3 grid:
    # multi-tile rows, a multi-step reduction with accumulator init/finalize, and padding.
    N, E, in_ft, out_ft = 300, 1200, 16, 32
    key = jax.random.PRNGKey(0)
    kx, ke, kp = jax.random.split(key, 3)

    x = jax.random.normal(kx, (N, in_ft), jnp.float32)
    edge_index = jax.random.randint(ke, (2, E), 0, N, jnp.int32)
    params = init_params(kp, in_ft, out_ft)

    fwd = jax.jit(functools.partial(graph_skip_forward, tile=128))
    out = jax.block_until_ready(fwd(x, edge_index, params))

    assert out.shape == (N, out_ft)
    assert bool(jnp.all(jnp.isfinite(out)))

    # Tight check vs a reference that matches the kernel's bf16 cast points.
    ref_q = _reference_bf16(x, edge_index, params)
    assert jnp.allclose(out, ref_q, atol=2e-2, rtol=2e-2), float(jnp.max(jnp.abs(out - ref_q)))

    # bf16-vs-f32 semantic sanity against the full-precision module math.
    ref = _reference(x, edge_index, params)
    rel = float(jnp.max(jnp.abs(out - ref)) / jnp.max(jnp.abs(ref)))
    assert rel < 5e-2, rel

    print("KERNEL_OK")
</pallas_src>

<mosaic_0001>
module attributes {stable_mosaic.version = 11 : i64} {
  func.func private @main(%arg0: i32) attributes {dimension_semantics = [#tpu.dimension_semantics<core_parallel>], iteration_bounds = array<i64: 2>, tpu.core_type = #tpu.core_type<sc_scalar_subcore>, window_params = []} {
    return
  }
}

module attributes {stable_mosaic.version = 11 : i64} {
  func.func private @main(%arg0: i32) attributes {dimension_semantics = [#tpu.dimension_semantics<core_parallel>], iteration_bounds = array<i64: 2>, tpu.core_type = #tpu.core_type<sc_scalar_subcore>, window_params = []} {
    return
  }
}

module attributes {stable_mosaic.version = 11 : i64} {
  func.func @_sage_layer_kernel(%arg0: i32, %arg1: i32, %arg2: memref<128x128xbf16, #tpu.memory_space<vmem>>, %arg3: memref<128x128xbf16, #tpu.memory_space<vmem>>, %arg4: memref<128x128xbf16, #tpu.memory_space<vmem>>, %arg5: memref<256x128xbf16, #tpu.memory_space<vmem>>, %arg6: memref<1x128xf32, #tpu.memory_space<vmem>>, %arg7: memref<1x1xf32, #tpu.memory_space<smem>>, %arg8: memref<128x128xbf16, #tpu.memory_space<vmem>>, %arg9: memref<128x128xf32, #tpu.memory_space<vmem>>) attributes {dimension_semantics = [#tpu.dimension_semantics<parallel>, #tpu.dimension_semantics<arbitrary>], iteration_bounds = array<i64: 3, 3>, scalar_prefetch = 0 : i64, scratch_operands = 1 : i64, tpu.core_type = #tpu.core_type<tc>, window_params = [{transform_indices = @transform_0, window_bounds = array<i64: 128, 128>}, {transform_indices = @transform_1, window_bounds = array<i64: 128, 128>}, {transform_indices = @transform_2, window_bounds = array<i64: 128, 128>}, {pipeline_mode = #tpu.pipeline_mode<synchronous>, transform_indices = @transform_3, window_bounds = array<i64: 256, 128>}, {pipeline_mode = #tpu.pipeline_mode<synchronous>, transform_indices = @transform_4, window_bounds = array<i64: 1, 128>}, {transform_indices = @transform_5, window_bounds = array<i64: 1, 1>}, {transform_indices = @transform_6, window_bounds = array<i64: 128, 128>}]} {
    %c0_i32 = arith.constant 0 : i32
    %0 = arith.cmpi eq, %arg1, %c0_i32 : i32
    %1 = arith.extui %0 : i1 to i32
    %c0_i32_0 = arith.constant 0 : i32
    %2 = arith.cmpi ne, %1, %c0_i32_0 : i32
    scf.if %2 {
      %cst_9 = arith.constant 0.000000e+00 : f32
      %12 = vector.broadcast %cst_9 : f32 to vector<128x128xf32>
      %c0_10 = arith.constant 0 : index
      %c0_11 = arith.constant 0 : index
      %13 = vector.load %arg9[%c0_10, %c0_11] : memref<128x128xf32, #tpu.memory_space<vmem>>, vector<128x128xf32>
      tpu.vector_store %arg9[%c0_10, %c0_11], %12 {strides = array<i32>} : memref<128x128xf32, #tpu.memory_space<vmem>>, vector<128x128xf32>,
    } else {
    }
    %c0 = arith.constant 0 : index
    %c0_1 = arith.constant 0 : index
    %3 = vector.load %arg9[%c0, %c0_1] : memref<128x128xf32, #tpu.memory_space<vmem>>, vector<128x128xf32>
    %c0_2 = arith.constant 0 : index
    %c0_3 = arith.constant 0 : index
    %4 = vector.load %arg2[%c0_2, %c0_3] : memref<128x128xbf16, #tpu.memory_space<vmem>>, vector<128x128xbf16>
    %c0_4 = arith.constant 0 : index
    %c0_5 = arith.constant 0 : index
    %5 = vector.load %arg3[%c0_4, %c0_5] : memref<128x128xbf16, #tpu.memory_space<vmem>>, vector<128x128xbf16>
    %cst = arith.constant dense<0.000000e+00> : vector<128x128xf32>
    %6 = tpu.matmul %4, %5, %cst {dimension_numbers = #tpu.dot_dimension_numbers<[1], [0], [0], [1], [0, 0, 1, 1], [], []>} : vector<128x128xbf16>, vector<128x128xbf16>, vector<128x128xf32> -> vector<128x128xf32>
    %7 = arith.addf %3, %6 : vector<128x128xf32>
    %c0_6 = arith.constant 0 : index
    %c0_7 = arith.constant 0 : index
    %8 = vector.load %arg9[%c0_6, %c0_7] : memref<128x128xf32, #tpu.memory_space<vmem>>, vector<128x128xf32>
    tpu.vector_store %arg9[%c0_6, %c0_7], %7 {strides = array<i32>} : memref<128x128xf32, #tpu.memory_space<vmem>>, vector<128x128xf32>,
    %c2_i32 = arith.constant 2 : i32
    %9 = arith.cmpi eq, %arg1, %c2_i32 : i32
    %10 = arith.extui %9 : i1 to i32
    %c0_i32_8 = arith.constant 0 : i32
    %11 = arith.cmpi ne, %10, %c0_i32_8 : i32
    scf.if %11 {
      %c0_9 = arith.constant 0 : index
      %c0_10 = arith.constant 0 : index
      %12 = vector.load %arg9[%c0_9, %c0_10] : memref<128x128xf32, #tpu.memory_space<vmem>>, vector<128x128xf32>
      %13 = arith.truncf %12 : vector<128x128xf32> to vector<128x128xbf16>
      %c0_11 = arith.constant 0 : index
      %c0_12 = arith.constant 0 : index
      %14 = vector.load %arg4[%c0_11, %c0_12] : memref<128x128xbf16, #tpu.memory_space<vmem>>, vector<128x128xbf16>
      %15 = tpu.concatenate %13, %14 in 1 : vector<128x128xbf16>, vector<128x128xbf16> -> vector<128x256xbf16>
      %c0_13 = arith.constant 0 : index
      %c0_14 = arith.constant 0 : index
      %16 = vector.load %arg5[%c0_13, %c0_14] : memref<256x128xbf16, #tpu.memory_space<vmem>>, vector<256x128xbf16>
      %cst_15 = arith.constant dense<0.000000e+00> : vector<128x128xf32>
      %17 = tpu.matmul %15, %16, %cst_15 {dimension_numbers = #tpu.dot_dimension_numbers<[1], [0], [0], [1], [0, 0, 1, 1], [], []>} : vector<128x256xbf16>, vector<256x128xbf16>, vector<128x128xf32> -> vector<128x128xf32>
      %c0_16 = arith.constant 0 : index
      %c0_17 = arith.constant 0 : index
      %18 = vector.load %arg6[%c0_16, %c0_17] : memref<1x128xf32, #tpu.memory_space<vmem>>, vector<1x128xf32>
      %19 = vector.broadcast %18 : vector<1x128xf32> to vector<128x128xf32>
      %20 = arith.addf %17, %19 : vector<128x128xf32>
      %c0_18 = arith.constant 0 : index
      %c0_19 = arith.constant 0 : index
      %21 = memref.load %arg7[%c0_18, %c0_19] : memref<1x1xf32, #tpu.memory_space<smem>>
      %cst_20 = arith.constant 0.000000e+00 : f32
      %22 = vector.broadcast %cst_20 : f32 to vector<128x128xf32>
      %23 = arith.cmpf oge, %20, %22 : vector<128x128xf32>
      %24 = vector.broadcast %21 : f32 to vector<128x128xf32>
      %25 = arith.mulf %24, %20 : vector<128x128xf32>
      %26 = arith.select %23, %20, %25 : vector<128x128xi1>, vector<128x128xf32>
      %27 = arith.extf %14 : vector<128x128xbf16> to vector<128x128xf32>
      %28 = arith.addf %27, %26 : vector<128x128xf32>
      %29 = arith.truncf %28 : vector<128x128xf32> to vector<128x128xbf16>
      %c0_21 = arith.constant 0 : index
      %c0_22 = arith.constant 0 : index
      %30 = vector.load %arg8[%c0_21, %c0_22] : memref<128x128xbf16, #tpu.memory_space<vmem>>, vector<128x128xbf16>
      tpu.vector_store %arg8[%c0_21, %c0_22], %29 {strides = array<i32>} : memref<128x128xbf16, #tpu.memory_space<vmem>>, vector<128x128xbf16>,
    } else {
    }
    return
  }
  func.func @transform_0(%arg0: i32, %arg1: i32) -> (i32, i32) {
    %c0_i32 = arith.constant 0 : i32
    return %arg0, %arg1 : i32, i32
  }
  func.func @transform_1(%arg0: i32, %arg1: i32) -> (i32, i32) {
    %c0_i32 = arith.constant 0 : i32
    %c0_i32_0 = arith.constant 0 : i32
    return %arg1, %c0_i32 : i32, i32
  }
  func.func @transform_2(%arg0: i32, %arg1: i32) -> (i32, i32) {
    %c0_i32 = arith.constant 0 : i32
    %c0_i32_0 = arith.constant 0 : i32
    return %arg0, %c0_i32 : i32, i32
  }
  func.func @transform_3(%arg0: i32, %arg1: i32) -> (i32, i32) {
    %c0_i32 = arith.constant 0 : i32
    %c0_i32_0 = arith.constant 0 : i32
    %c0_i32_1 = arith.constant 0 : i32
    return %c0_i32, %c0_i32_0 : i32, i32
  }
  func.func @transform_4(%arg0: i32, %arg1: i32) -> (i32, i32) {
    %c0_i32 = arith.constant 0 : i32
    %c0_i32_0 = arith.constant 0 : i32
    %c0_i32_1 = arith.constant 0 : i32
    return %c0_i32, %c0_i32_0 : i32, i32
  }
  func.func @transform_5(%arg0: i32, %arg1: i32) -> (i32, i32) {
    %c0_i32 = arith.constant 0 : i32
    %c0_i32_0 = arith.constant 0 : i32
    %c0_i32_1 = arith.constant 0 : i32
    return %c0_i32, %c0_i32_0 : i32, i32
  }
  func.func @transform_6(%arg0: i32, %arg1: i32) -> (i32, i32) {
    %c0_i32 = arith.constant 0 : i32
    %c0_i32_0 = arith.constant 0 : i32
    return %arg0, %c0_i32 : i32, i32
  }
}

module attributes {stable_mosaic.version = 11 : i64} {
  func.func @_sage_layer_kernel(%arg0: i32, %arg1: i32, %arg2: memref<128x128xbf16, #tpu.memory_space<vmem>>, %arg3: memref<128x128xbf16, #tpu.memory_space<vmem>>, %arg4: memref<128x128xbf16, #tpu.memory_space<vmem>>, %arg5: memref<256x128xbf16, #tpu.memory_space<vmem>>, %arg6: memref<1x128xf32, #tpu.memory_space<vmem>>, %arg7: memref<1x1xf32, #tpu.memory_space<smem>>, %arg8: memref<128x128xbf16, #tpu.memory_space<vmem>>, %arg9: memref<1x128xf32, #tpu.memory_space<vmem>>, %arg10: memref<128x128xbf16, #tpu.memory_space<vmem>>, %arg11: memref<128x128xf32, #tpu.memory_space<vmem>>) attributes {dimension_semantics = [#tpu.dimension_semantics<parallel>, #tpu.dimension_semantics<arbitrary>], iteration_bounds = array<i64: 3, 3>, scalar_prefetch = 0 : i64, scratch_operands = 1 : i64, tpu.core_type = #tpu.core_type<tc>, window_params = [{transform_indices = @transform_0, window_bounds = array<i64: 128, 128>}, {transform_indices = @transform_1, window_bounds = array<i64: 128, 128>}, {transform_indices = @transform_2, window_bounds = array<i64: 128, 128>}, {pipeline_mode = #tpu.pipeline_mode<synchronous>, transform_indices = @transform_3, window_bounds = array<i64: 256, 128>}, {pipeline_mode = #tpu.pipeline_mode<synchronous>, transform_indices = @transform_4, window_bounds = array<i64: 1, 128>}, {transform_indices = @transform_5, window_bounds = array<i64: 1, 1>}, {pipeline_mode = #tpu.pipeline_mode<synchronous>, transform_indices = @transform_6, window_bounds = array<i64: 128, 128>}, {pipeline_mode = #tpu.pipeline_mode<synchronous>, transform_indices = @transform_7, window_bounds = array<i64: 1, 128>}, {transform_indices = @transform_8, window_bounds = array<i64: 128, 128>}]} {
    %c0_i32 = arith.constant 0 : i32
    %0 = arith.cmpi eq, %arg1, %c0_i32 : i32
    %1 = arith.extui %0 : i1 to i32
    %c0_i32_0 = arith.constant 0 : i32
    %2 = arith.cmpi ne, %1, %c0_i32_0 : i32
    scf.if %2 {
      %cst_9 = arith.constant 0.000000e+00 : f32
      %12 = vector.broadcast %cst_9 : f32 to vector<128x128xf32>
      %c0_10 = arith.constant 0 : index
      %c0_11 = arith.constant 0 : index
      %13 = vector.load %arg11[%c0_10, %c0_11] : memref<128x128xf32, #tpu.memory_space<vmem>>, vector<128x128xf32>
      tpu.vector_store %arg11[%c0_10, %c0_11], %12 {strides = array<i32>} : memref<128x128xf32, #tpu.memory_space<vmem>>, vector<128x128xf32>,
    } else {
    }
    %c0 = arith.constant 0 : index
    %c0_1 = arith.constant 0 : index
    %3 = vector.load %arg11[%c0, %c0_1] : memref<128x128xf32, #tpu.memory_space<vmem>>, vector<128x128xf32>
    %c0_2 = arith.constant 0 : index
    %c0_3 = arith.constant 0 : index
    %4 = vector.load %arg2[%c0_2, %c0_3] : memref<128x128xbf16, #tpu.memory_space<vmem>>, vector<128x128xbf16>
    %c0_4 = arith.constant 0 : index
    %c0_5 = arith.constant 0 : index
    %5 = vector.load %arg3[%c0_4, %c0_5] : memref<128x128xbf16, #tpu.memory_space<vmem>>, vector<128x128xbf16>
    %cst = arith.constant dense<0.000000e+00> : vector<128x128xf32>
    %6 = tpu.matmul %4, %5, %cst {dimension_numbers = #tpu.dot_dimension_numbers<[1], [0], [0], [1], [0, 0, 1, 1], [], []>} : vector<128x128xbf16>, vector<128x128xbf16>, vector<128x128xf32> -> vector<128x128xf32>
    %7 = arith.addf %3, %6 : vector<128x128xf32>
    %c0_6 = arith.constant 0 : index
    %c0_7 = arith.constant 0 : index
    %8 = vector.load %arg11[%c0_6, %c0_7] : memref<128x128xf32, #tpu.memory_space<vmem>>, vector<128x128xf32>
    tpu.vector_store %arg11[%c0_6, %c0_7], %7 {strides = array<i32>} : memref<128x128xf32, #tpu.memory_space<vmem>>, vector<128x128xf32>,
    %c2_i32 = arith.constant 2 : i32
    %9 = arith.cmpi eq, %arg1, %c2_i32 : i32
    %10 = arith.extui %9 : i1 to i32
    %c0_i32_8 = arith.constant 0 : i32
    %11 = arith.cmpi ne, %10, %c0_i32_8 : i32
    scf.if %11 {
      %c0_9 = arith.constant 0 : index
      %c0_10 = arith.constant 0 : index
      %12 = vector.load %arg11[%c0_9, %c0_10] : memref<128x128xf32, #tpu.memory_space<vmem>>, vector<128x128xf32>
      %13 = arith.truncf %12 : vector<128x128xf32> to vector<128x128xbf16>
      %c0_11 = arith.constant 0 : index
      %c0_12 = arith.constant 0 : index
      %14 = vector.load %arg4[%c0_11, %c0_12] : memref<128x128xbf16, #tpu.memory_space<vmem>>, vector<128x128xbf16>
      %15 = tpu.concatenate %13, %14 in 1 : vector<128x128xbf16>, vector<128x128xbf16> -> vector<128x256xbf16>
      %c0_13 = arith.constant 0 : index
      %c0_14 = arith.constant 0 : index
      %16 = vector.load %arg5[%c0_13, %c0_14] : memref<256x128xbf16, #tpu.memory_space<vmem>>, vector<256x128xbf16>
      %cst_15 = arith.constant dense<0.000000e+00> : vector<128x128xf32>
      %17 = tpu.matmul %15, %16, %cst_15 {dimension_numbers = #tpu.dot_dimension_numbers<[1], [0], [0], [1], [0, 0, 1, 1], [], []>} : vector<128x256xbf16>, vector<256x128xbf16>, vector<128x128xf32> -> vector<128x128xf32>
      %c0_16 = arith.constant 0 : index
      %c0_17 = arith.constant 0 : index
      %18 = vector.load %arg6[%c0_16, %c0_17] : memref<1x128xf32, #tpu.memory_space<vmem>>, vector<1x128xf32>
      %19 = vector.broadcast %18 : vector<1x128xf32> to vector<128x128xf32>
      %20 = arith.addf %17, %19 : vector<128x128xf32>
      %c0_18 = arith.constant 0 : index
      %c0_19 = arith.constant 0 : index
      %21 = memref.load %arg7[%c0_18, %c0_19] : memref<1x1xf32, #tpu.memory_space<smem>>
      %cst_20 = arith.constant 0.000000e+00 : f32
      %22 = vector.broadcast %cst_20 : f32 to vector<128x128xf32>
      %23 = arith.cmpf oge, %20, %22 : vector<128x128xf32>
      %24 = vector.broadcast %21 : f32 to vector<128x128xf32>
      %25 = arith.mulf %24, %20 : vector<128x128xf32>
      %26 = arith.select %23, %20, %25 : vector<128x128xi1>, vector<128x128xf32>
      %c0_21 = arith.constant 0 : index
      %c0_22 = arith.constant 0 : index
      %27 = vector.load %arg8[%c0_21, %c0_22] : memref<128x128xbf16, #tpu.memory_space<vmem>>, vector<128x128xbf16>
      %cst_23 = arith.constant dense<0.000000e+00> : vector<128x128xf32>
      %28 = tpu.matmul %14, %27, %cst_23 {dimension_numbers = #tpu.dot_dimension_numbers<[1], [0], [0], [1], [0, 0, 1, 1], [], []>} : vector<128x128xbf16>, vector<128x128xbf16>, vector<128x128xf32> -> vector<128x128xf32>
      %c0_24 = arith.constant 0 : index
      %c0_25 = arith.constant 0 : index
      %29 = vector.load %arg9[%c0_24, %c0_25] : memref<1x128xf32, #tpu.memory_space<vmem>>, vector<1x128xf32>
      %30 = vector.broadcast %29 : vector<1x128xf32> to vector<128x128xf32>
      %31 = arith.addf %28, %30 : vector<128x128xf32>
      %32 = arith.addf %31, %26 : vector<128x128xf32>
      %33 = arith.truncf %32 : vector<128x128xf32> to vector<128x128xbf16>
      %c0_26 = arith.constant 0 : index
      %c0_27 = arith.constant 0 : index
      %34 = vector.load %arg10[%c0_26, %c0_27] : memref<128x128xbf16, #tpu.memory_space<vmem>>, vector<128x128xbf16>
      tpu.vector_store %arg10[%c0_26, %c0_27], %33 {strides = array<i32>} : memref<128x128xbf16, #tpu.memory_space<vmem>>, vector<128x128xbf16>,
    } else {
    }
    return
  }
  func.func @transform_0(%arg0: i32, %arg1: i32) -> (i32, i32) {
    %c0_i32 = arith.constant 0 : i32
    return %arg0, %arg1 : i32, i32
  }
  func.func @transform_1(%arg0: i32, %arg1: i32) -> (i32, i32) {
    %c0_i32 = arith.constant 0 : i32
    %c0_i32_0 = arith.constant 0 : i32
    return %arg1, %c0_i32 : i32, i32
  }
  func.func @transform_2(%arg0: i32, %arg1: i32) -> (i32, i32) {
    %c0_i32 = arith.constant 0 : i32
    %c0_i32_0 = arith.constant 0 : i32
    return %arg0, %c0_i32 : i32, i32
  }
  func.func @transform_3(%arg0: i32, %arg1: i32) -> (i32, i32) {
    %c0_i32 = arith.constant 0 : i32
    %c0_i32_0 = arith.constant 0 : i32
    %c0_i32_1 = arith.constant 0 : i32
    return %c0_i32, %c0_i32_0 : i32, i32
  }
  func.func @transform_4(%arg0: i32, %arg1: i32) -> (i32, i32) {
    %c0_i32 = arith.constant 0 : i32
    %c0_i32_0 = arith.constant 0 : i32
    %c0_i32_1 = arith.constant 0 : i32
    return %c0_i32, %c0_i32_0 : i32, i32
  }
  func.func @transform_5(%arg0: i32, %arg1: i32) -> (i32, i32) {
    %c0_i32 = arith.constant 0 : i32
    %c0_i32_0 = arith.constant 0 : i32
    %c0_i32_1 = arith.constant 0 : i32
    return %c0_i32, %c0_i32_0 : i32, i32
  }
  func.func @transform_6(%arg0: i32, %arg1: i32) -> (i32, i32) {
    %c0_i32 = arith.constant 0 : i32
    %c0_i32_0 = arith.constant 0 : i32
    %c0_i32_1 = arith.constant 0 : i32
    return %c0_i32, %c0_i32_0 : i32, i32
  }
  func.func @transform_7(%arg0: i32, %arg1: i32) -> (i32, i32) {
    %c0_i32 = arith.constant 0 : i32
    %c0_i32_0 = arith.constant 0 : i32
    %c0_i32_1 = arith.constant 0 : i32
    return %c0_i32, %c0_i32_0 : i32, i32
  }
  func.func @transform_8(%arg0: i32, %arg1: i32) -> (i32, i32) {
    %c0_i32 = arith.constant 0 : i32
    %c0_i32_0 = arith.constant 0 : i32
    return %arg0, %c0_i32 : i32, i32
  }
}

module attributes {stable_mosaic.version = 11 : i64} {
  func.func @_sage_layer_kernel(%arg0: i32, %arg1: i32, %arg2: memref<128x128xbf16, #tpu.memory_space<vmem>>, %arg3: memref<128x128xbf16, #tpu.memory_space<vmem>>, %arg4: memref<128x128xbf16, #tpu.memory_space<vmem>>, %arg5: memref<256x128xbf16, #tpu.memory_space<vmem>>, %arg6: memref<1x128xf32, #tpu.memory_space<vmem>>, %arg7: memref<1x1xf32, #tpu.memory_space<smem>>, %arg8: memref<128x128xf32, #tpu.memory_space<vmem>>, %arg9: memref<128x128xf32, #tpu.memory_space<vmem>>) attributes {dimension_semantics = [#tpu.dimension_semantics<parallel>, #tpu.dimension_semantics<arbitrary>], iteration_bounds = array<i64: 3, 3>, scalar_prefetch = 0 : i64, scratch_operands = 1 : i64, tpu.core_type = #tpu.core_type<tc>, window_params = [{transform_indices = @transform_0, window_bounds = array<i64: 128, 128>}, {transform_indices = @transform_1, window_bounds = array<i64: 128, 128>}, {transform_indices = @transform_2, window_bounds = array<i64: 128, 128>}, {pipeline_mode = #tpu.pipeline_mode<synchronous>, transform_indices = @transform_3, window_bounds = array<i64: 256, 128>}, {pipeline_mode = #tpu.pipeline_mode<synchronous>, transform_indices = @transform_4, window_bounds = array<i64: 1, 128>}, {transform_indices = @transform_5, window_bounds = array<i64: 1, 1>}, {transform_indices = @transform_6, window_bounds = array<i64: 128, 128>}]} {
    %c0_i32 = arith.constant 0 : i32
    %0 = arith.cmpi eq, %arg1, %c0_i32 : i32
    %1 = arith.extui %0 : i1 to i32
    %c0_i32_0 = arith.constant 0 : i32
    %2 = arith.cmpi ne, %1, %c0_i32_0 : i32
    scf.if %2 {
      %cst_9 = arith.constant 0.000000e+00 : f32
      %12 = vector.broadcast %cst_9 : f32 to vector<128x128xf32>
      %c0_10 = arith.constant 0 : index
      %c0_11 = arith.constant 0 : index
      %13 = vector.load %arg9[%c0_10, %c0_11] : memref<128x128xf32, #tpu.memory_space<vmem>>, vector<128x128xf32>
      tpu.vector_store %arg9[%c0_10, %c0_11], %12 {strides = array<i32>} : memref<128x128xf32, #tpu.memory_space<vmem>>, vector<128x128xf32>,
    } else {
    }
    %c0 = arith.constant 0 : index
    %c0_1 = arith.constant 0 : index
    %3 = vector.load %arg9[%c0, %c0_1] : memref<128x128xf32, #tpu.memory_space<vmem>>, vector<128x128xf32>
    %c0_2 = arith.constant 0 : index
    %c0_3 = arith.constant 0 : index
    %4 = vector.load %arg2[%c0_2, %c0_3] : memref<128x128xbf16, #tpu.memory_space<vmem>>, vector<128x128xbf16>
    %c0_4 = arith.constant 0 : index
    %c0_5 = arith.constant 0 : index
    %5 = vector.load %arg3[%c0_4, %c0_5] : memref<128x128xbf16, #tpu.memory_space<vmem>>, vector<128x128xbf16>
    %cst = arith.constant dense<0.000000e+00> : vector<128x128xf32>
    %6 = tpu.matmul %4, %5, %cst {dimension_numbers = #tpu.dot_dimension_numbers<[1], [0], [0], [1], [0, 0, 1, 1], [], []>} : vector<128x128xbf16>, vector<128x128xbf16>, vector<128x128xf32> -> vector<128x128xf32>
    %7 = arith.addf %3, %6 : vector<128x128xf32>
    %c0_6 = arith.constant 0 : index
    %c0_7 = arith.constant 0 : index
    %8 = vector.load %arg9[%c0_6, %c0_7] : memref<128x128xf32, #tpu.memory_space<vmem>>, vector<128x128xf32>
    tpu.vector_store %arg9[%c0_6, %c0_7], %7 {strides = array<i32>} : memref<128x128xf32, #tpu.memory_space<vmem>>, vector<128x128xf32>,
    %c2_i32 = arith.constant 2 : i32
    %9 = arith.cmpi eq, %arg1, %c2_i32 : i32
    %10 = arith.extui %9 : i1 to i32
    %c0_i32_8 = arith.constant 0 : i32
    %11 = arith.cmpi ne, %10, %c0_i32_8 : i32
    scf.if %11 {
      %c0_9 = arith.constant 0 : index
      %c0_10 = arith.constant 0 : index
      %12 = vector.load %arg9[%c0_9, %c0_10] : memref<128x128xf32, #tpu.memory_space<vmem>>, vector<128x128xf32>
      %13 = arith.truncf %12 : vector<128x128xf32> to vector<128x128xbf16>
      %c0_11 = arith.constant 0 : index
      %c0_12 = arith.constant 0 : index
      %14 = vector.load %arg4[%c0_11, %c0_12] : memref<128x128xbf16, #tpu.memory_space<vmem>>, vector<128x128xbf16>
      %15 = tpu.concatenate %13, %14 in 1 : vector<128x128xbf16>, vector<128x128xbf16> -> vector<128x256xbf16>
      %c0_13 = arith.constant 0 : index
      %c0_14 = arith.constant 0 : index
      %16 = vector.load %arg5[%c0_13, %c0_14] : memref<256x128xbf16, #tpu.memory_space<vmem>>, vector<256x128xbf16>
      %cst_15 = arith.constant dense<0.000000e+00> : vector<128x128xf32>
      %17 = tpu.matmul %15, %16, %cst_15 {dimension_numbers = #tpu.dot_dimension_numbers<[1], [0], [0], [1], [0, 0, 1, 1], [], []>} : vector<128x256xbf16>, vector<256x128xbf16>, vector<128x128xf32> -> vector<128x128xf32>
      %c0_16 = arith.constant 0 : index
      %c0_17 = arith.constant 0 : index
      %18 = vector.load %arg6[%c0_16, %c0_17] : memref<1x128xf32, #tpu.memory_space<vmem>>, vector<1x128xf32>
      %19 = vector.broadcast %18 : vector<1x128xf32> to vector<128x128xf32>
      %20 = arith.addf %17, %19 : vector<128x128xf32>
      %c0_18 = arith.constant 0 : index
      %c0_19 = arith.constant 0 : index
      %21 = memref.load %arg7[%c0_18, %c0_19] : memref<1x1xf32, #tpu.memory_space<smem>>
      %cst_20 = arith.constant 0.000000e+00 : f32
      %22 = vector.broadcast %cst_20 : f32 to vector<128x128xf32>
      %23 = arith.cmpf oge, %20, %22 : vector<128x128xf32>
      %24 = vector.broadcast %21 : f32 to vector<128x128xf32>
      %25 = arith.mulf %24, %20 : vector<128x128xf32>
      %26 = arith.select %23, %20, %25 : vector<128x128xi1>, vector<128x128xf32>
      %c0_21 = arith.constant 0 : index
      %c0_22 = arith.constant 0 : index
      %27 = vector.load %arg8[%c0_21, %c0_22] : memref<128x128xf32, #tpu.memory_space<vmem>>, vector<128x128xf32>
      tpu.vector_store %arg8[%c0_21, %c0_22], %26 {strides = array<i32>} : memref<128x128xf32, #tpu.memory_space<vmem>>, vector<128x128xf32>,
    } else {
    }
    return
  }
  func.func @transform_0(%arg0: i32, %arg1: i32) -> (i32, i32) {
    %c0_i32 = arith.constant 0 : i32
    return %arg0, %arg1 : i32, i32
  }
  func.func @transform_1(%arg0: i32, %arg1: i32) -> (i32, i32) {
    %c0_i32 = arith.constant 0 : i32
    %c0_i32_0 = arith.constant 0 : i32
    return %arg1, %c0_i32 : i32, i32
  }
  func.func @transform_2(%arg0: i32, %arg1: i32) -> (i32, i32) {
    %c0_i32 = arith.constant 0 : i32
    %c0_i32_0 = arith.constant 0 : i32
    return %arg0, %c0_i32 : i32, i32
  }
  func.func @transform_3(%arg0: i32, %arg1: i32) -> (i32, i32) {
    %c0_i32 = arith.constant 0 : i32
    %c0_i32_0 = arith.constant 0 : i32
    %c0_i32_1 = arith.constant 0 : i32
    return %c0_i32, %c0_i32_0 : i32, i32
  }
  func.func @transform_4(%arg0: i32, %arg1: i32) -> (i32, i32) {
    %c0_i32 = arith.constant 0 : i32
    %c0_i32_0 = arith.constant 0 : i32
    %c0_i32_1 = arith.constant 0 : i32
    return %c0_i32, %c0_i32_0 : i32, i32
  }
  func.func @transform_5(%arg0: i32, %arg1: i32) -> (i32, i32) {
    %c0_i32 = arith.constant 0 : i32
    %c0_i32_0 = arith.constant 0 : i32
    %c0_i32_1 = arith.constant 0 : i32
    return %c0_i32, %c0_i32_0 : i32, i32
  }
  func.func @transform_6(%arg0: i32, %arg1: i32) -> (i32, i32) {
    %c0_i32 = arith.constant 0 : i32
    %c0_i32_0 = arith.constant 0 : i32
    return %arg0, %c0_i32 : i32, i32
  }
}

</mosaic_0001>

<llo_original>
// kernel: graph_skip_forward.4
$region0: #{graph_skip_forward.4}
  #allocation0 [shape = 'u32[]', space=smem, size = 0x4, offset = 0x4, fixed_abs, tag = 'smem constant byte address 0x4 - core index']
  #allocation1 [shape = 'u32[144,128]{1,0:T(1,128)}', space=vmem, size = 0x12000, scoped, tag = 'internal scratch']
  #allocation2 [shape = 'f32[128,128]{1,0:T(8,128)}', space=vmem, size = 0x10000, scoped, tag = 'scratch operand']
  #allocation3 [shape = 'f32[1,1]{1,0:T(1,128)S(6)}', space=smem, size = 0x200, scoped, tag = 'scoped memory for graph_skip_forward.4']
  %s0 = inlined_call_operand.vmem [shape: bf16[384,384], index: 0, kind: input, shape index: {}]
  %s1 = inlined_call_operand.vmem [shape: bf16[384,128], index: 1, kind: input, shape index: {}, may-alias: {1,2}]
  %s2 = inlined_call_operand.vmem [shape: bf16[384,128], index: 2, kind: input, shape index: {}, may-alias: {1,2}]
  %s3 = inlined_call_operand.vmem [shape: bf16[256,128], index: 3, kind: input, shape index: {}]
  %s4 = inlined_call_operand.vmem [shape: f32[1,128], index: 4, kind: input, shape index: {}]
  %s5 = inlined_call_operand.<no memory space> [shape: f32[1,1], index: 5, kind: input, shape index: {}]
  %s6 = inlined_call_operand.vmem [shape: bf16[384,128], index: 6, kind: output, shape index: {}]
  %s7 = sld [smem:[#allocation0]]
  $region106: #{graph_skip_forward.4} parent=0
    _
  %s9 = ssub.s32 1, %s7
  %s10 = scalar_select 0, %s9, %s7
  %11 = sst [smem:[#allocation3]] %s5
  $region1: #{graph_skip_forward.4} parent=0
    #allocation4 [shape = 'u8[65536]{0}', space=vmem, size = 0x10000, scoped, tag = 'input window, operand 0']
    loop: start=0, step=1, limit=11
    $region2: #{graph_skip_forward.4} parent=1 // loop_pre_header
      _
    $region3: #{graph_skip_forward.4} parent=1 // loop_header
      %s13 = sphi 0, %s17
      %p14 = scmp.ge.s32.totalorder %s13, 11
      %s20 = sphi 0, %s32
      %s21 = sphi 0, %s28
      %s22 = sphi 0, %s20
      %s23 = sphi 0, %s21
      %s24 = sphi 0, %s22
      %s25 = sphi 0, %s23
      %s37 = sphi 0, %s39
      %s40 = sphi 0, %s37
      %s41 = sphi 0, %s40
      %s57 = sphi 0, %s41
      %s63 = sphi 0, %s65
      %s66 = sphi 0, %s63
      %s67 = sphi 0, %s66
      %s83 = sphi 0, %s67
      %s89 = sphi 0, %s91
      %s92 = sphi 0, %s89
      %s93 = sphi 0, %s92
      %s109 = sphi 0, %s93
      %s113 = sphi 0, %s113
      %s115 = sphi 0, %s113
      %s116 = sphi 0, %s115
      %s130 = sphi 0, %s116
      %s134 = sphi 0, %s134
      %s136 = sphi 0, %s134
      %s137 = sphi 0, %s136
      %s151 = sphi 0, %s137
      %s155 = sphi 0, %s155
      %s157 = sphi 0, %s155
      %s158 = sphi 0, %s157
      %s172 = sphi 0, %s158
      %s178 = sphi 0, %s180
      %s181 = sphi 0, %s178
      %s182 = sphi 0, %s181
      %s198 = sphi 0, %s182
    $region4: #{graph_skip_forward.4} parent=1 // loop_header_branch
      %16 = sbr.rel (%p14) target = $region8
    $region5: #{graph_skip_forward.4} parent=1 // loop_body
      %s18 = ssub.s32 %s13, 1
      %s19 = ssub.s32 %s13, 2
      %s26 = sadd.s32 1, %s21
      %p27 = scmp.ge.s32.totalorder %s26, 3
      %s28 = scalar_select %p27, 0, %s26
      %s29 = sadd.s32 1, %s20
      %s30 = scalar_select %p27, %s29, %s20
      %p31 = scmp.ge.s32.totalorder %s30, 3
      %s32 = scalar_select %p31, 0, %s30
      %s33 = ssub.s32 %s20, %s32
      %s34 = ssub.s32 %s21, %s28
      %s35 = sor.u32 %s33, %s34
      %p36 = scmp.eq.s32.totalorder %s35, 0
      %s38 = sadd.s32 %s37, 1
      %s39 = scalar_select %p36, %s37, %s38
      %p42 = pneg %p36
      %p43 = scmp.eq.s32.totalorder %s13, 8
      %p44 = por %p42, %p43
      %p45 = scmp.ne.s32.totalorder %s37, %s40
      %p46 = scmp.eq.s32.totalorder %s13, 0
      %p47 = por %p45, %p46
      %p48 = scmp.ne.s32.totalorder %s37, %s40
      %p49 = scmp.eq.s32.totalorder %s18, 8
      %p50 = por %p48, %p49
      %p51 = scmp.ne.s32.totalorder %s40, %s41
      %p52 = scmp.eq.s32.totalorder %s18, 0
      %p53 = por %p51, %p52
      %p54 = scmp.ne.s32.totalorder %s40, %s41
      %p55 = scmp.eq.s32.totalorder %s19, 8
      %p56 = por %p54, %p55
      %p58 = scmp.ne.s32.totalorder %s41, %s57
      %p59 = scmp.eq.s32.totalorder %s19, 0
      %p60 = por %p58, %p59
      %s61 = ssub.s32 %s21, %s28
      %p62 = scmp.eq.s32.totalorder %s61, 0
      %s64 = sadd.s32 %s63, 1
      %s65 = scalar_select %p62, %s63, %s64
      %p68 = pneg %p62
      %p69 = scmp.eq.s32.totalorder %s13, 8
      %p70 = por %p68, %p69
      %p71 = scmp.ne.s32.totalorder %s63, %s66
      %p72 = scmp.eq.s32.totalorder %s13, 0
      %p73 = por %p71, %p72
      %p74 = scmp.ne.s32.totalorder %s63, %s66
      %p75 = scmp.eq.s32.totalorder %s18, 8
      %p76 = por %p74, %p75
      %p77 = scmp.ne.s32.totalorder %s66, %s67
      %p78 = scmp.eq.s32.totalorder %s18, 0
      %p79 = por %p77, %p78
      %p80 = scmp.ne.s32.totalorder %s66, %s67
      %p81 = scmp.eq.s32.totalorder %s19, 8
      %p82 = por %p80, %p81
      %p84 = scmp.ne.s32.totalorder %s67, %s83
      %p85 = scmp.eq.s32.totalorder %s19, 0
      %p86 = por %p84, %p85
      %s87 = ssub.s32 %s20, %s32
      %p88 = scmp.eq.s32.totalorder %s87, 0
      %s90 = sadd.s32 %s89, 1
      %s91 = scalar_select %p88, %s89, %s90
      %p94 = pneg %p88
      %p95 = scmp.eq.s32.totalorder %s13, 8
      %p96 = por %p94, %p95
      %p97 = scmp.ne.s32.totalorder %s89, %s92
      %p98 = scmp.eq.s32.totalorder %s13, 0
      %p99 = por %p97, %p98
      %p100 = scmp.ne.s32.totalorder %s89, %s92
      %p101 = scmp.eq.s32.totalorder %s18, 8
      %p102 = por %p100, %p101
      %p103 = scmp.ne.s32.totalorder %s92, %s93
      %p104 = scmp.eq.s32.totalorder %s18, 0
      %p105 = por %p103, %p104
      %p106 = scmp.ne.s32.totalorder %s92, %s93
      %p107 = scmp.eq.s32.totalorder %s19, 8
      %p108 = por %p106, %p107
      %p110 = scmp.ne.s32.totalorder %s93, %s109
      %p111 = scmp.eq.s32.totalorder %s19, 0
      %p112 = por %p110, %p111
      %s114 = sadd.s32 %s113, 1
      %p117 = scmp.eq.s32.totalorder %s13, 8
      %p118 = scmp.ne.s32.totalorder %s113, %s115
      %p119 = scmp.eq.s32.totalorder %s13, 0
      %p120 = por %p118, %p119
      %p121 = scmp.ne.s32.totalorder %s113, %s115
      %p122 = scmp.eq.s32.totalorder %s18, 8
      %p123 = por %p121, %p122
      %p124 = scmp.ne.s32.totalorder %s115, %s116
      %p125 = scmp.eq.s32.totalorder %s18, 0
      %p126 = por %p124, %p125
      %p127 = scmp.ne.s32.totalorder %s115, %s116
      %p128 = scmp.eq.s32.totalorder %s19, 8
      %p129 = por %p127, %p128
      %p131 = scmp.ne.s32.totalorder %s116, %s130
      %p132 = scmp.eq.s32.totalorder %s19, 0
      %p133 = por %p131, %p132
      %s135 = sadd.s32 %s134, 1
      %p138 = scmp.eq.s32.totalorder %s13, 8
      %p139 = scmp.ne.s32.totalorder %s134, %s136
      %p140 = scmp.eq.s32.totalorder %s13, 0
      %p141 = por %p139, %p140
      %p142 = scmp.ne.s32.totalorder %s134, %s136
      %p143 = scmp.eq.s32.totalorder %s18, 8
      %p144 = por %p142, %p143
      %p145 = scmp.ne.s32.totalorder %s136, %s137
      %p146 = scmp.eq.s32.totalorder %s18, 0
      %p147 = por %p145, %p146
      %p148 = scmp.ne.s32.totalorder %s136, %s137
      %p149 = scmp.eq.s32.totalorder %s19, 8
      %p150 = por %p148, %p149
      %p152 = scmp.ne.s32.totalorder %s137, %s151
      %p153 = scmp.eq.s32.totalorder %s19, 0
      %p154 = por %p152, %p153
      %s156 = sadd.s32 %s155, 1
      %p159 = scmp.eq.s32.totalorder %s13, 8
      %p160 = scmp.ne.s32.totalorder %s155, %s157
      %p161 = scmp.eq.s32.totalorder %s13, 0
      %p162 = por %p160, %p161
      %p163 = scmp.ne.s32.totalorder %s155, %s157
      %p164 = scmp.eq.s32.totalorder %s18, 8
      %p165 = por %p163, %p164
      %p166 = scmp.ne.s32.totalorder %s157, %s158
      %p167 = scmp.eq.s32.totalorder %s18, 0
      %p168 = por %p166, %p167
      %p169 = scmp.ne.s32.totalorder %s157, %s158
      %p170 = scmp.eq.s32.totalorder %s19, 8
      %p171 = por %p169, %p170
      %p173 = scmp.ne.s32.totalorder %s158, %s172
      %p174 = scmp.eq.s32.totalorder %s19, 0
      %p175 = por %p173, %p174
      %s176 = ssub.s32 %s20, %s32
      %p177 = scmp.eq.s32.totalorder %s176, 0
      %s179 = sadd.s32 %s178, 1
      %s180 = scalar_select %p177, %s178, %s179
      %p183 = pneg %p177
      %p184 = scmp.eq.s32.totalorder %s13, 8
      %p185 = por %p183, %p184
      %p186 = scmp.ne.s32.totalorder %s178, %s181
      %p187 = scmp.eq.s32.totalorder %s13, 0
      %p188 = por %p186, %p187
      %p189 = scmp.ne.s32.totalorder %s178, %s181
      %p190 = scmp.eq.s32.totalorder %s18, 8
      %p191 = por %p189, %p190
      %p192 = scmp.ne.s32.totalorder %s181, %s182
      %p193 = scmp.eq.s32.totalorder %s18, 0
      %p194 = por %p192, %p193
      %p195 = scmp.ne.s32.totalorder %s181, %s182
      %p196 = scmp.eq.s32.totalorder %s19, 8
      %p197 = por %p195, %p196
      %p199 = scmp.ne.s32.totalorder %s182, %s198
      %p200 = scmp.eq.s32.totalorder %s19, 0
      %p201 = por %p199, %p200
      %p202 = scmp.le.s32.totalorder 1, %s13
      %p203 = scmp.lt.s32.totalorder %s13, 10
      %p204 = pnand %p202, %p203
      %p205 = pneg %p204
      // Predicated region
      $region9: #{graph_skip_forward.4} parent=5 // pred_check
        _
      $region10: #{graph_skip_forward.4} parent=5 // pred_check_branch
        %207 = sbr.rel (%p204) target = $region12
      $region11: #{graph_skip_forward.4} parent=5 // pred_region
        %s208 = ssub.s32 %s13, 1
        // Predicated region
        $region13: #{graph_skip_forward.4} parent=11 // pred_check
          %p209 = pneg %p126
        $region14: #{graph_skip_forward.4} parent=11 // pred_check_branch
          %211 = sbr.rel (%p209) target = $region16
        $region15: #{graph_skip_forward.4} parent=11 // pred_region
          _
        $region16: #{graph_skip_forward.4} parent=11 // pred_fallthru
          _
        // Predicated region
        $region17: #{graph_skip_forward.4} parent=11 // pred_check
          %p212 = pneg %p147
        $region18: #{graph_skip_forward.4} parent=11 // pred_check_branch
          %214 = sbr.rel (%p212) target = $region20
        $region19: #{graph_skip_forward.4} parent=11 // pred_region
          _
        $region20: #{graph_skip_forward.4} parent=11 // pred_fallthru
          _
        // Predicated region
        $region21: #{graph_skip_forward.4} parent=11 // pred_check
          %p215 = pneg %p168
        $region22: #{graph_skip_forward.4} parent=11 // pred_check_branch
          %217 = sbr.rel (%p215) target = $region24
        $region23: #{graph_skip_forward.4} parent=11 // pred_region
          _
        $region24: #{graph_skip_forward.4} parent=11 // pred_fallthru
          _
      $region12: #{graph_skip_forward.4} parent=5 // pred_fallthru
        _
      %p218 = scmp.lt.s32.totalorder %s13, 9
      // Predicated region
      $region25: #{graph_skip_forward.4} parent=5 // pred_check
        %p219 = pneg %p218
      $region26: #{graph_skip_forward.4} parent=5 // pred_check_branch
        %221 = sbr.rel (%p219) target = $region28
      $region27: #{graph_skip_forward.4} parent=5 // pred_region
        // Predicated region
        $region29: #{graph_skip_forward.4} parent=27 // pred_check
          %p222 = pneg %p47
        $region30: #{graph_skip_forward.4} parent=27 // pred_check_branch
          %224 = sbr.rel (%p222) target = $region32
        $region31: #{graph_skip_forward.4} parent=27 // pred_region
          %s225 = sand.u32 %s37, 1
          %s226 = sand.u32 %s37, 1
          %s227 = smul.addr %s226, 64
          %s228 = scalar_lea.vmem [#allocation4], %s227
          %s229 = smul.u32 16, %s20
          %s230 = smul.addr %s229, 3
          %s231 = sadd.s32 %s21, %s230
          %s232 = smul.addr %s231, 4
          %s233 = scalar_lea.vmem %s0, %s232
          // Predicated region
          $region33: #{graph_skip_forward.4} parent=31 // pred_check
            _
          $region34: #{graph_skip_forward.4} parent=31 // pred_check_branch
            %235 = sbr.rel (0) target = $region36
          $region35: #{graph_skip_forward.4} parent=31 // pred_region
            // Predicated region
            $region37: #{graph_skip_forward.4} parent=35 // pred_check
              _
            $region38: #{graph_skip_forward.4} parent=35 // pred_check_branch
              %237 = sbr.rel target = $region40
            $region39: #{graph_skip_forward.4} parent=35 // pred_region
              // Predicated region
              $region52: #{graph_skip_forward.4} parent=39 // pred_check
                _
              $region53: #{graph_skip_forward.4} parent=39 // pred_check_branch
                %282 = sbr.rel (0) target = $region55
              $region54: #{graph_skip_forward.4} parent=39 // pred_region
                loop: start=0, step=1, limit=1
                $region56: #{graph_skip_forward.4} parent=54 // loop_pre_header
                  _
                $region57: #{graph_skip_forward.4} parent=54 // loop_header
                  %s284 = sphi 0, %s288
                  %p285 = scmp.ge.s32.totalorder %s284, 1
                  %s289 = sphi %s233, %s233
                  %s290 = sphi %s228, %s228
                $region58: #{graph_skip_forward.4} parent=54 // loop_header_branch
                  %287 = sbr.rel (%p285) target = $region62
                $region59: #{graph_skip_forward.4} parent=54 // loop_body
                  _
                $region60: #{graph_skip_forward.4} parent=54 // loop_footer
                  %s288 = sadd.s32 1, %s284
                $region61: #{graph_skip_forward.4} parent=54 // loop_footer_branch
                  %283 = sbr.rel target = $region57
                $region62: #{graph_skip_forward.4} parent=54 // loop_exit
                  _
                loop: start=0, step=1, limit=1
                $region63: #{graph_skip_forward.4} parent=54 // loop_pre_header
                  _
                $region64: #{graph_skip_forward.4} parent=54 // loop_header
                  %s293 = sphi 0, %s297
                  %p294 = scmp.ge.s32.totalorder %s293, 1
                  %s298 = sphi %s233, %s233
                  %s299 = sphi %s228, %s228
                $region65: #{graph_skip_forward.4} parent=54 // loop_header_branch
                  %296 = sbr.rel (%p294) target = $region69
                $region66: #{graph_skip_forward.4} parent=54 // loop_body
                  %v300 = vld [vmem:[%s298] sm:$0xf]
                  %301 = vst [vmem:[%s299] sm:$0xf] %v300
                  %v302 = vld [vmem:[%s298 + $0xc] sm:$0xf]
                  %303 = vst [vmem:[%s299 + $0x4] sm:$0xf] %v302
                  %v304 = vld [vmem:[%s298 + $0x18] sm:$0xf]
                  %305 = vst [vmem:[%s299 + $0x8] sm:$0xf] %v304
                  %v306 = vld [vmem:[%s298 + $0x24] sm:$0xf]
                  %307 = vst [vmem:[%s299 + $0xc] sm:$0xf] %v306
                  %v308 = vld [vmem:[%s298 + $0x30] sm:$0xf]
                  %309 = vst [vmem:[%s299 + $0x10] sm:$0xf] %v308
                  %v310 = vld [vmem:[%s298 + $0x3c] sm:$0xf]
                  %311 = vst [vmem:[%s299 + $0x14] sm:$0xf] %v310
                  %v312 = vld [vmem:[%s298 + $0x48] sm:$0xf]
                  %313 = vst [vmem:[%s299 + $0x18] sm:$0xf] %v312
                  %v314 = vld [vmem:[%s298 + $0x54] sm:$0xf]
                  %315 = vst [vmem:[%s299 + $0x1c] sm:$0xf] %v314
                  %v316 = vld [vmem:[%s298 + $0x60] sm:$0xf]
                  %317 = vst [vmem:[%s299 + $0x20] sm:$0xf] %v316
                  %v318 = vld [vmem:[%s298 + $0x6c] sm:$0xf]
                  %319 = vst [vmem:[%s299 + $0x24] sm:$0xf] %v318
                  %v320 = vld [vmem:[%s298 + $0x78] sm:$0xf]
                  %321 = vst [vmem:[%s299 + $0x28] sm:$0xf] %v320
                  %v322 = vld [vmem:[%s298 + $0x84] sm:$0xf]
                  %323 = vst [vmem:[%s299 + $0x2c] sm:$0xf] %v322
                  %v324 = vld [vmem:[%s298 + $0x90] sm:$0xf]
                  %325 = vst [vmem:[%s299 + $0x30] sm:$0xf] %v324
                  %v326 = vld [vmem:[%s298 + $0x9c] sm:$0xf]
                  %327 = vst [vmem:[%s299 + $0x34] sm:$0xf] %v326
                  %v328 = vld [vmem:[%s298 + $0xa8] sm:$0xf]
                  %329 = vst [vmem:[%s299 + $0x38] sm:$0xf] %v328
                  %v330 = vld [vmem:[%s298 + $0xb4] sm:$0xf]
                  %331 = vst [vmem:[%s299 + $0x3c] sm:$0xf] %v330
                $region67: #{graph_skip_forward.4} parent=54 // loop_footer
                  %s297 = sadd.s32 1, %s293
                $region68: #{graph_skip_forward.4} parent=54 // loop_footer_branch
                  %292 = sbr.rel target = $region64
                $region69: #{graph_skip_forward.4} parent=54 // loop_exit
                  _
              $region55: #{graph_skip_forward.4} parent=39 // pred_fallthru
                _
            $region40: #{graph_skip_forward.4} parent=35 // pred_fallthru
              _
            // Predicated region
            $region41: #{graph_skip_forward.4} parent=35 // pred_check
              _
            $region42: #{graph_skip_forward.4} parent=35 // pred_check_branch
              %239 = sbr.rel (0) target = $region44
            $region43: #{graph_skip_forward.4} parent=35 // pred_region
              loop: start=0, step=1, limit=1
              $region45: #{graph_skip_forward.4} parent=43 // loop_pre_header
                _
              $region46: #{graph_skip_forward.4} parent=43 // loop_header
                %s242 = sphi 0, %s246
                %p243 = scmp.ge.s32.totalorder %s242, 1
                %s247 = sphi %s233, %s233
                %s248 = sphi %s228, %s228
              $region47: #{graph_skip_forward.4} parent=43 // loop_header_branch
                %245 = sbr.rel (%p243) target = $region51
              $region48: #{graph_skip_forward.4} parent=43 // loop_body
                %v249 = vld [vmem:[%s247] sm:$0xf]
                %250 = vst [vmem:[%s248] sm:$0xf] %v249
                %v251 = vld [vmem:[%s247 + $0xc] sm:$0xf]
                %252 = vst [vmem:[%s248 + $0x4] sm:$0xf] %v251
                %v253 = vld [vmem:[%s247 + $0x18] sm:$0xf]
                %254 = vst [vmem:[%s248 + $0x8] sm:$0xf] %v253
                %v255 = vld [vmem:[%s247 + $0x24] sm:$0xf]
                %256 = vst [vmem:[%s248 + $0xc] sm:$0xf] %v255
                %v257 = vld [vmem:[%s247 + $0x30] sm:$0xf]
                %258 = vst [vmem:[%s248 + $0x10] sm:$0xf] %v257
                %v259 = vld [vmem:[%s247 + $0x3c] sm:$0xf]
                %260 = vst [vmem:[%s248 + $0x14] sm:$0xf] %v259
                %v261 = vld [vmem:[%s247 + $0x48] sm:$0xf]
                %262 = vst [vmem:[%s248 + $0x18] sm:$0xf] %v261
                %v263 = vld [vmem:[%s247 + $0x54] sm:$0xf]
                %264 = vst [vmem:[%s248 + $0x1c] sm:$0xf] %v263
                %v265 = vld [vmem:[%s247 + $0x60] sm:$0xf]
                %266 = vst [vmem:[%s248 + $0x20] sm:$0xf] %v265
                %v267 = vld [vmem:[%s247 + $0x6c] sm:$0xf]
                %268 = vst [vmem:[%s248 + $0x24] sm:$0xf] %v267
                %v269 = vld [vmem:[%s247 + $0x78] sm:$0xf]
                %270 = vst [vmem:[%s248 + $0x28] sm:$0xf] %v269
                %v271 = vld [vmem:[%s247 + $0x84] sm:$0xf]
                %272 = vst [vmem:[%s248 + $0x2c] sm:$0xf] %v271
                %v273 = vld [vmem:[%s247 + $0x90] sm:$0xf]
                %274 = vst [vmem:[%s248 + $0x30] sm:$0xf] %v273
                %v275 = vld [vmem:[%s247 + $0x9c] sm:$0xf]
                %276 = vst [vmem:[%s248 + $0x34] sm:$0xf] %v275
                %v277 = vld [vmem:[%s247 + $0xa8] sm:$0xf]
                %278 = vst [vmem:[%s248 + $0x38] sm:$0xf] %v277
                %v279 = vld [vmem:[%s247 + $0xb4] sm:$0xf]
                %280 = vst [vmem:[%s248 + $0x3c] sm:$0xf] %v279
              $region49: #{graph_skip_forward.4} parent=43 // loop_footer
                %s246 = sadd.s32 1, %s242
              $region50: #{graph_skip_forward.4} parent=43 // loop_footer_branch
                %241 = sbr.rel target = $region46
              $region51: #{graph_skip_forward.4} parent=43 // loop_exit
                _
            $region44: #{graph_skip_forward.4} parent=35 // pred_fallthru
              _
          $region36: #{graph_skip_forward.4} parent=31 // pred_fallthru
            _
          %332 = vnop
        $region32: #{graph_skip_forward.4} parent=27 // pred_fallthru
          _
        // Predicated region
        $region70: #{graph_skip_forward.4} parent=27 // pred_check
          %p333 = pneg %p73
        $region71: #{graph_skip_forward.4} parent=27 // pred_check_branch
          %335 = sbr.rel (%p333) target = $region73
        $region72: #{graph_skip_forward.4} parent=27 // pred_region
          %s336 = smul.u32 16, %s21
          %p337 = scmp.lt.s32.totalorder %s336, 47
          %s338 = scalar_select %p337, %s336, 47
          %s339 = smul.addr %s338, 4
          %s340 = scalar_lea.vmem %s1, %s339
          %s341 = smul.u32 16, %s21
        $region73: #{graph_skip_forward.4} parent=27 // pred_fallthru
          _
        // Predicated region
        $region74: #{graph_skip_forward.4} parent=27 // pred_check
          %p342 = pneg %p99
        $region75: #{graph_skip_forward.4} parent=27 // pred_check_branch
          %344 = sbr.rel (%p342) target = $region77
        $region76: #{graph_skip_forward.4} parent=27 // pred_region
          %s345 = smul.u32 16, %s20
          %p346 = scmp.lt.s32.totalorder %s345, 47
          %s347 = scalar_select %p346, %s345, 47
          %s348 = smul.addr %s347, 4
          %s349 = scalar_lea.vmem %s2, %s348
          %s350 = smul.u32 16, %s20
        $region77: #{graph_skip_forward.4} parent=27 // pred_fallthru
          _
      $region28: #{graph_skip_forward.4} parent=5 // pred_fallthru
        _
      %p351 = scmp.le.s32.totalorder 1, %s13
      %p352 = scmp.lt.s32.totalorder %s13, 10
      %p353 = pnand %p351, %p352
      %p354 = pneg %p353
      // Predicated region
      $region78: #{graph_skip_forward.4} parent=5 // pred_check
        _
      $region79: #{graph_skip_forward.4} parent=5 // pred_check_branch
        %356 = sbr.rel (%p353) target = $region81
      $region80: #{graph_skip_forward.4} parent=5 // pred_region
        %s357 = ssub.s32 %s13, 1
        %s358 = sand.u32 %s40, 1
        %s359 = sand.u32 %s40, 1
        %s360 = smul.addr %s359, 64
        %s361 = scalar_lea.vmem [#allocation4], %s360
        // Predicated region
        $region82: #{graph_skip_forward.4} parent=80 // pred_check
          %p362 = pneg %p53
        $region83: #{graph_skip_forward.4} parent=80 // pred_check_branch
          %364 = sbr.rel (%p362) target = $region85
        $region84: #{graph_skip_forward.4} parent=80 // pred_region
          _
        $region85: #{graph_skip_forward.4} parent=80 // pred_fallthru
          _
        %s365 = sand.u32 %s40, 1
        %s366 = sand.u32 %s40, 1
        %s367 = smul.addr %s366, 64
        %s368 = scalar_lea.vmem [#allocation4], %s367
        %p369 = pneg %p53
        %p370 = pneg %p50
        %s371 = smul.u32 16, %s23
        %p372 = scmp.lt.s32.totalorder %s371, 47
        %s373 = scalar_select %p372, %s371, 47
        %s374 = smul.addr %s373, 4
        %s375 = scalar_lea.vmem %s1, %s374
        %p376 = pneg %p79
        %p377 = pneg %p76
        %s378 = smul.u32 16, %s22
        %p379 = scmp.lt.s32.totalorder %s378, 47
        %s380 = scalar_select %p379, %s378, 47
        %s381 = smul.addr %s380, 4
        %s382 = scalar_lea.vmem %s2, %s381
        %p383 = pneg %p105
        %p384 = pneg %p102
        %p385 = pneg %p126
        %p386 = pneg %p123
        %p387 = pneg %p147
        %p388 = pneg %p144
        %p389 = pneg %p168
        %p390 = pneg %p165
        %p391 = pneg %p194
        %p392 = pneg %p191
        %s393 = smul.u32 16, %s22
        %p394 = scmp.lt.s32.totalorder %s393, 47
        %s395 = scalar_select %p394, %s393, 47
        %s396 = smul.addr %s395, 4
        %s397 = scalar_lea.vmem %s6, %s396
        %s398 = smul.u32 16, %s22
        %s399 = smul.u32 16, %s23
        %p400 = scmp.lt.s32.totalorder %s399, 47
        %s401 = scalar_select %p400, %s399, 47
        %s402 = smul.addr %s401, 4
        %s403 = scalar_lea.vmem %s1, %s402
        %s404 = smul.u32 16, %s23
        %s405 = smul.u32 16, %s22
        %p406 = scmp.lt.s32.totalorder %s405, 47
        %s407 = scalar_select %p406, %s405, 47
        %s408 = smul.addr %s407, 4
        %s409 = scalar_lea.vmem %s2, %s408
        %s410 = smul.u32 16, %s22
        %s411 = smul.u32 16, %s22
        %p412 = scmp.lt.s32.totalorder %s411, 47
        %s413 = scalar_select %p412, %s411, 47
        %s414 = smul.addr %s413, 4
        %s415 = scalar_lea.vmem %s6, %s414
        %s416 = smul.u32 16, %s22
        %p418 = scmp.eq.s32.totalorder %s23, 0
        // Predicated region
        $region86: #{graph_skip_forward.4} parent=80 // pred_check
          %p419 = pneg %p418
        $region87: #{graph_skip_forward.4} parent=80 // pred_check_branch
          %421 = sbr.rel (%p419) target = $region89
        $region88: #{graph_skip_forward.4} parent=80 // pred_region
          %422 = vst [vmem:[#allocation2] sm:$0xff] 0.0
          %423 = vst [vmem:[#allocation2 + $0x8] sm:$0xff] 0.0
          %424 = vst [vmem:[#allocation2 + $0x10] sm:$0xff] 0.0
          %425 = vst [vmem:[#allocation2 + $0x18] sm:$0xff] 0.0
          %426 = vst [vmem:[#allocation2 + $0x20] sm:$0xff] 0.0
          %427 = vst [vmem:[#allocation2 + $0x28] sm:$0xff] 0.0
          %428 = vst [vmem:[#allocation2 + $0x30] sm:$0xff] 0.0
          %429 = vst [vmem:[#allocation2 + $0x38] sm:$0xff] 0.0
          %430 = vst [vmem:[#allocation2 + $0x40] sm:$0xff] 0.0
          %431 = vst [vmem:[#allocation2 + $0x48] sm:$0xff] 0.0
          %432 = vst [vmem:[#allocation2 + $0x50] sm:$0xff] 0.0
          %433 = vst [vmem:[#allocation2 + $0x58] sm:$0xff] 0.0
          %434 = vst [vmem:[#allocation2 + $0x60] sm:$0xff] 0.0
          %435 = vst [vmem:[#allocation2 + $0x68] sm:$0xff] 0.0
          %436 = vst [vmem:[#allocation2 + $0x70] sm:$0xff] 0.0
          %437 = vst [vmem:[#allocation2 + $0x78] sm:$0xff] 0.0
        $region89: #{graph_skip_forward.4} parent=80 // pred_fallthru
          _
        %v438 = vld [vmem:[#allocation2] sm:$0xff]
        %v439 = vld [vmem:[#allocation2 + $0x8] sm:$0xff]
        %v440 = vld [vmem:[#allocation2 + $0x10] sm:$0xff]
        %v441 = vld [vmem:[#allocation2 + $0x18] sm:$0xff]
        %v442 = vld [vmem:[#allocation2 + $0x20] sm:$0xff]
        %v443 = vld [vmem:[#allocation2 + $0x28] sm:$0xff]
        %v444 = vld [vmem:[#allocation2 + $0x30] sm:$0xff]
        %v445 = vld [vmem:[#allocation2 + $0x38] sm:$0xff]
        %v446 = vld [vmem:[#allocation2 + $0x40] sm:$0xff]
        %v447 = vld [vmem:[#allocation2 + $0x48] sm:$0xff]
        %v448 = vld [vmem:[#allocation2 + $0x50] sm:$0xff]
        %v449 = vld [vmem:[#allocation2 + $0x58] sm:$0xff]
        %v450 = vld [vmem:[#allocation2 + $0x60] sm:$0xff]
        %v451 = vld [vmem:[#allocation2 + $0x68] sm:$0xff]
        %v452 = vld [vmem:[#allocation2 + $0x70] sm:$0xff]
        %v453 = vld [vmem:[#allocation2 + $0x78] sm:$0xff]
        %v454 = vld [vmem:[%s361] sm:$0xf]
        %v455 = vld [vmem:[%s361 + $0x4] sm:$0xf]
        %v456 = vld [vmem:[%s361 + $0x8] sm:$0xf]
        %v457 = vld [vmem:[%s361 + $0xc] sm:$0xf]
        %v458 = vld [vmem:[%s361 + $0x10] sm:$0xf]
        %v459 = vld [vmem:[%s361 + $0x14] sm:$0xf]
        %v460 = vld [vmem:[%s361 + $0x18] sm:$0xf]
        %v461 = vld [vmem:[%s361 + $0x1c] sm:$0xf]
        %v462 = vld [vmem:[%s361 + $0x20] sm:$0xf]
        %v463 = vld [vmem:[%s361 + $0x24] sm:$0xf]
        %v464 = vld [vmem:[%s361 + $0x28] sm:$0xf]
        %v465 = vld [vmem:[%s361 + $0x2c] sm:$0xf]
        %v466 = vld [vmem:[%s361 + $0x30] sm:$0xf]
        %v467 = vld [vmem:[%s361 + $0x34] sm:$0xf]
        %v468 = vld [vmem:[%s361 + $0x38] sm:$0xf]
        %v469 = vld [vmem:[%s361 + $0x3c] sm:$0xf]
        %v470 = vld [vmem:[%s403] sm:$0xf]
        %v471 = vld [vmem:[%s403 + $0x4] sm:$0xf]
        %v472 = vld [vmem:[%s403 + $0x8] sm:$0xf]
        %v473 = vld [vmem:[%s403 + $0xc] sm:$0xf]
        %v474 = vld [vmem:[%s403 + $0x10] sm:$0xf]
        %v475 = vld [vmem:[%s403 + $0x14] sm:$0xf]
        %v476 = vld [vmem:[%s403 + $0x18] sm:$0xf]
        %v477 = vld [vmem:[%s403 + $0x1c] sm:$0xf]
        %v478 = vld [vmem:[%s403 + $0x20] sm:$0xf]
        %v479 = vld [vmem:[%s403 + $0x24] sm:$0xf]
        %v480 = vld [vmem:[%s403 + $0x28] sm:$0xf]
        %v481 = vld [vmem:[%s403 + $0x2c] sm:$0xf]
        %v482 = vld [vmem:[%s403 + $0x30] sm:$0xf]
        %v483 = vld [vmem:[%s403 + $0x34] sm:$0xf]
        %v484 = vld [vmem:[%s403 + $0x38] sm:$0xf]
        %v485 = vld [vmem:[%s403 + $0x3c] sm:$0xf]
        %v502 = vunpack.c.l.b16 %v454
        %v503 = vunpack.c.l.b16 %v455
        %v504 = vunpack.c.l.b16 %v456
        %v505 = vunpack.c.l.b16 %v457
        %v506 = vunpack.c.l.b16 %v458
        %v507 = vunpack.c.l.b16 %v459
        %v508 = vunpack.c.l.b16 %v460
        %v509 = vunpack.c.l.b16 %v461
        %v510 = vunpack.c.l.b16 %v462
        %v511 = vunpack.c.l.b16 %v463
        %v512 = vunpack.c.l.b16 %v464
        %v513 = vunpack.c.l.b16 %v465
        %v514 = vunpack.c.l.b16 %v466
        %v515 = vunpack.c.l.b16 %v467
        %v516 = vunpack.c.l.b16 %v468
        %v517 = vunpack.c.l.b16 %v469
        %v518 = vpack.c.b16 %v503, %v502
        %v519 = vpack.c.b16 %v505, %v504
        %v520 = vpack.c.b16 %v507, %v506
        %v521 = vpack.c.b16 %v509, %v508
        %v522 = vpack.c.b16 %v511, %v510
        %v523 = vpack.c.b16 %v513, %v512
        %v524 = vpack.c.b16 %v515, %v514
        %v525 = vpack.c.b16 %v517, %v516
        %v550 = vunpack.c.l.b16 %v470
        %v551 = vunpack.c.l.b16 %v471
        %v552 = vunpack.c.l.b16 %v472
        %v553 = vunpack.c.l.b16 %v473
        %v554 = vunpack.c.l.b16 %v474
        %v555 = vunpack.c.l.b16 %v475
        %v556 = vunpack.c.l.b16 %v476
        %v557 = vunpack.c.l.b16 %v477
        %v558 = vunpack.c.l.b16 %v478
        %v559 = vunpack.c.l.b16 %v479
        %v560 = vunpack.c.l.b16 %v480
        %v561 = vunpack.c.l.b16 %v481
        %v562 = vunpack.c.l.b16 %v482
        %v563 = vunpack.c.l.b16 %v483
        %v564 = vunpack.c.l.b16 %v484
        %v565 = vunpack.c.l.b16 %v485
        %v566 = vpack.c.b16 %v551, %v550
        %v567 = vpack.c.b16 %v553, %v552
        %v568 = vpack.c.b16 %v555, %v554
        %v569 = vpack.c.b16 %v557, %v556
        %v570 = vpack.c.b16 %v559, %v558
        %v571 = vpack.c.b16 %v561, %v560
        %v572 = vpack.c.b16 %v563, %v562
        %v573 = vpack.c.b16 %v565, %v564
        %582 = vmatprep.subr.bf16.mxu0 0
        %583 = vmatpush1.bf16.msra.mxu0 %v566
        %584 = vmatprep.subr.bf16.mxu0 0
        %585 = vmatpush1.bf16.msra.mxu0 %v567
        %586 = vmatprep.subr.bf16.mxu0 0
        %587 = vmatpush1.bf16.msra.mxu0 %v568
        %588 = vmatprep.subr.bf16.mxu0 0
        %589 = vmatpush1.bf16.msra.mxu0 %v569
        %590 = vmatprep.subr.bf16.mxu0 0
        %591 = vmatpush1.bf16.msra.mxu0 %v570
        %592 = vmatprep.subr.bf16.mxu0 0
        %593 = vmatpush1.bf16.msra.mxu0 %v571
        %594 = vmatprep.subr.bf16.mxu0 0
        %595 = vmatpush1.bf16.msra.mxu0 %v572
        %596 = vmatprep.subr.bf16.mxu0 0
        %597 = vmatpush1.bf16.msra.mxu0 %v573
        %598 = vmatprep.subr.bf16.mxu0 0
        %599 = vmatpush1.bf16.msra.mxu0 0
        %600 = vmatprep.subr.bf16.mxu0 0
        %601 = vmatpush1.bf16.msra.mxu0 0
        %602 = vmatprep.subr.bf16.mxu0 0
        %603 = vmatpush1.bf16.msra.mxu0 0
        %604 = vmatprep.subr.bf16.mxu0 0
        %605 = vmatpush1.bf16.msra.mxu0 0
        %606 = vmatprep.subr.bf16.mxu0 0
        %607 = vmatpush1.bf16.msra.mxu0 0
        %608 = vmatprep.subr.bf16.mxu0 0
        %609 = vmatpush1.bf16.msra.mxu0 0
        %610 = vmatprep.subr.bf16.mxu0 0
        %611 = vmatpush1.bf16.msra.mxu0 0
        %612 = vmatprep.subr.bf16.mxu0 0
        %613 = vmatpush1.bf16.msra.mxu0 0
        %614 = vmatprep.mubr.bf16.mxu0 0
        %615 = vmatmul.mubr.bf16.gmra.mrb[0].mxu0 %v518
        %v616 = vpop.f32.mrb[0].mxu0
        %v617 = vadd.f32 0.0, %v616
        %v618 = vpop.f32.mrb[0].mxu0
        %v619 = vpop.f32.mrb[0].mxu0
        %v620 = vadd.f32 0.0, %v619
        %v621 = vpop.f32.mrb[0].mxu0
        %622 = vmatprep.mubr.bf16.mxu0 0
        %623 = vmatmul.mubr.bf16.gmra.mrb[0].mxu0 %v519
        %v624 = vpop.f32.mrb[0].mxu0
        %v625 = vadd.f32 0.0, %v624
        %v626 = vpop.f32.mrb[0].mxu0
        %v627 = vpop.f32.mrb[0].mxu0
        %v628 = vadd.f32 0.0, %v627
        %v629 = vpop.f32.mrb[0].mxu0
        %630 = vmatprep.mubr.bf16.mxu0 0
        %631 = vmatmul.mubr.bf16.gmra.mrb[0].mxu0 %v520
        %v632 = vpop.f32.mrb[0].mxu0
        %v633 = vadd.f32 0.0, %v632
        %v634 = vpop.f32.mrb[0].mxu0
        %v635 = vpop.f32.mrb[0].mxu0
        %v636 = vadd.f32 0.0, %v635
        %v637 = vpop.f32.mrb[0].mxu0
        %638 = vmatprep.mubr.bf16.mxu0 0
        %639 = vmatmul.mubr.bf16.gmra.mrb[0].mxu0 %v521
        %v640 = vpop.f32.mrb[0].mxu0
        %v641 = vadd.f32 0.0, %v640
        %v642 = vpop.f32.mrb[0].mxu0
        %v643 = vpop.f32.mrb[0].mxu0
        %v644 = vadd.f32 0.0, %v643
        %v645 = vpop.f32.mrb[0].mxu0
        %646 = vmatprep.mubr.bf16.mxu0 0
        %647 = vmatmul.mubr.bf16.gmra.mrb[0].mxu0 %v522
        %v648 = vpop.f32.mrb[0].mxu0
        %v649 = vadd.f32 0.0, %v648
        %v650 = vpop.f32.mrb[0].mxu0
        %v651 = vpop.f32.mrb[0].mxu0
        %v652 = vadd.f32 0.0, %v651
        %v653 = vpop.f32.mrb[0].mxu0
        %654 = vmatprep.mubr.bf16.mxu0 0
        %655 = vmatmul.mubr.bf16.gmra.mrb[0].mxu0 %v523
        %v656 = vpop.f32.mrb[0].mxu0
        %v657 = vadd.f32 0.0, %v656
        %v658 = vpop.f32.mrb[0].mxu0
        %v659 = vpop.f32.mrb[0].mxu0
        %v660 = vadd.f32 0.0, %v659
        %v661 = vpop.f32.mrb[0].mxu0
        %662 = vmatprep.mubr.bf16.mxu0 0
        %663 = vmatmul.mubr.bf16.gmra.mrb[0].mxu0 %v524
        %v664 = vpop.f32.mrb[0].mxu0
        %v665 = vadd.f32 0.0, %v664
        %v666 = vpop.f32.mrb[0].mxu0
        %v667 = vpop.f32.mrb[0].mxu0
        %v668 = vadd.f32 0.0, %v667
        %v669 = vpop.f32.mrb[0].mxu0
        %670 = vmatprep.mubr.bf16.mxu0 0
        %671 = vmatmul.mubr.bf16.gmra.mrb[0].mxu0 %v525
        %v672 = vpop.f32.mrb[0].mxu0
        %v673 = vadd.f32 0.0, %v672
        %v674 = vpop.f32.mrb[0].mxu0
        %v675 = vpop.f32.mrb[0].mxu0
        %v676 = vadd.f32 0.0, %v675
        %v677 = vpop.f32.mrb[0].mxu0
        %678 = vdwg.mxu0
        %v679 = vadd.f32 %v438, %v617
        %v680 = vadd.f32 %v439, %v620
        %v681 = vadd.f32 %v440, %v625
        %v682 = vadd.f32 %v441, %v628
        %v683 = vadd.f32 %v442, %v633
        %v684 = vadd.f32 %v443, %v636
        %v685 = vadd.f32 %v444, %v641
        %v686 = vadd.f32 %v445, %v644
        %v687 = vadd.f32 %v446, %v649
        %v688 = vadd.f32 %v447, %v652
        %v689 = vadd.f32 %v448, %v657
        %v690 = vadd.f32 %v449, %v660
        %v691 = vadd.f32 %v450, %v665
        %v692 = vadd.f32 %v451, %v668
        %v693 = vadd.f32 %v452, %v673
        %v694 = vadd.f32 %v453, %v676
        %695 = vst [vmem:[#allocation2] sm:$0xff] %v679
        %696 = vst [vmem:[#allocation2 + $0x8] sm:$0xff] %v680
        %697 = vst [vmem:[#allocation2 + $0x10] sm:$0xff] %v681
        %698 = vst [vmem:[#allocation2 + $0x18] sm:$0xff] %v682
        %699 = vst [vmem:[#allocation2 + $0x20] sm:$0xff] %v683
        %700 = vst [vmem:[#allocation2 + $0x28] sm:$0xff] %v684
        %701 = vst [vmem:[#allocation2 + $0x30] sm:$0xff] %v685
        %702 = vst [vmem:[#allocation2 + $0x38] sm:$0xff] %v686
        %703 = vst [vmem:[#allocation2 + $0x40] sm:$0xff] %v687
        %704 = vst [vmem:[#allocation2 + $0x48] sm:$0xff] %v688
        %705 = vst [vmem:[#allocation2 + $0x50] sm:$0xff] %v689
        %706 = vst [vmem:[#allocation2 + $0x58] sm:$0xff] %v690
        %707 = vst [vmem:[#allocation2 + $0x60] sm:$0xff] %v691
        %708 = vst [vmem:[#allocation2 + $0x68] sm:$0xff] %v692
        %709 = vst [vmem:[#allocation2 + $0x70] sm:$0xff] %v693
        %710 = vst [vmem:[#allocation2 + $0x78] sm:$0xff] %v694
        %p711 = scmp.eq.s32.totalorder %s23, 2
        // Predicated region
        $region90: #{graph_skip_forward.4} parent=80 // pred_check
          %p712 = pneg %p711
        $region91: #{graph_skip_forward.4} parent=80 // pred_check_branch
          %714 = sbr.rel (%p712) target = $region93
        $region92: #{graph_skip_forward.4} parent=80 // pred_region
          %v715 = vld [vmem:[#allocation2] sm:$0xff]
          %v716 = vld [vmem:[#allocation2 + $0x8] sm:$0xff]
          %v717 = vld [vmem:[#allocation2 + $0x10] sm:$0xff]
          %v718 = vld [vmem:[#allocation2 + $0x18] sm:$0xff]
          %v719 = vld [vmem:[#allocation2 + $0x20] sm:$0xff]
          %v720 = vld [vmem:[#allocation2 + $0x28] sm:$0xff]
          %v721 = vld [vmem:[#allocation2 + $0x30] sm:$0xff]
          %v722 = vld [vmem:[#allocation2 + $0x38] sm:$0xff]
          %v723 = vld [vmem:[#allocation2 + $0x40] sm:$0xff]
          %v724 = vld [vmem:[#allocation2 + $0x48] sm:$0xff]
          %v725 = vld [vmem:[#allocation2 + $0x50] sm:$0xff]
          %v726 = vld [vmem:[#allocation2 + $0x58] sm:$0xff]
          %v727 = vld [vmem:[#allocation2 + $0x60] sm:$0xff]
          %v728 = vld [vmem:[#allocation2 + $0x68] sm:$0xff]
          %v729 = vld [vmem:[#allocation2 + $0x70] sm:$0xff]
          %v730 = vld [vmem:[#allocation2 + $0x78] sm:$0xff]
          %v731 = vpack.c.bf16 %v716, %v715
          %v732 = vpack.c.bf16 %v718, %v717
          %v733 = vpack.c.bf16 %v720, %v719
          %v734 = vpack.c.bf16 %v722, %v721
          %v735 = vpack.c.bf16 %v724, %v723
          %v736 = vpack.c.bf16 %v726, %v725
          %v737 = vpack.c.bf16 %v728, %v727
          %v738 = vpack.c.bf16 %v730, %v729
          %v739 = vld [vmem:[%s409] sm:$0xf]
          %v740 = vld [vmem:[%s409 + $0x4] sm:$0xf]
          %v741 = vld [vmem:[%s409 + $0x8] sm:$0xf]
          %v742 = vld [vmem:[%s409 + $0xc] sm:$0xf]
          %v743 = vld [vmem:[%s409 + $0x10] sm:$0xf]
          %v744 = vld [vmem:[%s409 + $0x14] sm:$0xf]
          %v745 = vld [vmem:[%s409 + $0x18] sm:$0xf]
          %v746 = vld [vmem:[%s409 + $0x1c] sm:$0xf]
          %v747 = vld [vmem:[%s409 + $0x20] sm:$0xf]
          %v748 = vld [vmem:[%s409 + $0x24] sm:$0xf]
          %v749 = vld [vmem:[%s409 + $0x28] sm:$0xf]
          %v750 = vld [vmem:[%s409 + $0x2c] sm:$0xf]
          %v751 = vld [vmem:[%s409 + $0x30] sm:$0xf]
          %v752 = vld [vmem:[%s409 + $0x34] sm:$0xf]
          %v753 = vld [vmem:[%s409 + $0x38] sm:$0xf]
          %v754 = vld [vmem:[%s409 + $0x3c] sm:$0xf]
          %v771 = vunpack.c.l.b16 %v739
          %v772 = vunpack.c.l.b16 %v740
          %v773 = vunpack.c.l.b16 %v741
          %v774 = vunpack.c.l.b16 %v742
          %v775 = vunpack.c.l.b16 %v743
          %v776 = vunpack.c.l.b16 %v744
          %v777 = vunpack.c.l.b16 %v745
          %v778 = vunpack.c.l.b16 %v746
          %v779 = vunpack.c.l.b16 %v747
          %v780 = vunpack.c.l.b16 %v748
          %v781 = vunpack.c.l.b16 %v749
          %v782 = vunpack.c.l.b16 %v750
          %v783 = vunpack.c.l.b16 %v751
          %v784 = vunpack.c.l.b16 %v752
          %v785 = vunpack.c.l.b16 %v753
          %v786 = vunpack.c.l.b16 %v754
          %v787 = vpack.c.b16 %v772, %v771
          %v788 = vpack.c.b16 %v774, %v773
          %v789 = vpack.c.b16 %v776, %v775
          %v790 = vpack.c.b16 %v778, %v777
          %v791 = vpack.c.b16 %v780, %v779
          %v792 = vpack.c.b16 %v782, %v781
          %v793 = vpack.c.b16 %v784, %v783
          %v794 = vpack.c.b16 %v786, %v785
          %v803 = vld [vmem:[%s3] sm:$0xf]
          %v804 = vld [vmem:[%s3 + $0x4] sm:$0xf]
          %v805 = vld [vmem:[%s3 + $0x8] sm:$0xf]
          %v806 = vld [vmem:[%s3 + $0xc] sm:$0xf]
          %v807 = vld [vmem:[%s3 + $0x10] sm:$0xf]
          %v808 = vld [vmem:[%s3 + $0x14] sm:$0xf]
          %v809 = vld [vmem:[%s3 + $0x18] sm:$0xf]
          %v810 = vld [vmem:[%s3 + $0x1c] sm:$0xf]
          %v811 = vld [vmem:[%s3 + $0x20] sm:$0xf]
          %v812 = vld [vmem:[%s3 + $0x24] sm:$0xf]
          %v813 = vld [vmem:[%s3 + $0x28] sm:$0xf]
          %v814 = vld [vmem:[%s3 + $0x2c] sm:$0xf]
          %v815 = vld [vmem:[%s3 + $0x30] sm:$0xf]
          %v816 = vld [vmem:[%s3 + $0x34] sm:$0xf]
          %v817 = vld [vmem:[%s3 + $0x38] sm:$0xf]
          %v818 = vld [vmem:[%s3 + $0x3c] sm:$0xf]
          %v819 = vld [vmem:[%s3 + $0x40] sm:$0xf]
          %v820 = vld [vmem:[%s3 + $0x44] sm:$0xf]
          %v821 = vld [vmem:[%s3 + $0x48] sm:$0xf]
          %v822 = vld [vmem:[%s3 + $0x4c] sm:$0xf]
          %v823 = vld [vmem:[%s3 + $0x50] sm:$0xf]
          %v824 = vld [vmem:[%s3 + $0x54] sm:$0xf]
          %v825 = vld [vmem:[%s3 + $0x58] sm:$0xf]
          %v826 = vld [vmem:[%s3 + $0x5c] sm:$0xf]
          %v827 = vld [vmem:[%s3 + $0x60] sm:$0xf]
          %v828 = vld [vmem:[%s3 + $0x64] sm:$0xf]
          %v829 = vld [vmem:[%s3 + $0x68] sm:$0xf]
          %v830 = vld [vmem:[%s3 + $0x6c] sm:$0xf]
          %v831 = vld [vmem:[%s3 + $0x70] sm:$0xf]
          %v832 = vld [vmem:[%s3 + $0x74] sm:$0xf]
          %v833 = vld [vmem:[%s3 + $0x78] sm:$0xf]
          %v834 = vld [vmem:[%s3 + $0x7c] sm:$0xf]
          %v835 = vld [vmem:[%s4] sm:$0x1]
          %v837 = vlaneseq
          %v838 = vshrl.u32 %v837, 7
          %v839 = vsub.s32 0, %v838
          %v840 = vrot.slane %v835, %v839
          %v874 = vunpack.c.l.b16 %v803
          %v875 = vunpack.c.l.b16 %v804
          %v876 = vunpack.c.l.b16 %v805
          %v877 = vunpack.c.l.b16 %v806
          %v878 = vunpack.c.l.b16 %v807
          %v879 = vunpack.c.l.b16 %v808
          %v880 = vunpack.c.l.b16 %v809
          %v881 = vunpack.c.l.b16 %v810
          %v882 = vunpack.c.l.b16 %v811
          %v883 = vunpack.c.l.b16 %v812
          %v884 = vunpack.c.l.b16 %v813
          %v885 = vunpack.c.l.b16 %v814
          %v886 = vunpack.c.l.b16 %v815
          %v887 = vunpack.c.l.b16 %v816
          %v888 = vunpack.c.l.b16 %v817
          %v889 = vunpack.c.l.b16 %v818
          %v890 = vunpack.c.l.b16 %v819
          %v891 = vunpack.c.l.b16 %v820
          %v892 = vunpack.c.l.b16 %v821
          %v893 = vunpack.c.l.b16 %v822
          %v894 = vunpack.c.l.b16 %v823
          %v895 = vunpack.c.l.b16 %v824
          %v896 = vunpack.c.l.b16 %v825
          %v897 = vunpack.c.l.b16 %v826
          %v898 = vunpack.c.l.b16 %v827
          %v899 = vunpack.c.l.b16 %v828
          %v900 = vunpack.c.l.b16 %v829
          %v901 = vunpack.c.l.b16 %v830
          %v902 = vunpack.c.l.b16 %v831
          %v903 = vunpack.c.l.b16 %v832
          %v904 = vunpack.c.l.b16 %v833
          %v905 = vunpack.c.l.b16 %v834
          %v906 = vpack.c.b16 %v875, %v874
          %v907 = vpack.c.b16 %v877, %v876
          %v908 = vpack.c.b16 %v879, %v878
          %v909 = vpack.c.b16 %v881, %v880
          %v910 = vpack.c.b16 %v883, %v882
          %v911 = vpack.c.b16 %v885, %v884
          %v912 = vpack.c.b16 %v887, %v886
          %v913 = vpack.c.b16 %v889, %v888
          %v914 = vpack.c.b16 %v891, %v890
          %v915 = vpack.c.b16 %v893, %v892
          %v916 = vpack.c.b16 %v895, %v894
          %v917 = vpack.c.b16 %v897, %v896
          %v918 = vpack.c.b16 %v899, %v898
          %v919 = vpack.c.b16 %v901, %v900
          %v920 = vpack.c.b16 %v903, %v902
          %v921 = vpack.c.b16 %v905, %v904
          %938 = vmatprep.subr.bf16.mxu0 0
          %939 = vmatpush1.bf16.msra.mxu0 %v906
          %940 = vmatprep.subr.bf16.mxu0 0
          %941 = vmatpush1.bf16.msra.mxu0 %v907
          %942 = vmatprep.subr.bf16.mxu0 0
          %943 = vmatpush1.bf16.msra.mxu0 %v908
          %944 = vmatprep.subr.bf16.mxu0 0
          %945 = vmatpush1.bf16.msra.mxu0 %v909
          %946 = vmatprep.subr.bf16.mxu0 0
          %947 = vmatpush1.bf16.msra.mxu0 %v910
          %948 = vmatprep.subr.bf16.mxu0 0
          %949 = vmatpush1.bf16.msra.mxu0 %v911
          %950 = vmatprep.subr.bf16.mxu0 0
          %951 = vmatpush1.bf16.msra.mxu0 %v912
          %952 = vmatprep.subr.bf16.mxu0 0
          %953 = vmatpush1.bf16.msra.mxu0 %v913
          %954 = vmatprep.subr.bf16.mxu0 0
          %955 = vmatpush1.bf16.msra.mxu0 %v914
          %956 = vmatprep.subr.bf16.mxu0 0
          %957 = vmatpush1.bf16.msra.mxu0 %v915
          %958 = vmatprep.subr.bf16.mxu0 0
          %959 = vmatpush1.bf16.msra.mxu0 %v916
          %960 = vmatprep.subr.bf16.mxu0 0
          %961 = vmatpush1.bf16.msra.mxu0 %v917
          %962 = vmatprep.subr.bf16.mxu0 0
          %963 = vmatpush1.bf16.msra.mxu0 %v918
          %964 = vmatprep.subr.bf16.mxu0 0
          %965 = vmatpush1.bf16.msra.mxu0 %v919
          %966 = vmatprep.subr.bf16.mxu0 0
          %967 = vmatpush1.bf16.msra.mxu0 %v920
          %968 = vmatprep.subr.bf16.mxu0 0
          %969 = vmatpush1.bf16.msra.mxu0 %v921
          %970 = vmatprep.mubr.bf16.mxu0 %v787
          %971 = vmatmul.mubr.bf16.gmra.mrb[0].mxu0 %v731
          %v972 = vpop.f32.mrb[0].mxu0
          %v973 = vadd.f32 %v840, %v972
          %v974 = vpop.f32.mrb[0].mxu0
          %v975 = vpop.f32.mrb[0].mxu0
          %v976 = vadd.f32 %v840, %v975
          %v977 = vpop.f32.mrb[0].mxu0
          %978 = vmatprep.mubr.bf16.mxu0 %v788
          %979 = vmatmul.mubr.bf16.gmra.mrb[0].mxu0 %v732
          %v980 = vpop.f32.mrb[0].mxu0
          %v981 = vadd.f32 %v840, %v980
          %v982 = vpop.f32.mrb[0].mxu0
          %v983 = vpop.f32.mrb[0].mxu0
          %v984 = vadd.f32 %v840, %v983
          %v985 = vpop.f32.mrb[0].mxu0
          %986 = vmatprep.mubr.bf16.mxu0 %v789
          %987 = vmatmul.mubr.bf16.gmra.mrb[0].mxu0 %v733
          %v988 = vpop.f32.mrb[0].mxu0
          %v989 = vadd.f32 %v840, %v988
          %v990 = vpop.f32.mrb[0].mxu0
          %v991 = vpop.f32.mrb[0].mxu0
          %v992 = vadd.f32 %v840, %v991
          %v993 = vpop.f32.mrb[0].mxu0
          %994 = vmatprep.mubr.bf16.mxu0 %v790
          %995 = vmatmul.mubr.bf16.gmra.mrb[0].mxu0 %v734
          %v996 = vpop.f32.mrb[0].mxu0
          %v997 = vadd.f32 %v840, %v996
          %v998 = vpop.f32.mrb[0].mxu0
          %v999 = vpop.f32.mrb[0].mxu0
          %v1000 = vadd.f32 %v840, %v999
          %v1001 = vpop.f32.mrb[0].mxu0
          %1002 = vmatprep.mubr.bf16.mxu0 %v791
          %1003 = vmatmul.mubr.bf16.gmra.mrb[0].mxu0 %v735
          %v1004 = vpop.f32.mrb[0].mxu0
          %v1005 = vadd.f32 %v840, %v1004
          %v1006 = vpop.f32.mrb[0].mxu0
          %v1007 = vpop.f32.mrb[0].mxu0
          %v1008 = vadd.f32 %v840, %v1007
          %v1009 = vpop.f32.mrb[0].mxu0
          %1010 = vmatprep.mubr.bf16.mxu0 %v792
          %1011 = vmatmul.mubr.bf16.gmra.mrb[0].mxu0 %v736
          %v1012 = vpop.f32.mrb[0].mxu0
          %v1013 = vadd.f32 %v840, %v1012
          %v1014 = vpop.f32.mrb[0].mxu0
          %v1015 = vpop.f32.mrb[0].mxu0
          %v1016 = vadd.f32 %v840, %v1015
          %v1017 = vpop.f32.mrb[0].mxu0
          %1018 = vmatprep.mubr.bf16.mxu0 %v793
          %1019 = vmatmul.mubr.bf16.gmra.mrb[0].mxu0 %v737
          %v1020 = vpop.f32.mrb[0].mxu0
          %v1021 = vadd.f32 %v840, %v1020
          %v1022 = vpop.f32.mrb[0].mxu0
          %v1023 = vpop.f32.mrb[0].mxu0
          %v1024 = vadd.f32 %v840, %v1023
          %v1025 = vpop.f32.mrb[0].mxu0
          %1026 = vmatprep.mubr.bf16.mxu0 %v794
          %1027 = vmatmul.mubr.bf16.gmra.mrb[0].mxu0 %v738
          %v1028 = vpop.f32.mrb[0].mxu0
          %v1029 = vadd.f32 %v840, %v1028
          %v1030 = vpop.f32.mrb[0].mxu0
          %v1031 = vpop.f32.mrb[0].mxu0
          %v1032 = vadd.f32 %v840, %v1031
          %v1033 = vpop.f32.mrb[0].mxu0
          %1034 = vdwg.mxu0
          %s1035 = sld [smem:[#allocation3]]
          %vm1036 = vcmp.ge.f32.partialorder %v973, 0.0
          %vm1037 = vcmp.ge.f32.partialorder %v976, 0.0
          %vm1038 = vcmp.ge.f32.partialorder %v981, 0.0
          %vm1039 = vcmp.ge.f32.partialorder %v984, 0.0
          %vm1040 = vcmp.ge.f32.partialorder %v989, 0.0
          %vm1041 = vcmp.ge.f32.partialorder %v992, 0.0
          %vm1042 = vcmp.ge.f32.partialorder %v997, 0.0
          %vm1043 = vcmp.ge.f32.partialorder %v1000, 0.0
          %vm1044 = vcmp.ge.f32.partialorder %v1005, 0.0
          %vm1045 = vcmp.ge.f32.partialorder %v1008, 0.0
          %vm1046 = vcmp.ge.f32.partialorder %v1013, 0.0
          %vm1047 = vcmp.ge.f32.partialorder %v1016, 0.0
          %vm1048 = vcmp.ge.f32.partialorder %v1021, 0.0
          %vm1049 = vcmp.ge.f32.partialorder %v1024, 0.0
          %vm1050 = vcmp.ge.f32.partialorder %v1029, 0.0
          %vm1051 = vcmp.ge.f32.partialorder %v1032, 0.0
          %v1052 = vstv %s1035
          %v1053 = vmul.f32 %v1052, %v973
          %v1054 = vmul.f32 %v1052, %v976
          %v1055 = vmul.f32 %v1052, %v981
          %v1056 = vmul.f32 %v1052, %v984
          %v1057 = vmul.f32 %v1052, %v989
          %v1058 = vmul.f32 %v1052, %v992
          %v1059 = vmul.f32 %v1052, %v997
          %v1060 = vmul.f32 %v1052, %v1000
          %v1061 = vmul.f32 %v1052, %v1005
          %v1062 = vmul.f32 %v1052, %v1008
          %v1063 = vmul.f32 %v1052, %v1013
          %v1064 = vmul.f32 %v1052, %v1016
          %v1065 = vmul.f32 %v1052, %v1021
          %v1066 = vmul.f32 %v1052, %v1024
          %v1067 = vmul.f32 %v1052, %v1029
          %v1068 = vmul.f32 %v1052, %v1032
          %v1069 = vsel %vm1036, %v973, %v1053
          %v1070 = vsel %vm1037, %v976, %v1054
          %v1071 = vsel %vm1038, %v981, %v1055
          %v1072 = vsel %vm1039, %v984, %v1056
          %v1073 = vsel %vm1040, %v989, %v1057
          %v1074 = vsel %vm1041, %v992, %v1058
          %v1075 = vsel %vm1042, %v997, %v1059
          %v1076 = vsel %vm1043, %v1000, %v1060
          %v1077 = vsel %vm1044, %v1005, %v1061
          %v1078 = vsel %vm1045, %v1008, %v1062
          %v1079 = vsel %vm1046, %v1013, %v1063
          %v1080 = vsel %vm1047, %v1016, %v1064
          %v1081 = vsel %vm1048, %v1021, %v1065
          %v1082 = vsel %vm1049, %v1024, %v1066
          %v1083 = vsel %vm1050, %v1029, %v1067
          %v1084 = vsel %vm1051, %v1032, %v1068
          %v1085 = vunpack.c.l.bf16 %v739
          %v1086 = vunpack.c.l.bf16 %v740
          %v1087 = vunpack.c.l.bf16 %v741
          %v1088 = vunpack.c.l.bf16 %v742
          %v1089 = vunpack.c.l.bf16 %v743
          %v1090 = vunpack.c.l.bf16 %v744
          %v1091 = vunpack.c.l.bf16 %v745
          %v1092 = vunpack.c.l.bf16 %v746
          %v1093 = vunpack.c.l.bf16 %v747
          %v1094 = vunpack.c.l.bf16 %v748
          %v1095 = vunpack.c.l.bf16 %v749
          %v1096 = vunpack.c.l.bf16 %v750
          %v1097 = vunpack.c.l.bf16 %v751
          %v1098 = vunpack.c.l.bf16 %v752
          %v1099 = vunpack.c.l.bf16 %v753
          %v1100 = vunpack.c.l.bf16 %v754
          %v1101 = vadd.f32 %v1085, %v1069
          %v1102 = vadd.f32 %v1086, %v1070
          %v1103 = vadd.f32 %v1087, %v1071
          %v1104 = vadd.f32 %v1088, %v1072
          %v1105 = vadd.f32 %v1089, %v1073
          %v1106 = vadd.f32 %v1090, %v1074
          %v1107 = vadd.f32 %v1091, %v1075
          %v1108 = vadd.f32 %v1092, %v1076
          %v1109 = vadd.f32 %v1093, %v1077
          %v1110 = vadd.f32 %v1094, %v1078
          %v1111 = vadd.f32 %v1095, %v1079
          %v1112 = vadd.f32 %v1096, %v1080
          %v1113 = vadd.f32 %v1097, %v1081
          %v1114 = vadd.f32 %v1098, %v1082
          %v1115 = vadd.f32 %v1099, %v1083
          %v1116 = vadd.f32 %v1100, %v1084
          %v1117 = vpack.c.bf16 %v1102, %v1101
          %v1118 = vpack.c.bf16 %v1104, %v1103
          %v1119 = vpack.c.bf16 %v1106, %v1105
          %v1120 = vpack.c.bf16 %v1108, %v1107
          %v1121 = vpack.c.bf16 %v1110, %v1109
          %v1122 = vpack.c.bf16 %v1112, %v1111
          %v1123 = vpack.c.bf16 %v1114, %v1113
          %v1124 = vpack.c.bf16 %v1116, %v1115
          %v1133 = vunpack.c.l.b16 %v1117
          %v1134 = vunpack.c.h.b16 %v1117
          %v1135 = vunpack.c.l.b16 %v1118
          %v1136 = vunpack.c.h.b16 %v1118
          %v1137 = vunpack.c.l.b16 %v1119
          %v1138 = vunpack.c.h.b16 %v1119
          %v1139 = vunpack.c.l.b16 %v1120
          %v1140 = vunpack.c.h.b16 %v1120
          %v1141 = vunpack.c.l.b16 %v1121
          %v1142 = vunpack.c.h.b16 %v1121
          %v1143 = vunpack.c.l.b16 %v1122
          %v1144 = vunpack.c.h.b16 %v1122
          %v1145 = vunpack.c.l.b16 %v1123
          %v1146 = vunpack.c.h.b16 %v1123
          %v1147 = vunpack.c.l.b16 %v1124
          %v1148 = vunpack.c.h.b16 %v1124
          %v1149 = vpack.c.b16 %v1133, %v1133
          %v1150 = vpack.c.b16 %v1134, %v1134
          %v1151 = vpack.c.b16 %v1135, %v1135
          %v1152 = vpack.c.b16 %v1136, %v1136
          %v1153 = vpack.c.b16 %v1137, %v1137
          %v1154 = vpack.c.b16 %v1138, %v1138
          %v1155 = vpack.c.b16 %v1139, %v1139
          %v1156 = vpack.c.b16 %v1140, %v1140
          %v1157 = vpack.c.b16 %v1141, %v1141
          %v1158 = vpack.c.b16 %v1142, %v1142
          %v1159 = vpack.c.b16 %v1143, %v1143
          %v1160 = vpack.c.b16 %v1144, %v1144
          %v1161 = vpack.c.b16 %v1145, %v1145
          %v1162 = vpack.c.b16 %v1146, %v1146
          %v1163 = vpack.c.b16 %v1147, %v1147
          %v1164 = vpack.c.b16 %v1148, %v1148
          %1181 = vst [vmem:[%s415] sm:$0xf] %v1149
          %1182 = vst [vmem:[%s415 + $0x4] sm:$0xf] %v1150
          %1183 = vst [vmem:[%s415 + $0x8] sm:$0xf] %v1151
          %1184 = vst [vmem:[%s415 + $0xc] sm:$0xf] %v1152
          %1185 = vst [vmem:[%s415 + $0x10] sm:$0xf] %v1153
          %1186 = vst [vmem:[%s415 + $0x14] sm:$0xf] %v1154
          %1187 = vst [vmem:[%s415 + $0x18] sm:$0xf] %v1155
          %1188 = vst [vmem:[%s415 + $0x1c] sm:$0xf] %v1156
          %1189 = vst [vmem:[%s415 + $0x20] sm:$0xf] %v1157
          %1190 = vst [vmem:[%s415 + $0x24] sm:$0xf] %v1158
          %1191 = vst [vmem:[%s415 + $0x28] sm:$0xf] %v1159
          %1192 = vst [vmem:[%s415 + $0x2c] sm:$0xf] %v1160
          %1193 = vst [vmem:[%s415 + $0x30] sm:$0xf] %v1161
          %1194 = vst [vmem:[%s415 + $0x34] sm:$0xf] %v1162
          %1195 = vst [vmem:[%s415 + $0x38] sm:$0xf] %v1163
          %1196 = vst [vmem:[%s415 + $0x3c] sm:$0xf] %v1164
        $region93: #{graph_skip_forward.4} parent=80 // pred_fallthru
          _
        %s1197 = smul.u32 16, %s22
        %p1198 = scmp.lt.s32.totalorder %s1197, 47
        %s1199 = scalar_select %p1198, %s1197, 47
        %s1200 = smul.addr %s1199, 4
        %s1201 = scalar_lea.vmem %s6, %s1200
        // Predicated region
        $region94: #{graph_skip_forward.4} parent=80 // pred_check
          %p1202 = pneg %p191
        $region95: #{graph_skip_forward.4} parent=80 // pred_check_branch
          %1204 = sbr.rel (%p1202) target = $region97
        $region96: #{graph_skip_forward.4} parent=80 // pred_region
          %s1205 = smul.u32 16, %s22
        $region97: #{graph_skip_forward.4} parent=80 // pred_fallthru
          _
      $region81: #{graph_skip_forward.4} parent=5 // pred_fallthru
        _
      %p1206 = scmp.le.s32.totalorder 2, %s13
      // Predicated region
      $region98: #{graph_skip_forward.4} parent=5 // pred_check
        %p1207 = pneg %p1206
      $region99: #{graph_skip_forward.4} parent=5 // pred_check_branch
        %1209 = sbr.rel (%p1207) target = $region101
      $region100: #{graph_skip_forward.4} parent=5 // pred_region
        %s1210 = ssub.s32 %s13, 2
        // Predicated region
        $region102: #{graph_skip_forward.4} parent=100 // pred_check
          %p1211 = pneg %p197
        $region103: #{graph_skip_forward.4} parent=100 // pred_check_branch
          %1213 = sbr.rel (%p1211) target = $region105
        $region104: #{graph_skip_forward.4} parent=100 // pred_region
          %s1214 = smul.u32 16, %s24
          %p1215 = scmp.lt.s32.totalorder %s1214, 47
          %s1216 = scalar_select %p1215, %s1214, 47
          %s1217 = smul.addr %s1216, 4
          %s1218 = scalar_lea.vmem %s6, %s1217
        $region105: #{graph_skip_forward.4} parent=100 // pred_fallthru
          _
      $region101: #{graph_skip_forward.4} parent=5 // pred_fallthru
        _
    $region6: #{graph_skip_forward.4} parent=1 // loop_footer
      %s17 = sadd.s32 1, %s13
    $region7: #{graph_skip_forward.4} parent=1 // loop_footer_branch
      %12 = sbr.rel target = $region3
    $region8: #{graph_skip_forward.4} parent=1 // loop_exit
      _

// kernel: graph_skip_forward.3
$region0: #{graph_skip_forward.3}
  #allocation0 [shape = 'u32[]', space=smem, size = 0x4, offset = 0x4, fixed_abs, tag = 'smem constant byte address 0x4 - core index']
  #allocation1 [shape = 'u32[144,128]{1,0:T(1,128)}', space=vmem, size = 0x12000, scoped, tag = 'internal scratch']
  #allocation2 [shape = 'f32[128,128]{1,0:T(8,128)}', space=vmem, size = 0x10000, scoped, tag = 'scratch operand']
  #allocation3 [shape = 'f32[1,1]{1,0:T(1,128)S(6)}', space=smem, size = 0x200, scoped, tag = 'scoped memory for graph_skip_forward.3']
  %s0 = inlined_call_operand.vmem [shape: bf16[384,384], index: 0, kind: input, shape index: {}]
  %s1 = inlined_call_operand.vmem [shape: bf16[384,128], index: 1, kind: input, shape index: {}, may-alias: {1,2}]
  %s2 = inlined_call_operand.vmem [shape: bf16[384,128], index: 2, kind: input, shape index: {}, may-alias: {1,2}]
  %s3 = inlined_call_operand.vmem [shape: bf16[256,128], index: 3, kind: input, shape index: {}]
  %s4 = inlined_call_operand.vmem [shape: f32[1,128], index: 4, kind: input, shape index: {}]
  %s5 = inlined_call_operand.<no memory space> [shape: f32[1,1], index: 5, kind: input, shape index: {}]
  %s6 = inlined_call_operand.vmem [shape: bf16[128,128], index: 6, kind: input, shape index: {}]
  %s7 = inlined_call_operand.vmem [shape: f32[1,128], index: 7, kind: input, shape index: {}]
  %s8 = inlined_call_operand.vmem [shape: bf16[384,128], index: 8, kind: output, shape index: {}]
  %s9 = sld [smem:[#allocation0]]
  $region114: #{graph_skip_forward.3} parent=0
    _
  %s11 = ssub.s32 1, %s9
  %s12 = scalar_select 0, %s11, %s9
  %13 = sst [smem:[#allocation3]] %s5
  $region1: #{graph_skip_forward.3} parent=0
    #allocation4 [shape = 'u8[65536]{0}', space=vmem, size = 0x10000, scoped, tag = 'input window, operand 0']
    loop: start=0, step=1, limit=11
    $region2: #{graph_skip_forward.3} parent=1 // loop_pre_header
      _
    $region3: #{graph_skip_forward.3} parent=1 // loop_header
      %s15 = sphi 0, %s19
      %p16 = scmp.ge.s32.totalorder %s15, 11
      %s22 = sphi 0, %s34
      %s23 = sphi 0, %s30
      %s24 = sphi 0, %s22
      %s25 = sphi 0, %s23
      %s26 = sphi 0, %s24
      %s27 = sphi 0, %s25
      %s39 = sphi 0, %s41
      %s42 = sphi 0, %s39
      %s43 = sphi 0, %s42
      %s59 = sphi 0, %s43
      %s65 = sphi 0, %s67
      %s68 = sphi 0, %s65
      %s69 = sphi 0, %s68
      %s85 = sphi 0, %s69
      %s91 = sphi 0, %s93
      %s94 = sphi 0, %s91
      %s95 = sphi 0, %s94
      %s111 = sphi 0, %s95
      %s115 = sphi 0, %s115
      %s117 = sphi 0, %s115
      %s118 = sphi 0, %s117
      %s132 = sphi 0, %s118
      %s136 = sphi 0, %s136
      %s138 = sphi 0, %s136
      %s139 = sphi 0, %s138
      %s153 = sphi 0, %s139
      %s157 = sphi 0, %s157
      %s159 = sphi 0, %s157
      %s160 = sphi 0, %s159
      %s174 = sphi 0, %s160
      %s178 = sphi 0, %s178
      %s180 = sphi 0, %s178
      %s181 = sphi 0, %s180
      %s195 = sphi 0, %s181
      %s199 = sphi 0, %s199
      %s201 = sphi 0, %s199
      %s202 = sphi 0, %s201
      %s216 = sphi 0, %s202
      %s222 = sphi 0, %s224
      %s225 = sphi 0, %s222
      %s226 = sphi 0, %s225
      %s242 = sphi 0, %s226
    $region4: #{graph_skip_forward.3} parent=1 // loop_header_branch
      %18 = sbr.rel (%p16) target = $region8
    $region5: #{graph_skip_forward.3} parent=1 // loop_body
      %s20 = ssub.s32 %s15, 1
      %s21 = ssub.s32 %s15, 2
      %s28 = sadd.s32 1, %s23
      %p29 = scmp.ge.s32.totalorder %s28, 3
      %s30 = scalar_select %p29, 0, %s28
      %s31 = sadd.s32 1, %s22
      %s32 = scalar_select %p29, %s31, %s22
      %p33 = scmp.ge.s32.totalorder %s32, 3
      %s34 = scalar_select %p33, 0, %s32
      %s35 = ssub.s32 %s22, %s34
      %s36 = ssub.s32 %s23, %s30
      %s37 = sor.u32 %s35, %s36
      %p38 = scmp.eq.s32.totalorder %s37, 0
      %s40 = sadd.s32 %s39, 1
      %s41 = scalar_select %p38, %s39, %s40
      %p44 = pneg %p38
      %p45 = scmp.eq.s32.totalorder %s15, 8
      %p46 = por %p44, %p45
      %p47 = scmp.ne.s32.totalorder %s39, %s42
      %p48 = scmp.eq.s32.totalorder %s15, 0
      %p49 = por %p47, %p48
      %p50 = scmp.ne.s32.totalorder %s39, %s42
      %p51 = scmp.eq.s32.totalorder %s20, 8
      %p52 = por %p50, %p51
      %p53 = scmp.ne.s32.totalorder %s42, %s43
      %p54 = scmp.eq.s32.totalorder %s20, 0
      %p55 = por %p53, %p54
      %p56 = scmp.ne.s32.totalorder %s42, %s43
      %p57 = scmp.eq.s32.totalorder %s21, 8
      %p58 = por %p56, %p57
      %p60 = scmp.ne.s32.totalorder %s43, %s59
      %p61 = scmp.eq.s32.totalorder %s21, 0
      %p62 = por %p60, %p61
      %s63 = ssub.s32 %s23, %s30
      %p64 = scmp.eq.s32.totalorder %s63, 0
      %s66 = sadd.s32 %s65, 1
      %s67 = scalar_select %p64, %s65, %s66
      %p70 = pneg %p64
      %p71 = scmp.eq.s32.totalorder %s15, 8
      %p72 = por %p70, %p71
      %p73 = scmp.ne.s32.totalorder %s65, %s68
      %p74 = scmp.eq.s32.totalorder %s15, 0
      %p75 = por %p73, %p74
      %p76 = scmp.ne.s32.totalorder %s65, %s68
      %p77 = scmp.eq.s32.totalorder %s20, 8
      %p78 = por %p76, %p77
      %p79 = scmp.ne.s32.totalorder %s68, %s69
      %p80 = scmp.eq.s32.totalorder %s20, 0
      %p81 = por %p79, %p80
      %p82 = scmp.ne.s32.totalorder %s68, %s69
      %p83 = scmp.eq.s32.totalorder %s21, 8
      %p84 = por %p82, %p83
      %p86 = scmp.ne.s32.totalorder %s69, %s85
      %p87 = scmp.eq.s32.totalorder %s21, 0
      %p88 = por %p86, %p87
      %s89 = ssub.s32 %s22, %s34
      %p90 = scmp.eq.s32.totalorder %s89, 0
      %s92 = sadd.s32 %s91, 1
      %s93 = scalar_select %p90, %s91, %s92
      %p96 = pneg %p90
      %p97 = scmp.eq.s32.totalorder %s15, 8
      %p98 = por %p96, %p97
      %p99 = scmp.ne.s32.totalorder %s91, %s94
      %p100 = scmp.eq.s32.totalorder %s15, 0
      %p101 = por %p99, %p100
      %p102 = scmp.ne.s32.totalorder %s91, %s94
      %p103 = scmp.eq.s32.totalorder %s20, 8
      %p104 = por %p102, %p103
      %p105 = scmp.ne.s32.totalorder %s94, %s95
      %p106 = scmp.eq.s32.totalorder %s20, 0
      %p107 = por %p105, %p106
      %p108 = scmp.ne.s32.totalorder %s94, %s95
      %p109 = scmp.eq.s32.totalorder %s21, 8
      %p110 = por %p108, %p109
      %p112 = scmp.ne.s32.totalorder %s95, %s111
      %p113 = scmp.eq.s32.totalorder %s21, 0
      %p114 = por %p112, %p113
      %s116 = sadd.s32 %s115, 1
      %p119 = scmp.eq.s32.totalorder %s15, 8
      %p120 = scmp.ne.s32.totalorder %s115, %s117
      %p121 = scmp.eq.s32.totalorder %s15, 0
      %p122 = por %p120, %p121
      %p123 = scmp.ne.s32.totalorder %s115, %s117
      %p124 = scmp.eq.s32.totalorder %s20, 8
      %p125 = por %p123, %p124
      %p126 = scmp.ne.s32.totalorder %s117, %s118
      %p127 = scmp.eq.s32.totalorder %s20, 0
      %p128 = por %p126, %p127
      %p129 = scmp.ne.s32.totalorder %s117, %s118
      %p130 = scmp.eq.s32.totalorder %s21, 8
      %p131 = por %p129, %p130
      %p133 = scmp.ne.s32.totalorder %s118, %s132
      %p134 = scmp.eq.s32.totalorder %s21, 0
      %p135 = por %p133, %p134
      %s137 = sadd.s32 %s136, 1
      %p140 = scmp.eq.s32.totalorder %s15, 8
      %p141 = scmp.ne.s32.totalorder %s136, %s138
      %p142 = scmp.eq.s32.totalorder %s15, 0
      %p143 = por %p141, %p142
      %p144 = scmp.ne.s32.totalorder %s136, %s138
      %p145 = scmp.eq.s32.totalorder %s20, 8
      %p146 = por %p144, %p145
      %p147 = scmp.ne.s32.totalorder %s138, %s139
      %p148 = scmp.eq.s32.totalorder %s20, 0
      %p149 = por %p147, %p148
      %p150 = scmp.ne.s32.totalorder %s138, %s139
      %p151 = scmp.eq.s32.totalorder %s21, 8
      %p152 = por %p150, %p151
      %p154 = scmp.ne.s32.totalorder %s139, %s153
      %p155 = scmp.eq.s32.totalorder %s21, 0
      %p156 = por %p154, %p155
      %s158 = sadd.s32 %s157, 1
      %p161 = scmp.eq.s32.totalorder %s15, 8
      %p162 = scmp.ne.s32.totalorder %s157, %s159
      %p163 = scmp.eq.s32.totalorder %s15, 0
      %p164 = por %p162, %p163
      %p165 = scmp.ne.s32.totalorder %s157, %s159
      %p166 = scmp.eq.s32.totalorder %s20, 8
      %p167 = por %p165, %p166
      %p168 = scmp.ne.s32.totalorder %s159, %s160
      %p169 = scmp.eq.s32.totalorder %s20, 0
      %p170 = por %p168, %p169
      %p171 = scmp.ne.s32.totalorder %s159, %s160
      %p172 = scmp.eq.s32.totalorder %s21, 8
      %p173 = por %p171, %p172
      %p175 = scmp.ne.s32.totalorder %s160, %s174
      %p176 = scmp.eq.s32.totalorder %s21, 0
      %p177 = por %p175, %p176
      %s179 = sadd.s32 %s178, 1
      %p182 = scmp.eq.s32.totalorder %s15, 8
      %p183 = scmp.ne.s32.totalorder %s178, %s180
      %p184 = scmp.eq.s32.totalorder %s15, 0
      %p185 = por %p183, %p184
      %p186 = scmp.ne.s32.totalorder %s178, %s180
      %p187 = scmp.eq.s32.totalorder %s20, 8
      %p188 = por %p186, %p187
      %p189 = scmp.ne.s32.totalorder %s180, %s181
      %p190 = scmp.eq.s32.totalorder %s20, 0
      %p191 = por %p189, %p190
      %p192 = scmp.ne.s32.totalorder %s180, %s181
      %p193 = scmp.eq.s32.totalorder %s21, 8
      %p194 = por %p192, %p193
      %p196 = scmp.ne.s32.totalorder %s181, %s195
      %p197 = scmp.eq.s32.totalorder %s21, 0
      %p198 = por %p196, %p197
      %s200 = sadd.s32 %s199, 1
      %p203 = scmp.eq.s32.totalorder %s15, 8
      %p204 = scmp.ne.s32.totalorder %s199, %s201
      %p205 = scmp.eq.s32.totalorder %s15, 0
      %p206 = por %p204, %p205
      %p207 = scmp.ne.s32.totalorder %s199, %s201
      %p208 = scmp.eq.s32.totalorder %s20, 8
      %p209 = por %p207, %p208
      %p210 = scmp.ne.s32.totalorder %s201, %s202
      %p211 = scmp.eq.s32.totalorder %s20, 0
      %p212 = por %p210, %p211
      %p213 = scmp.ne.s32.totalorder %s201, %s202
      %p214 = scmp.eq.s32.totalorder %s21, 8
      %p215 = por %p213, %p214
      %p217 = scmp.ne.s32.totalorder %s202, %s216
      %p218 = scmp.eq.s32.totalorder %s21, 0
      %p219 = por %p217, %p218
      %s220 = ssub.s32 %s22, %s34
      %p221 = scmp.eq.s32.totalorder %s220, 0
      %s223 = sadd.s32 %s222, 1
      %s224 = scalar_select %p221, %s222, %s223
      %p227 = pneg %p221
      %p228 = scmp.eq.s32.totalorder %s15, 8
      %p229 = por %p227, %p228
      %p230 = scmp.ne.s32.totalorder %s222, %s225
      %p231 = scmp.eq.s32.totalorder %s15, 0
      %p232 = por %p230, %p231
      %p233 = scmp.ne.s32.totalorder %s222, %s225
      %p234 = scmp.eq.s32.totalorder %s20, 8
      %p235 = por %p233, %p234
      %p236 = scmp.ne.s32.totalorder %s225, %s226
      %p237 = scmp.eq.s32.totalorder %s20, 0
      %p238 = por %p236, %p237
      %p239 = scmp.ne.s32.totalorder %s225, %s226
      %p240 = scmp.eq.s32.totalorder %s21, 8
      %p241 = por %p239, %p240
      %p243 = scmp.ne.s32.totalorder %s226, %s242
      %p244 = scmp.eq.s32.totalorder %s21, 0
      %p245 = por %p243, %p244
      %p246 = scmp.le.s32.totalorder 1, %s15
      %p247 = scmp.lt.s32.totalorder %s15, 10
      %p248 = pnand %p246, %p247
      %p249 = pneg %p248
      // Predicated region
      $region9: #{graph_skip_forward.3} parent=5 // pred_check
        _
      $region10: #{graph_skip_forward.3} parent=5 // pred_check_branch
        %251 = sbr.rel (%p248) target = $region12
      $region11: #{graph_skip_forward.3} parent=5 // pred_region
        %s252 = ssub.s32 %s15, 1
        // Predicated region
        $region13: #{graph_skip_forward.3} parent=11 // pred_check
          %p253 = pneg %p128
        $region14: #{graph_skip_forward.3} parent=11 // pred_check_branch
          %255 = sbr.rel (%p253) target = $region16
        $region15: #{graph_skip_forward.3} parent=11 // pred_region
          _
        $region16: #{graph_skip_forward.3} parent=11 // pred_fallthru
          _
        // Predicated region
        $region17: #{graph_skip_forward.3} parent=11 // pred_check
          %p256 = pneg %p149
        $region18: #{graph_skip_forward.3} parent=11 // pred_check_branch
          %258 = sbr.rel (%p256) target = $region20
        $region19: #{graph_skip_forward.3} parent=11 // pred_region
          _
        $region20: #{graph_skip_forward.3} parent=11 // pred_fallthru
          _
        // Predicated region
        $region21: #{graph_skip_forward.3} parent=11 // pred_check
          %p259 = pneg %p170
        $region22: #{graph_skip_forward.3} parent=11 // pred_check_branch
          %261 = sbr.rel (%p259) target = $region24
        $region23: #{graph_skip_forward.3} parent=11 // pred_region
          _
        $region24: #{graph_skip_forward.3} parent=11 // pred_fallthru
          _
        // Predicated region
        $region25: #{graph_skip_forward.3} parent=11 // pred_check
          %p262 = pneg %p191
        $region26: #{graph_skip_forward.3} parent=11 // pred_check_branch
          %264 = sbr.rel (%p262) target = $region28
        $region27: #{graph_skip_forward.3} parent=11 // pred_region
          _
        $region28: #{graph_skip_forward.3} parent=11 // pred_fallthru
          _
        // Predicated region
        $region29: #{graph_skip_forward.3} parent=11 // pred_check
          %p265 = pneg %p212
        $region30: #{graph_skip_forward.3} parent=11 // pred_check_branch
          %267 = sbr.rel (%p265) target = $region32
        $region31: #{graph_skip_forward.3} parent=11 // pred_region
          _
        $region32: #{graph_skip_forward.3} parent=11 // pred_fallthru
          _
      $region12: #{graph_skip_forward.3} parent=5 // pred_fallthru
        _
      %p268 = scmp.lt.s32.totalorder %s15, 9
      // Predicated region
      $region33: #{graph_skip_forward.3} parent=5 // pred_check
        %p269 = pneg %p268
      $region34: #{graph_skip_forward.3} parent=5 // pred_check_branch
        %271 = sbr.rel (%p269) target = $region36
      $region35: #{graph_skip_forward.3} parent=5 // pred_region
        // Predicated region
        $region37: #{graph_skip_forward.3} parent=35 // pred_check
          %p272 = pneg %p49
        $region38: #{graph_skip_forward.3} parent=35 // pred_check_branch
          %274 = sbr.rel (%p272) target = $region40
        $region39: #{graph_skip_forward.3} parent=35 // pred_region
          %s275 = sand.u32 %s39, 1
          %s276 = sand.u32 %s39, 1
          %s277 = smul.addr %s276, 64
          %s278 = scalar_lea.vmem [#allocation4], %s277
          %s279 = smul.u32 16, %s22
          %s280 = smul.addr %s279, 3
          %s281 = sadd.s32 %s23, %s280
          %s282 = smul.addr %s281, 4
          %s283 = scalar_lea.vmem %s0, %s282
          // Predicated region
          $region41: #{graph_skip_forward.3} parent=39 // pred_check
            _
          $region42: #{graph_skip_forward.3} parent=39 // pred_check_branch
            %285 = sbr.rel (0) target = $region44
          $region43: #{graph_skip_forward.3} parent=39 // pred_region
            // Predicated region
            $region45: #{graph_skip_forward.3} parent=43 // pred_check
              _
            $region46: #{graph_skip_forward.3} parent=43 // pred_check_branch
              %287 = sbr.rel target = $region48
            $region47: #{graph_skip_forward.3} parent=43 // pred_region
              // Predicated region
              $region60: #{graph_skip_forward.3} parent=47 // pred_check
                _
              $region61: #{graph_skip_forward.3} parent=47 // pred_check_branch
                %332 = sbr.rel (0) target = $region63
              $region62: #{graph_skip_forward.3} parent=47 // pred_region
                loop: start=0, step=1, limit=1
                $region64: #{graph_skip_forward.3} parent=62 // loop_pre_header
                  _
                $region65: #{graph_skip_forward.3} parent=62 // loop_header
                  %s334 = sphi 0, %s338
                  %p335 = scmp.ge.s32.totalorder %s334, 1
                  %s339 = sphi %s283, %s283
                  %s340 = sphi %s278, %s278
                $region66: #{graph_skip_forward.3} parent=62 // loop_header_branch
                  %337 = sbr.rel (%p335) target = $region70
                $region67: #{graph_skip_forward.3} parent=62 // loop_body
                  _
                $region68: #{graph_skip_forward.3} parent=62 // loop_footer
                  %s338 = sadd.s32 1, %s334
                $region69: #{graph_skip_forward.3} parent=62 // loop_footer_branch
                  %333 = sbr.rel target = $region65
                $region70: #{graph_skip_forward.3} parent=62 // loop_exit
                  _
                loop: start=0, step=1, limit=1
                $region71: #{graph_skip_forward.3} parent=62 // loop_pre_header
                  _
                $region72: #{graph_skip_forward.3} parent=62 // loop_header
                  %s343 = sphi 0, %s347
                  %p344 = scmp.ge.s32.totalorder %s343, 1
                  %s348 = sphi %s283, %s283
                  %s349 = sphi %s278, %s278
                $region73: #{graph_skip_forward.3} parent=62 // loop_header_branch
                  %346 = sbr.rel (%p344) target = $region77
                $region74: #{graph_skip_forward.3} parent=62 // loop_body
                  %v350 = vld [vmem:[%s348] sm:$0xf]
                  %351 = vst [vmem:[%s349] sm:$0xf] %v350
                  %v352 = vld [vmem:[%s348 + $0xc] sm:$0xf]
                  %353 = vst [vmem:[%s349 + $0x4] sm:$0xf] %v352
                  %v354 = vld [vmem:[%s348 + $0x18] sm:$0xf]
                  %355 = vst [vmem:[%s349 + $0x8] sm:$0xf] %v354
                  %v356 = vld [vmem:[%s348 + $0x24] sm:$0xf]
                  %357 = vst [vmem:[%s349 + $0xc] sm:$0xf] %v356
                  %v358 = vld [vmem:[%s348 + $0x30] sm:$0xf]
                  %359 = vst [vmem:[%s349 + $0x10] sm:$0xf] %v358
                  %v360 = vld [vmem:[%s348 + $0x3c] sm:$0xf]
                  %361 = vst [vmem:[%s349 + $0x14] sm:$0xf] %v360
                  %v362 = vld [vmem:[%s348 + $0x48] sm:$0xf]
                  %363 = vst [vmem:[%s349 + $0x18] sm:$0xf] %v362
                  %v364 = vld [vmem:[%s348 + $0x54] sm:$0xf]
                  %365 = vst [vmem:[%s349 + $0x1c] sm:$0xf] %v364
                  %v366 = vld [vmem:[%s348 + $0x60] sm:$0xf]
                  %367 = vst [vmem:[%s349 + $0x20] sm:$0xf] %v366
                  %v368 = vld [vmem:[%s348 + $0x6c] sm:$0xf]
                  %369 = vst [vmem:[%s349 + $0x24] sm:$0xf] %v368
                  %v370 = vld [vmem:[%s348 + $0x78] sm:$0xf]
                  %371 = vst [vmem:[%s349 + $0x28] sm:$0xf] %v370
                  %v372 = vld [vmem:[%s348 + $0x84] sm:$0xf]
                  %373 = vst [vmem:[%s349 + $0x2c] sm:$0xf] %v372
                  %v374 = vld [vmem:[%s348 + $0x90] sm:$0xf]
                  %375 = vst [vmem:[%s349 + $0x30] sm:$0xf] %v374
                  %v376 = vld [vmem:[%s348 + $0x9c] sm:$0xf]
                  %377 = vst [vmem:[%s349 + $0x34] sm:$0xf] %v376
                  %v378 = vld [vmem:[%s348 + $0xa8] sm:$0xf]
                  %379 = vst [vmem:[%s349 + $0x38] sm:$0xf] %v378
                  %v380 = vld [vmem:[%s348 + $0xb4] sm:$0xf]
                  %381 = vst [vmem:[%s349 + $0x3c] sm:$0xf] %v380
                $region75: #{graph_skip_forward.3} parent=62 // loop_footer
                  %s347 = sadd.s32 1, %s343
                $region76: #{graph_skip_forward.3} parent=62 // loop_footer_branch
                  %342 = sbr.rel target = $region72
                $region77: #{graph_skip_forward.3} parent=62 // loop_exit
                  _
              $region63: #{graph_skip_forward.3} parent=47 // pred_fallthru
                _
            $region48: #{graph_skip_forward.3} parent=43 // pred_fallthru
              _
            // Predicated region
            $region49: #{graph_skip_forward.3} parent=43 // pred_check
              _
            $region50: #{graph_skip_forward.3} parent=43 // pred_check_branch
              %289 = sbr.rel (0) target = $region52
            $region51: #{graph_skip_forward.3} parent=43 // pred_region
              loop: start=0, step=1, limit=1
              $region53: #{graph_skip_forward.3} parent=51 // loop_pre_header
                _
              $region54: #{graph_skip_forward.3} parent=51 // loop_header
                %s292 = sphi 0, %s296
                %p293 = scmp.ge.s32.totalorder %s292, 1
                %s297 = sphi %s283, %s283
                %s298 = sphi %s278, %s278
              $region55: #{graph_skip_forward.3} parent=51 // loop_header_branch
                %295 = sbr.rel (%p293) target = $region59
              $region56: #{graph_skip_forward.3} parent=51 // loop_body
                %v299 = vld [vmem:[%s297] sm:$0xf]
                %300 = vst [vmem:[%s298] sm:$0xf] %v299
                %v301 = vld [vmem:[%s297 + $0xc] sm:$0xf]
                %302 = vst [vmem:[%s298 + $0x4] sm:$0xf] %v301
                %v303 = vld [vmem:[%s297 + $0x18] sm:$0xf]
                %304 = vst [vmem:[%s298 + $0x8] sm:$0xf] %v303
                %v305 = vld [vmem:[%s297 + $0x24] sm:$0xf]
                %306 = vst [vmem:[%s298 + $0xc] sm:$0xf] %v305
                %v307 = vld [vmem:[%s297 + $0x30] sm:$0xf]
                %308 = vst [vmem:[%s298 + $0x10] sm:$0xf] %v307
                %v309 = vld [vmem:[%s297 + $0x3c] sm:$0xf]
                %310 = vst [vmem:[%s298 + $0x14] sm:$0xf] %v309
                %v311 = vld [vmem:[%s297 + $0x48] sm:$0xf]
                %312 = vst [vmem:[%s298 + $0x18] sm:$0xf] %v311
                %v313 = vld [vmem:[%s297 + $0x54] sm:$0xf]
                %314 = vst [vmem:[%s298 + $0x1c] sm:$0xf] %v313
                %v315 = vld [vmem:[%s297 + $0x60] sm:$0xf]
                %316 = vst [vmem:[%s298 + $0x20] sm:$0xf] %v315
                %v317 = vld [vmem:[%s297 + $0x6c] sm:$0xf]
                %318 = vst [vmem:[%s298 + $0x24] sm:$0xf] %v317
                %v319 = vld [vmem:[%s297 + $0x78] sm:$0xf]
                %320 = vst [vmem:[%s298 + $0x28] sm:$0xf] %v319
                %v321 = vld [vmem:[%s297 + $0x84] sm:$0xf]
                %322 = vst [vmem:[%s298 + $0x2c] sm:$0xf] %v321
                %v323 = vld [vmem:[%s297 + $0x90] sm:$0xf]
                %324 = vst [vmem:[%s298 + $0x30] sm:$0xf] %v323
                %v325 = vld [vmem:[%s297 + $0x9c] sm:$0xf]
                %326 = vst [vmem:[%s298 + $0x34] sm:$0xf] %v325
                %v327 = vld [vmem:[%s297 + $0xa8] sm:$0xf]
                %328 = vst [vmem:[%s298 + $0x38] sm:$0xf] %v327
                %v329 = vld [vmem:[%s297 + $0xb4] sm:$0xf]
                %330 = vst [vmem:[%s298 + $0x3c] sm:$0xf] %v329
              $region57: #{graph_skip_forward.3} parent=51 // loop_footer
                %s296 = sadd.s32 1, %s292
              $region58: #{graph_skip_forward.3} parent=51 // loop_footer_branch
                %291 = sbr.rel target = $region54
              $region59: #{graph_skip_forward.3} parent=51 // loop_exit
                _
            $region52: #{graph_skip_forward.3} parent=43 // pred_fallthru
              _
          $region44: #{graph_skip_forward.3} parent=39 // pred_fallthru
            _
          %382 = vnop
        $region40: #{graph_skip_forward.3} parent=35 // pred_fallthru
          _
        // Predicated region
        $region78: #{graph_skip_forward.3} parent=35 // pred_check
          %p383 = pneg %p75
        $region79: #{graph_skip_forward.3} parent=35 // pred_check_branch
          %385 = sbr.rel (%p383) target = $region81
        $region80: #{graph_skip_forward.3} parent=35 // pred_region
          %s386 = smul.u32 16, %s23
          %p387 = scmp.lt.s32.totalorder %s386, 47
          %s388 = scalar_select %p387, %s386, 47
          %s389 = smul.addr %s388, 4
          %s390 = scalar_lea.vmem %s1, %s389
          %s391 = smul.u32 16, %s23
        $region81: #{graph_skip_forward.3} parent=35 // pred_fallthru
          _
        // Predicated region
        $region82: #{graph_skip_forward.3} parent=35 // pred_check
          %p392 = pneg %p101
        $region83: #{graph_skip_forward.3} parent=35 // pred_check_branch
          %394 = sbr.rel (%p392) target = $region85
        $region84: #{graph_skip_forward.3} parent=35 // pred_region
          %s395 = smul.u32 16, %s22
          %p396 = scmp.lt.s32.totalorder %s395, 47
          %s397 = scalar_select %p396, %s395, 47
          %s398 = smul.addr %s397, 4
          %s399 = scalar_lea.vmem %s2, %s398
          %s400 = smul.u32 16, %s22
        $region85: #{graph_skip_forward.3} parent=35 // pred_fallthru
          _
      $region36: #{graph_skip_forward.3} parent=5 // pred_fallthru
        _
      %p401 = scmp.le.s32.totalorder 1, %s15
      %p402 = scmp.lt.s32.totalorder %s15, 10
      %p403 = pnand %p401, %p402
      %p404 = pneg %p403
      // Predicated region
      $region86: #{graph_skip_forward.3} parent=5 // pred_check
        _
      $region87: #{graph_skip_forward.3} parent=5 // pred_check_branch
        %406 = sbr.rel (%p403) target = $region89
      $region88: #{graph_skip_forward.3} parent=5 // pred_region
        %s407 = ssub.s32 %s15, 1
        %s408 = sand.u32 %s42, 1
        %s409 = sand.u32 %s42, 1
        %s410 = smul.addr %s409, 64
        %s411 = scalar_lea.vmem [#allocation4], %s410
        // Predicated region
        $region90: #{graph_skip_forward.3} parent=88 // pred_check
          %p412 = pneg %p55
        $region91: #{graph_skip_forward.3} parent=88 // pred_check_branch
          %414 = sbr.rel (%p412) target = $region93
        $region92: #{graph_skip_forward.3} parent=88 // pred_region
          _
        $region93: #{graph_skip_forward.3} parent=88 // pred_fallthru
          _
        %s415 = sand.u32 %s42, 1
        %s416 = sand.u32 %s42, 1
        %s417 = smul.addr %s416, 64
        %s418 = scalar_lea.vmem [#allocation4], %s417
        %p419 = pneg %p55
        %p420 = pneg %p52
        %s421 = smul.u32 16, %s25
        %p422 = scmp.lt.s32.totalorder %s421, 47
        %s423 = scalar_select %p422, %s421, 47
        %s424 = smul.addr %s423, 4
        %s425 = scalar_lea.vmem %s1, %s424
        %p426 = pneg %p81
        %p427 = pneg %p78
        %s428 = smul.u32 16, %s24
        %p429 = scmp.lt.s32.totalorder %s428, 47
        %s430 = scalar_select %p429, %s428, 47
        %s431 = smul.addr %s430, 4
        %s432 = scalar_lea.vmem %s2, %s431
        %p433 = pneg %p107
        %p434 = pneg %p104
        %p435 = pneg %p128
        %p436 = pneg %p125
        %p437 = pneg %p149
        %p438 = pneg %p146
        %p439 = pneg %p170
        %p440 = pneg %p167
        %p441 = pneg %p191
        %p442 = pneg %p188
        %p443 = pneg %p212
        %p444 = pneg %p209
        %p445 = pneg %p238
        %p446 = pneg %p235
        %s447 = smul.u32 16, %s24
        %p448 = scmp.lt.s32.totalorder %s447, 47
        %s449 = scalar_select %p448, %s447, 47
        %s450 = smul.addr %s449, 4
        %s451 = scalar_lea.vmem %s8, %s450
        %s452 = smul.u32 16, %s24
        %s453 = smul.u32 16, %s25
        %p454 = scmp.lt.s32.totalorder %s453, 47
        %s455 = scalar_select %p454, %s453, 47
        %s456 = smul.addr %s455, 4
        %s457 = scalar_lea.vmem %s1, %s456
        %s458 = smul.u32 16, %s25
        %s459 = smul.u32 16, %s24
        %p460 = scmp.lt.s32.totalorder %s459, 47
        %s461 = scalar_select %p460, %s459, 47
        %s462 = smul.addr %s461, 4
        %s463 = scalar_lea.vmem %s2, %s462
        %s464 = smul.u32 16, %s24
        %s465 = smul.u32 16, %s24
        %p466 = scmp.lt.s32.totalorder %s465, 47
        %s467 = scalar_select %p466, %s465, 47
        %s468 = smul.addr %s467, 4
        %s469 = scalar_lea.vmem %s8, %s468
        %s470 = smul.u32 16, %s24
        %p472 = scmp.eq.s32.totalorder %s25, 0
        // Predicated region
        $region94: #{graph_skip_forward.3} parent=88 // pred_check
          %p473 = pneg %p472
        $region95: #{graph_skip_forward.3} parent=88 // pred_check_branch
          %475 = sbr.rel (%p473) target = $region97
        $region96: #{graph_skip_forward.3} parent=88 // pred_region
          %476 = vst [vmem:[#allocation2] sm:$0xff] 0.0
          %477 = vst [vmem:[#allocation2 + $0x8] sm:$0xff] 0.0
          %478 = vst [vmem:[#allocation2 + $0x10] sm:$0xff] 0.0
          %479 = vst [vmem:[#allocation2 + $0x18] sm:$0xff] 0.0
          %480 = vst [vmem:[#allocation2 + $0x20] sm:$0xff] 0.0
          %481 = vst [vmem:[#allocation2 + $0x28] sm:$0xff] 0.0
          %482 = vst [vmem:[#allocation2 + $0x30] sm:$0xff] 0.0
          %483 = vst [vmem:[#allocation2 + $0x38] sm:$0xff] 0.0
          %484 = vst [vmem:[#allocation2 + $0x40] sm:$0xff] 0.0
          %485 = vst [vmem:[#allocation2 + $0x48] sm:$0xff] 0.0
          %486 = vst [vmem:[#allocation2 + $0x50] sm:$0xff] 0.0
          %487 = vst [vmem:[#allocation2 + $0x58] sm:$0xff] 0.0
          %488 = vst [vmem:[#allocation2 + $0x60] sm:$0xff] 0.0
          %489 = vst [vmem:[#allocation2 + $0x68] sm:$0xff] 0.0
          %490 = vst [vmem:[#allocation2 + $0x70] sm:$0xff] 0.0
          %491 = vst [vmem:[#allocation2 + $0x78] sm:$0xff] 0.0
        $region97: #{graph_skip_forward.3} parent=88 // pred_fallthru
          _
        %v492 = vld [vmem:[#allocation2] sm:$0xff]
        %v493 = vld [vmem:[#allocation2 + $0x8] sm:$0xff]
        %v494 = vld [vmem:[#allocation2 + $0x10] sm:$0xff]
        %v495 = vld [vmem:[#allocation2 + $0x18] sm:$0xff]
        %v496 = vld [vmem:[#allocation2 + $0x20] sm:$0xff]
        %v497 = vld [vmem:[#allocation2 + $0x28] sm:$0xff]
        %v498 = vld [vmem:[#allocation2 + $0x30] sm:$0xff]
        %v499 = vld [vmem:[#allocation2 + $0x38] sm:$0xff]
        %v500 = vld [vmem:[#allocation2 + $0x40] sm:$0xff]
        %v501 = vld [vmem:[#allocation2 + $0x48] sm:$0xff]
        %v502 = vld [vmem:[#allocation2 + $0x50] sm:$0xff]
        %v503 = vld [vmem:[#allocation2 + $0x58] sm:$0xff]
        %v504 = vld [vmem:[#allocation2 + $0x60] sm:$0xff]
        %v505 = vld [vmem:[#allocation2 + $0x68] sm:$0xff]
        %v506 = vld [vmem:[#allocation2 + $0x70] sm:$0xff]
        %v507 = vld [vmem:[#allocation2 + $0x78] sm:$0xff]
        %v508 = vld [vmem:[%s411] sm:$0xf]
        %v509 = vld [vmem:[%s411 + $0x4] sm:$0xf]
        %v510 = vld [vmem:[%s411 + $0x8] sm:$0xf]
        %v511 = vld [vmem:[%s411 + $0xc] sm:$0xf]
        %v512 = vld [vmem:[%s411 + $0x10] sm:$0xf]
        %v513 = vld [vmem:[%s411 + $0x14] sm:$0xf]
        %v514 = vld [vmem:[%s411 + $0x18] sm:$0xf]
        %v515 = vld [vmem:[%s411 + $0x1c] sm:$0xf]
        %v516 = vld [vmem:[%s411 + $0x20] sm:$0xf]
        %v517 = vld [vmem:[%s411 + $0x24] sm:$0xf]
        %v518 = vld [vmem:[%s411 + $0x28] sm:$0xf]
        %v519 = vld [vmem:[%s411 + $0x2c] sm:$0xf]
        %v520 = vld [vmem:[%s411 + $0x30] sm:$0xf]
        %v521 = vld [vmem:[%s411 + $0x34] sm:$0xf]
        %v522 = vld [vmem:[%s411 + $0x38] sm:$0xf]
        %v523 = vld [vmem:[%s411 + $0x3c] sm:$0xf]
        %v524 = vld [vmem:[%s457] sm:$0xf]
        %v525 = vld [vmem:[%s457 + $0x4] sm:$0xf]
        %v526 = vld [vmem:[%s457 + $0x8] sm:$0xf]
        %v527 = vld [vmem:[%s457 + $0xc] sm:$0xf]
        %v528 = vld [vmem:[%s457 + $0x10] sm:$0xf]
        %v529 = vld [vmem:[%s457 + $0x14] sm:$0xf]
        %v530 = vld [vmem:[%s457 + $0x18] sm:$0xf]
        %v531 = vld [vmem:[%s457 + $0x1c] sm:$0xf]
        %v532 = vld [vmem:[%s457 + $0x20] sm:$0xf]
        %v533 = vld [vmem:[%s457 + $0x24] sm:$0xf]
        %v534 = vld [vmem:[%s457 + $0x28] sm:$0xf]
        %v535 = vld [vmem:[%s457 + $0x2c] sm:$0xf]
        %v536 = vld [vmem:[%s457 + $0x30] sm:$0xf]
        %v537 = vld [vmem:[%s457 + $0x34] sm:$0xf]
        %v538 = vld [vmem:[%s457 + $0x38] sm:$0xf]
        %v539 = vld [vmem:[%s457 + $0x3c] sm:$0xf]
        %v556 = vunpack.c.l.b16 %v508
        %v557 = vunpack.c.l.b16 %v509
        %v558 = vunpack.c.l.b16 %v510
        %v559 = vunpack.c.l.b16 %v511
        %v560 = vunpack.c.l.b16 %v512
        %v561 = vunpack.c.l.b16 %v513
        %v562 = vunpack.c.l.b16 %v514
        %v563 = vunpack.c.l.b16 %v515
        %v564 = vunpack.c.l.b16 %v516
        %v565 = vunpack.c.l.b16 %v517
        %v566 = vunpack.c.l.b16 %v518
        %v567 = vunpack.c.l.b16 %v519
        %v568 = vunpack.c.l.b16 %v520
        %v569 = vunpack.c.l.b16 %v521
        %v570 = vunpack.c.l.b16 %v522
        %v571 = vunpack.c.l.b16 %v523
        %v572 = vpack.c.b16 %v557, %v556
        %v573 = vpack.c.b16 %v559, %v558
        %v574 = vpack.c.b16 %v561, %v560
        %v575 = vpack.c.b16 %v563, %v562
        %v576 = vpack.c.b16 %v565, %v564
        %v577 = vpack.c.b16 %v567, %v566
        %v578 = vpack.c.b16 %v569, %v568
        %v579 = vpack.c.b16 %v571, %v570
        %v604 = vunpack.c.l.b16 %v524
        %v605 = vunpack.c.l.b16 %v525
        %v606 = vunpack.c.l.b16 %v526
        %v607 = vunpack.c.l.b16 %v527
        %v608 = vunpack.c.l.b16 %v528
        %v609 = vunpack.c.l.b16 %v529
        %v610 = vunpack.c.l.b16 %v530
        %v611 = vunpack.c.l.b16 %v531
        %v612 = vunpack.c.l.b16 %v532
        %v613 = vunpack.c.l.b16 %v533
        %v614 = vunpack.c.l.b16 %v534
        %v615 = vunpack.c.l.b16 %v535
        %v616 = vunpack.c.l.b16 %v536
        %v617 = vunpack.c.l.b16 %v537
        %v618 = vunpack.c.l.b16 %v538
        %v619 = vunpack.c.l.b16 %v539
        %v620 = vpack.c.b16 %v605, %v604
        %v621 = vpack.c.b16 %v607, %v606
        %v622 = vpack.c.b16 %v609, %v608
        %v623 = vpack.c.b16 %v611, %v610
        %v624 = vpack.c.b16 %v613, %v612
        %v625 = vpack.c.b16 %v615, %v614
        %v626 = vpack.c.b16 %v617, %v616
        %v627 = vpack.c.b16 %v619, %v618
        %636 = vmatprep.subr.bf16.mxu0 0
        %637 = vmatpush1.bf16.msra.mxu0 %v620
        %638 = vmatprep.subr.bf16.mxu0 0
        %639 = vmatpush1.bf16.msra.mxu0 %v621
        %640 = vmatprep.subr.bf16.mxu0 0
        %641 = vmatpush1.bf16.msra.mxu0 %v622
        %642 = vmatprep.subr.bf16.mxu0 0
        %643 = vmatpush1.bf16.msra.mxu0 %v623
        %644 = vmatprep.subr.bf16.mxu0 0
        %645 = vmatpush1.bf16.msra.mxu0 %v624
        %646 = vmatprep.subr.bf16.mxu0 0
        %647 = vmatpush1.bf16.msra.mxu0 %v625
        %648 = vmatprep.subr.bf16.mxu0 0
        %649 = vmatpush1.bf16.msra.mxu0 %v626
        %650 = vmatprep.subr.bf16.mxu0 0
        %651 = vmatpush1.bf16.msra.mxu0 %v627
        %652 = vmatprep.subr.bf16.mxu0 0
        %653 = vmatpush1.bf16.msra.mxu0 0
        %654 = vmatprep.subr.bf16.mxu0 0
        %655 = vmatpush1.bf16.msra.mxu0 0
        %656 = vmatprep.subr.bf16.mxu0 0
        %657 = vmatpush1.bf16.msra.mxu0 0
        %658 = vmatprep.subr.bf16.mxu0 0
        %659 = vmatpush1.bf16.msra.mxu0 0
        %660 = vmatprep.subr.bf16.mxu0 0
        %661 = vmatpush1.bf16.msra.mxu0 0
        %662 = vmatprep.subr.bf16.mxu0 0
        %663 = vmatpush1.bf16.msra.mxu0 0
        %664 = vmatprep.subr.bf16.mxu0 0
        %665 = vmatpush1.bf16.msra.mxu0 0
        %666 = vmatprep.subr.bf16.mxu0 0
        %667 = vmatpush1.bf16.msra.mxu0 0
        %668 = vmatprep.mubr.bf16.mxu0 0
        %669 = vmatmul.mubr.bf16.gmra.mrb[0].mxu0 %v572
        %v670 = vpop.f32.mrb[0].mxu0
        %v671 = vadd.f32 0.0, %v670
        %v672 = vpop.f32.mrb[0].mxu0
        %v673 = vpop.f32.mrb[0].mxu0
        %v674 = vadd.f32 0.0, %v673
        %v675 = vpop.f32.mrb[0].mxu0
        %676 = vmatprep.mubr.bf16.mxu0 0
        %677 = vmatmul.mubr.bf16.gmra.mrb[0].mxu0 %v573
        %v678 = vpop.f32.mrb[0].mxu0
        %v679 = vadd.f32 0.0, %v678
        %v680 = vpop.f32.mrb[0].mxu0
        %v681 = vpop.f32.mrb[0].mxu0
        %v682 = vadd.f32 0.0, %v681
        %v683 = vpop.f32.mrb[0].mxu0
        %684 = vmatprep.mubr.bf16.mxu0 0
        %685 = vmatmul.mubr.bf16.gmra.mrb[0].mxu0 %v574
        %v686 = vpop.f32.mrb[0].mxu0
        %v687 = vadd.f32 0.0, %v686
        %v688 = vpop.f32.mrb[0].mxu0
        %v689 = vpop.f32.mrb[0].mxu0
        %v690 = vadd.f32 0.0, %v689
        %v691 = vpop.f32.mrb[0].mxu0
        %692 = vmatprep.mubr.bf16.mxu0 0
        %693 = vmatmul.mubr.bf16.gmra.mrb[0].mxu0 %v575
        %v694 = vpop.f32.mrb[0].mxu0
        %v695 = vadd.f32 0.0, %v694
        %v696 = vpop.f32.mrb[0].mxu0
        %v697 = vpop.f32.mrb[0].mxu0
        %v698 = vadd.f32 0.0, %v697
        %v699 = vpop.f32.mrb[0].mxu0
        %700 = vmatprep.mubr.bf16.mxu0 0
        %701 = vmatmul.mubr.bf16.gmra.mrb[0].mxu0 %v576
        %v702 = vpop.f32.mrb[0].mxu0
        %v703 = vadd.f32 0.0, %v702
        %v704 = vpop.f32.mrb[0].mxu0
        %v705 = vpop.f32.mrb[0].mxu0
        %v706 = vadd.f32 0.0, %v705
        %v707 = vpop.f32.mrb[0].mxu0
        %708 = vmatprep.mubr.bf16.mxu0 0
        %709 = vmatmul.mubr.bf16.gmra.mrb[0].mxu0 %v577
        %v710 = vpop.f32.mrb[0].mxu0
        %v711 = vadd.f32 0.0, %v710
        %v712 = vpop.f32.mrb[0].mxu0
        %v713 = vpop.f32.mrb[0].mxu0
        %v714 = vadd.f32 0.0, %v713
        %v715 = vpop.f32.mrb[0].mxu0
        %716 = vmatprep.mubr.bf16.mxu0 0
        %717 = vmatmul.mubr.bf16.gmra.mrb[0].mxu0 %v578
        %v718 = vpop.f32.mrb[0].mxu0
        %v719 = vadd.f32 0.0, %v718
        %v720 = vpop.f32.mrb[0].mxu0
        %v721 = vpop.f32.mrb[0].mxu0
        %v722 = vadd.f32 0.0, %v721
        %v723 = vpop.f32.mrb[0].mxu0
        %724 = vmatprep.mubr.bf16.mxu0 0
        %725 = vmatmul.mubr.bf16.gmra.mrb[0].mxu0 %v579
        %v726 = vpop.f32.mrb[0].mxu0
        %v727 = vadd.f32 0.0, %v726
        %v728 = vpop.f32.mrb[0].mxu0
        %v729 = vpop.f32.mrb[0].mxu0
        %v730 = vadd.f32 0.0, %v729
        %v731 = vpop.f32.mrb[0].mxu0
        %732 = vdwg.mxu0
        %v733 = vadd.f32 %v492, %v671
        %v734 = vadd.f32 %v493, %v674
        %v735 = vadd.f32 %v494, %v679
        %v736 = vadd.f32 %v495, %v682
        %v737 = vadd.f32 %v496, %v687
        %v738 = vadd.f32 %v497, %v690
        %v739 = vadd.f32 %v498, %v695
        %v740 = vadd.f32 %v499, %v698
        %v741 = vadd.f32 %v500, %v703
        %v742 = vadd.f32 %v501, %v706
        %v743 = vadd.f32 %v502, %v711
        %v744 = vadd.f32 %v503, %v714
        %v745 = vadd.f32 %v504, %v719
        %v746 = vadd.f32 %v505, %v722
        %v747 = vadd.f32 %v506, %v727
        %v748 = vadd.f32 %v507, %v730
        %749 = vst [vmem:[#allocation2] sm:$0xff] %v733
        %750 = vst [vmem:[#allocation2 + $0x8] sm:$0xff] %v734
        %751 = vst [vmem:[#allocation2 + $0x10] sm:$0xff] %v735
        %752 = vst [vmem:[#allocation2 + $0x18] sm:$0xff] %v736
        %753 = vst [vmem:[#allocation2 + $0x20] sm:$0xff] %v737
        %754 = vst [vmem:[#allocation2 + $0x28] sm:$0xff] %v738
        %755 = vst [vmem:[#allocation2 + $0x30] sm:$0xff] %v739
        %756 = vst [vmem:[#allocation2 + $0x38] sm:$0xff] %v740
        %757 = vst [vmem:[#allocation2 + $0x40] sm:$0xff] %v741
        %758 = vst [vmem:[#allocation2 + $0x48] sm:$0xff] %v742
        %759 = vst [vmem:[#allocation2 + $0x50] sm:$0xff] %v743
        %760 = vst [vmem:[#allocation2 + $0x58] sm:$0xff] %v744
        %761 = vst [vmem:[#allocation2 + $0x60] sm:$0xff] %v745
        %762 = vst [vmem:[#allocation2 + $0x68] sm:$0xff] %v746
        %763 = vst [vmem:[#allocation2 + $0x70] sm:$0xff] %v747
        %764 = vst [vmem:[#allocation2 + $0x78] sm:$0xff] %v748
        %p765 = scmp.eq.s32.totalorder %s25, 2
        // Predicated region
        $region98: #{graph_skip_forward.3} parent=88 // pred_check
          %p766 = pneg %p765
        $region99: #{graph_skip_forward.3} parent=88 // pred_check_branch
          %768 = sbr.rel (%p766) target = $region101
        $region100: #{graph_skip_forward.3} parent=88 // pred_region
          %v769 = vld [vmem:[#allocation2] sm:$0xff]
          %v770 = vld [vmem:[#allocation2 + $0x8] sm:$0xff]
          %v771 = vld [vmem:[#allocation2 + $0x10] sm:$0xff]
          %v772 = vld [vmem:[#allocation2 + $0x18] sm:$0xff]
          %v773 = vld [vmem:[#allocation2 + $0x20] sm:$0xff]
          %v774 = vld [vmem:[#allocation2 + $0x28] sm:$0xff]
          %v775 = vld [vmem:[#allocation2 + $0x30] sm:$0xff]
          %v776 = vld [vmem:[#allocation2 + $0x38] sm:$0xff]
          %v777 = vld [vmem:[#allocation2 + $0x40] sm:$0xff]
          %v778 = vld [vmem:[#allocation2 + $0x48] sm:$0xff]
          %v779 = vld [vmem:[#allocation2 + $0x50] sm:$0xff]
          %v780 = vld [vmem:[#allocation2 + $0x58] sm:$0xff]
          %v781 = vld [vmem:[#allocation2 + $0x60] sm:$0xff]
          %v782 = vld [vmem:[#allocation2 + $0x68] sm:$0xff]
          %v783 = vld [vmem:[#allocation2 + $0x70] sm:$0xff]
          %v784 = vld [vmem:[#allocation2 + $0x78] sm:$0xff]
          %v785 = vpack.c.bf16 %v770, %v769
          %v786 = vpack.c.bf16 %v772, %v771
          %v787 = vpack.c.bf16 %v774, %v773
          %v788 = vpack.c.bf16 %v776, %v775
          %v789 = vpack.c.bf16 %v778, %v777
          %v790 = vpack.c.bf16 %v780, %v779
          %v791 = vpack.c.bf16 %v782, %v781
          %v792 = vpack.c.bf16 %v784, %v783
          %v793 = vld [vmem:[%s463] sm:$0xf]
          %v794 = vld [vmem:[%s463 + $0x4] sm:$0xf]
          %v795 = vld [vmem:[%s463 + $0x8] sm:$0xf]
          %v796 = vld [vmem:[%s463 + $0xc] sm:$0xf]
          %v797 = vld [vmem:[%s463 + $0x10] sm:$0xf]
          %v798 = vld [vmem:[%s463 + $0x14] sm:$0xf]
          %v799 = vld [vmem:[%s463 + $0x18] sm:$0xf]
          %v800 = vld [vmem:[%s463 + $0x1c] sm:$0xf]
          %v801 = vld [vmem:[%s463 + $0x20] sm:$0xf]
          %v802 = vld [vmem:[%s463 + $0x24] sm:$0xf]
          %v803 = vld [vmem:[%s463 + $0x28] sm:$0xf]
          %v804 = vld [vmem:[%s463 + $0x2c] sm:$0xf]
          %v805 = vld [vmem:[%s463 + $0x30] sm:$0xf]
          %v806 = vld [vmem:[%s463 + $0x34] sm:$0xf]
          %v807 = vld [vmem:[%s463 + $0x38] sm:$0xf]
          %v808 = vld [vmem:[%s463 + $0x3c] sm:$0xf]
          %v825 = vunpack.c.l.b16 %v793
          %v826 = vunpack.c.l.b16 %v794
          %v827 = vunpack.c.l.b16 %v795
          %v828 = vunpack.c.l.b16 %v796
          %v829 = vunpack.c.l.b16 %v797
          %v830 = vunpack.c.l.b16 %v798
          %v831 = vunpack.c.l.b16 %v799
          %v832 = vunpack.c.l.b16 %v800
          %v833 = vunpack.c.l.b16 %v801
          %v834 = vunpack.c.l.b16 %v802
          %v835 = vunpack.c.l.b16 %v803
          %v836 = vunpack.c.l.b16 %v804
          %v837 = vunpack.c.l.b16 %v805
          %v838 = vunpack.c.l.b16 %v806
          %v839 = vunpack.c.l.b16 %v807
          %v840 = vunpack.c.l.b16 %v808
          %v841 = vpack.c.b16 %v826, %v825
          %v842 = vpack.c.b16 %v828, %v827
          %v843 = vpack.c.b16 %v830, %v829
          %v844 = vpack.c.b16 %v832, %v831
          %v845 = vpack.c.b16 %v834, %v833
          %v846 = vpack.c.b16 %v836, %v835
          %v847 = vpack.c.b16 %v838, %v837
          %v848 = vpack.c.b16 %v840, %v839
          %v857 = vld [vmem:[%s3] sm:$0xf]
          %v858 = vld [vmem:[%s3 + $0x4] sm:$0xf]
          %v859 = vld [vmem:[%s3 + $0x8] sm:$0xf]
          %v860 = vld [vmem:[%s3 + $0xc] sm:$0xf]
          %v861 = vld [vmem:[%s3 + $0x10] sm:$0xf]
          %v862 = vld [vmem:[%s3 + $0x14] sm:$0xf]
          %v863 = vld [vmem:[%s3 + $0x18] sm:$0xf]
          %v864 = vld [vmem:[%s3 + $0x1c] sm:$0xf]
          %v865 = vld [vmem:[%s3 + $0x20] sm:$0xf]
          %v866 = vld [vmem:[%s3 + $0x24] sm:$0xf]
          %v867 = vld [vmem:[%s3 + $0x28] sm:$0xf]
          %v868 = vld [vmem:[%s3 + $0x2c] sm:$0xf]
          %v869 = vld [vmem:[%s3 + $0x30] sm:$0xf]
          %v870 = vld [vmem:[%s3 + $0x34] sm:$0xf]
          %v871 = vld [vmem:[%s3 + $0x38] sm:$0xf]
          %v872 = vld [vmem:[%s3 + $0x3c] sm:$0xf]
          %v873 = vld [vmem:[%s3 + $0x40] sm:$0xf]
          %v874 = vld [vmem:[%s3 + $0x44] sm:$0xf]
          %v875 = vld [vmem:[%s3 + $0x48] sm:$0xf]
          %v876 = vld [vmem:[%s3 + $0x4c] sm:$0xf]
          %v877 = vld [vmem:[%s3 + $0x50] sm:$0xf]
          %v878 = vld [vmem:[%s3 + $0x54] sm:$0xf]
          %v879 = vld [vmem:[%s3 + $0x58] sm:$0xf]
          %v880 = vld [vmem:[%s3 + $0x5c] sm:$0xf]
          %v881 = vld [vmem:[%s3 + $0x60] sm:$0xf]
          %v882 = vld [vmem:[%s3 + $0x64] sm:$0xf]
          %v883 = vld [vmem:[%s3 + $0x68] sm:$0xf]
          %v884 = vld [vmem:[%s3 + $0x6c] sm:$0xf]
          %v885 = vld [vmem:[%s3 + $0x70] sm:$0xf]
          %v886 = vld [vmem:[%s3 + $0x74] sm:$0xf]
          %v887 = vld [vmem:[%s3 + $0x78] sm:$0xf]
          %v888 = vld [vmem:[%s3 + $0x7c] sm:$0xf]
          %v889 = vld [vmem:[%s4] sm:$0x1]
          %v891 = vlaneseq
          %v892 = vshrl.u32 %v891, 7
          %v893 = vsub.s32 0, %v892
          %v894 = vrot.slane %v889, %v893
          %v928 = vunpack.c.l.b16 %v857
          %v929 = vunpack.c.l.b16 %v858
          %v930 = vunpack.c.l.b16 %v859
          %v931 = vunpack.c.l.b16 %v860
          %v932 = vunpack.c.l.b16 %v861
          %v933 = vunpack.c.l.b16 %v862
          %v934 = vunpack.c.l.b16 %v863
          %v935 = vunpack.c.l.b16 %v864
          %v936 = vunpack.c.l.b16 %v865
          %v937 = vunpack.c.l.b16 %v866
          %v938 = vunpack.c.l.b16 %v867
          %v939 = vunpack.c.l.b16 %v868
          %v940 = vunpack.c.l.b16 %v869
          %v941 = vunpack.c.l.b16 %v870
          %v942 = vunpack.c.l.b16 %v871
          %v943 = vunpack.c.l.b16 %v872
          %v944 = vunpack.c.l.b16 %v873
          %v945 = vunpack.c.l.b16 %v874
          %v946 = vunpack.c.l.b16 %v875
          %v947 = vunpack.c.l.b16 %v876
          %v948 = vunpack.c.l.b16 %v877
          %v949 = vunpack.c.l.b16 %v878
          %v950 = vunpack.c.l.b16 %v879
          %v951 = vunpack.c.l.b16 %v880
          %v952 = vunpack.c.l.b16 %v881
          %v953 = vunpack.c.l.b16 %v882
          %v954 = vunpack.c.l.b16 %v883
          %v955 = vunpack.c.l.b16 %v884
          %v956 = vunpack.c.l.b16 %v885
          %v957 = vunpack.c.l.b16 %v886
          %v958 = vunpack.c.l.b16 %v887
          %v959 = vunpack.c.l.b16 %v888
          %v960 = vpack.c.b16 %v929, %v928
          %v961 = vpack.c.b16 %v931, %v930
          %v962 = vpack.c.b16 %v933, %v932
          %v963 = vpack.c.b16 %v935, %v934
          %v964 = vpack.c.b16 %v937, %v936
          %v965 = vpack.c.b16 %v939, %v938
          %v966 = vpack.c.b16 %v941, %v940
          %v967 = vpack.c.b16 %v943, %v942
          %v968 = vpack.c.b16 %v945, %v944
          %v969 = vpack.c.b16 %v947, %v946
          %v970 = vpack.c.b16 %v949, %v948
          %v971 = vpack.c.b16 %v951, %v950
          %v972 = vpack.c.b16 %v953, %v952
          %v973 = vpack.c.b16 %v955, %v954
          %v974 = vpack.c.b16 %v957, %v956
          %v975 = vpack.c.b16 %v959, %v958
          %992 = vmatprep.subr.bf16.mxu0 0
          %993 = vmatpush1.bf16.msra.mxu0 %v960
          %994 = vmatprep.subr.bf16.mxu0 0
          %995 = vmatpush1.bf16.msra.mxu0 %v961
          %996 = vmatprep.subr.bf16.mxu0 0
          %997 = vmatpush1.bf16.msra.mxu0 %v962
          %998 = vmatprep.subr.bf16.mxu0 0
          %999 = vmatpush1.bf16.msra.mxu0 %v963
          %1000 = vmatprep.subr.bf16.mxu0 0
          %1001 = vmatpush1.bf16.msra.mxu0 %v964
          %1002 = vmatprep.subr.bf16.mxu0 0
          %1003 = vmatpush1.bf16.msra.mxu0 %v965
          %1004 = vmatprep.subr.bf16.mxu0 0
          %1005 = vmatpush1.bf16.msra.mxu0 %v966
          %1006 = vmatprep.subr.bf16.mxu0 0
          %1007 = vmatpush1.bf16.msra.mxu0 %v967
          %1008 = vmatprep.subr.bf16.mxu0 0
          %1009 = vmatpush1.bf16.msra.mxu0 %v968
          %1010 = vmatprep.subr.bf16.mxu0 0
          %1011 = vmatpush1.bf16.msra.mxu0 %v969
          %1012 = vmatprep.subr.bf16.mxu0 0
          %1013 = vmatpush1.bf16.msra.mxu0 %v970
          %1014 = vmatprep.subr.bf16.mxu0 0
          %1015 = vmatpush1.bf16.msra.mxu0 %v971
          %1016 = vmatprep.subr.bf16.mxu0 0
          %1017 = vmatpush1.bf16.msra.mxu0 %v972
          %1018 = vmatprep.subr.bf16.mxu0 0
          %1019 = vmatpush1.bf16.msra.mxu0 %v973
          %1020 = vmatprep.subr.bf16.mxu0 0
          %1021 = vmatpush1.bf16.msra.mxu0 %v974
          %1022 = vmatprep.subr.bf16.mxu0 0
          %1023 = vmatpush1.bf16.msra.mxu0 %v975
          %1024 = vmatprep.mubr.bf16.mxu0 %v841
          %1025 = vmatmul.mubr.bf16.gmra.mrb[0].mxu0 %v785
          %v1026 = vpop.f32.mrb[0].mxu0
          %v1027 = vadd.f32 %v894, %v1026
          %v1028 = vpop.f32.mrb[0].mxu0
          %v1029 = vpop.f32.mrb[0].mxu0
          %v1030 = vadd.f32 %v894, %v1029
          %v1031 = vpop.f32.mrb[0].mxu0
          %1032 = vmatprep.mubr.bf16.mxu0 %v842
          %1033 = vmatmul.mubr.bf16.gmra.mrb[0].mxu0 %v786
          %v1034 = vpop.f32.mrb[0].mxu0
          %v1035 = vadd.f32 %v894, %v1034
          %v1036 = vpop.f32.mrb[0].mxu0
          %v1037 = vpop.f32.mrb[0].mxu0
          %v1038 = vadd.f32 %v894, %v1037
          %v1039 = vpop.f32.mrb[0].mxu0
          %1040 = vmatprep.mubr.bf16.mxu0 %v843
          %1041 = vmatmul.mubr.bf16.gmra.mrb[0].mxu0 %v787
          %v1042 = vpop.f32.mrb[0].mxu0
          %v1043 = vadd.f32 %v894, %v1042
          %v1044 = vpop.f32.mrb[0].mxu0
          %v1045 = vpop.f32.mrb[0].mxu0
          %v1046 = vadd.f32 %v894, %v1045
          %v1047 = vpop.f32.mrb[0].mxu0
          %1048 = vmatprep.mubr.bf16.mxu0 %v844
          %1049 = vmatmul.mubr.bf16.gmra.mrb[0].mxu0 %v788
          %v1050 = vpop.f32.mrb[0].mxu0
          %v1051 = vadd.f32 %v894, %v1050
          %v1052 = vpop.f32.mrb[0].mxu0
          %v1053 = vpop.f32.mrb[0].mxu0
          %v1054 = vadd.f32 %v894, %v1053
          %v1055 = vpop.f32.mrb[0].mxu0
          %1056 = vmatprep.mubr.bf16.mxu0 %v845
          %1057 = vmatmul.mubr.bf16.gmra.mrb[0].mxu0 %v789
          %v1058 = vpop.f32.mrb[0].mxu0
          %v1059 = vadd.f32 %v894, %v1058
          %v1060 = vpop.f32.mrb[0].mxu0
          %v1061 = vpop.f32.mrb[0].mxu0
          %v1062 = vadd.f32 %v894, %v1061
          %v1063 = vpop.f32.mrb[0].mxu0
          %1064 = vmatprep.mubr.bf16.mxu0 %v846
          %1065 = vmatmul.mubr.bf16.gmra.mrb[0].mxu0 %v790
          %v1066 = vpop.f32.mrb[0].mxu0
          %v1067 = vadd.f32 %v894, %v1066
          %v1068 = vpop.f32.mrb[0].mxu0
          %v1069 = vpop.f32.mrb[0].mxu0
          %v1070 = vadd.f32 %v894, %v1069
          %v1071 = vpop.f32.mrb[0].mxu0
          %1072 = vmatprep.mubr.bf16.mxu0 %v847
          %1073 = vmatmul.mubr.bf16.gmra.mrb[0].mxu0 %v791
          %v1074 = vpop.f32.mrb[0].mxu0
          %v1075 = vadd.f32 %v894, %v1074
          %v1076 = vpop.f32.mrb[0].mxu0
          %v1077 = vpop.f32.mrb[0].mxu0
          %v1078 = vadd.f32 %v894, %v1077
          %v1079 = vpop.f32.mrb[0].mxu0
          %1080 = vmatprep.mubr.bf16.mxu0 %v848
          %1081 = vmatmul.mubr.bf16.gmra.mrb[0].mxu0 %v792
          %v1082 = vpop.f32.mrb[0].mxu0
          %v1083 = vadd.f32 %v894, %v1082
          %v1084 = vpop.f32.mrb[0].mxu0
          %v1085 = vpop.f32.mrb[0].mxu0
          %v1086 = vadd.f32 %v894, %v1085
          %v1087 = vpop.f32.mrb[0].mxu0
          %1088 = vdwg.mxu0
          %s1089 = sld [smem:[#allocation3]]
          %vm1090 = vcmp.ge.f32.partialorder %v1027, 0.0
          %vm1091 = vcmp.ge.f32.partialorder %v1030, 0.0
          %vm1092 = vcmp.ge.f32.partialorder %v1035, 0.0
          %vm1093 = vcmp.ge.f32.partialorder %v1038, 0.0
          %vm1094 = vcmp.ge.f32.partialorder %v1043, 0.0
          %vm1095 = vcmp.ge.f32.partialorder %v1046, 0.0
          %vm1096 = vcmp.ge.f32.partialorder %v1051, 0.0
          %vm1097 = vcmp.ge.f32.partialorder %v1054, 0.0
          %vm1098 = vcmp.ge.f32.partialorder %v1059, 0.0
          %vm1099 = vcmp.ge.f32.partialorder %v1062, 0.0
          %vm1100 = vcmp.ge.f32.partialorder %v1067, 0.0
          %vm1101 = vcmp.ge.f32.partialorder %v1070, 0.0
          %vm1102 = vcmp.ge.f32.partialorder %v1075, 0.0
          %vm1103 = vcmp.ge.f32.partialorder %v1078, 0.0
          %vm1104 = vcmp.ge.f32.partialorder %v1083, 0.0
          %vm1105 = vcmp.ge.f32.partialorder %v1086, 0.0
          %v1106 = vstv %s1089
          %v1107 = vmul.f32 %v1106, %v1027
          %v1108 = vmul.f32 %v1106, %v1030
          %v1109 = vmul.f32 %v1106, %v1035
          %v1110 = vmul.f32 %v1106, %v1038
          %v1111 = vmul.f32 %v1106, %v1043
          %v1112 = vmul.f32 %v1106, %v1046
          %v1113 = vmul.f32 %v1106, %v1051
          %v1114 = vmul.f32 %v1106, %v1054
          %v1115 = vmul.f32 %v1106, %v1059
          %v1116 = vmul.f32 %v1106, %v1062
          %v1117 = vmul.f32 %v1106, %v1067
          %v1118 = vmul.f32 %v1106, %v1070
          %v1119 = vmul.f32 %v1106, %v1075
          %v1120 = vmul.f32 %v1106, %v1078
          %v1121 = vmul.f32 %v1106, %v1083
          %v1122 = vmul.f32 %v1106, %v1086
          %v1123 = vsel %vm1090, %v1027, %v1107
          %v1124 = vsel %vm1091, %v1030, %v1108
          %v1125 = vsel %vm1092, %v1035, %v1109
          %v1126 = vsel %vm1093, %v1038, %v1110
          %v1127 = vsel %vm1094, %v1043, %v1111
          %v1128 = vsel %vm1095, %v1046, %v1112
          %v1129 = vsel %vm1096, %v1051, %v1113
          %v1130 = vsel %vm1097, %v1054, %v1114
          %v1131 = vsel %vm1098, %v1059, %v1115
          %v1132 = vsel %vm1099, %v1062, %v1116
          %v1133 = vsel %vm1100, %v1067, %v1117
          %v1134 = vsel %vm1101, %v1070, %v1118
          %v1135 = vsel %vm1102, %v1075, %v1119
          %v1136 = vsel %vm1103, %v1078, %v1120
          %v1137 = vsel %vm1104, %v1083, %v1121
          %v1138 = vsel %vm1105, %v1086, %v1122
          %v1139 = vld [vmem:[%s6] sm:$0xf]
          %v1140 = vld [vmem:[%s6 + $0x4] sm:$0xf]
          %v1141 = vld [vmem:[%s6 + $0x8] sm:$0xf]
          %v1142 = vld [vmem:[%s6 + $0xc] sm:$0xf]
          %v1143 = vld [vmem:[%s6 + $0x10] sm:$0xf]
          %v1144 = vld [vmem:[%s6 + $0x14] sm:$0xf]
          %v1145 = vld [vmem:[%s6 + $0x18] sm:$0xf]
          %v1146 = vld [vmem:[%s6 + $0x1c] sm:$0xf]
          %v1147 = vld [vmem:[%s6 + $0x20] sm:$0xf]
          %v1148 = vld [vmem:[%s6 + $0x24] sm:$0xf]
          %v1149 = vld [vmem:[%s6 + $0x28] sm:$0xf]
          %v1150 = vld [vmem:[%s6 + $0x2c] sm:$0xf]
          %v1151 = vld [vmem:[%s6 + $0x30] sm:$0xf]
          %v1152 = vld [vmem:[%s6 + $0x34] sm:$0xf]
          %v1153 = vld [vmem:[%s6 + $0x38] sm:$0xf]
          %v1154 = vld [vmem:[%s6 + $0x3c] sm:$0xf]
          %v1155 = vld [vmem:[%s7] sm:$0x1]
          %v1157 = vlaneseq
          %v1158 = vshrl.u32 %v1157, 7
          %v1159 = vsub.s32 0, %v1158
          %v1160 = vrot.slane %v1155, %v1159
          %v1178 = vunpack.c.l.b16 %v1139
          %v1179 = vunpack.c.l.b16 %v1140
          %v1180 = vunpack.c.l.b16 %v1141
          %v1181 = vunpack.c.l.b16 %v1142
          %v1182 = vunpack.c.l.b16 %v1143
          %v1183 = vunpack.c.l.b16 %v1144
          %v1184 = vunpack.c.l.b16 %v1145
          %v1185 = vunpack.c.l.b16 %v1146
          %v1186 = vunpack.c.l.b16 %v1147
          %v1187 = vunpack.c.l.b16 %v1148
          %v1188 = vunpack.c.l.b16 %v1149
          %v1189 = vunpack.c.l.b16 %v1150
          %v1190 = vunpack.c.l.b16 %v1151
          %v1191 = vunpack.c.l.b16 %v1152
          %v1192 = vunpack.c.l.b16 %v1153
          %v1193 = vunpack.c.l.b16 %v1154
          %v1194 = vpack.c.b16 %v1179, %v1178
          %v1195 = vpack.c.b16 %v1181, %v1180
          %v1196 = vpack.c.b16 %v1183, %v1182
          %v1197 = vpack.c.b16 %v1185, %v1184
          %v1198 = vpack.c.b16 %v1187, %v1186
          %v1199 = vpack.c.b16 %v1189, %v1188
          %v1200 = vpack.c.b16 %v1191, %v1190
          %v1201 = vpack.c.b16 %v1193, %v1192
          %1210 = vmatprep.subr.bf16.mxu0 0
          %1211 = vmatpush1.bf16.msra.mxu0 %v1194
          %1212 = vmatprep.subr.bf16.mxu0 0
          %1213 = vmatpush1.bf16.msra.mxu0 %v1195
          %1214 = vmatprep.subr.bf16.mxu0 0
          %1215 = vmatpush1.bf16.msra.mxu0 %v1196
          %1216 = vmatprep.subr.bf16.mxu0 0
          %1217 = vmatpush1.bf16.msra.mxu0 %v1197
          %1218 = vmatprep.subr.bf16.mxu0 0
          %1219 = vmatpush1.bf16.msra.mxu0 %v1198
          %1220 = vmatprep.subr.bf16.mxu0 0
          %1221 = vmatpush1.bf16.msra.mxu0 %v1199
          %1222 = vmatprep.subr.bf16.mxu0 0
          %1223 = vmatpush1.bf16.msra.mxu0 %v1200
          %1224 = vmatprep.subr.bf16.mxu0 0
          %1225 = vmatpush1.bf16.msra.mxu0 %v1201
          %1226 = vmatprep.subr.bf16.mxu0 0
          %1227 = vmatpush1.bf16.msra.mxu0 0
          %1228 = vmatprep.subr.bf16.mxu0 0
          %1229 = vmatpush1.bf16.msra.mxu0 0
          %1230 = vmatprep.subr.bf16.mxu0 0
          %1231 = vmatpush1.bf16.msra.mxu0 0
          %1232 = vmatprep.subr.bf16.mxu0 0
          %1233 = vmatpush1.bf16.msra.mxu0 0
          %1234 = vmatprep.subr.bf16.mxu0 0
          %1235 = vmatpush1.bf16.msra.mxu0 0
          %1236 = vmatprep.subr.bf16.mxu0 0
          %1237 = vmatpush1.bf16.msra.mxu0 0
          %1238 = vmatprep.subr.bf16.mxu0 0
          %1239 = vmatpush1.bf16.msra.mxu0 0
          %1240 = vmatprep.subr.bf16.mxu0 0
          %1241 = vmatpush1.bf16.msra.mxu0 0
          %1242 = vmatprep.mubr.bf16.mxu0 0
          %1243 = vmatmul.mubr.bf16.gmra.mrb[0].mxu0 %v841
          %v1244 = vpop.f32.mrb[0].mxu0
          %v1245 = vadd.f32 %v1160, %v1244
          %v1246 = vpop.f32.mrb[0].mxu0
          %v1247 = vpop.f32.mrb[0].mxu0
          %v1248 = vadd.f32 %v1160, %v1247
          %v1249 = vpop.f32.mrb[0].mxu0
          %1250 = vmatprep.mubr.bf16.mxu0 0
          %1251 = vmatmul.mubr.bf16.gmra.mrb[0].mxu0 %v842
          %v1252 = vpop.f32.mrb[0].mxu0
          %v1253 = vadd.f32 %v1160, %v1252
          %v1254 = vpop.f32.mrb[0].mxu0
          %v1255 = vpop.f32.mrb[0].mxu0
          %v1256 = vadd.f32 %v1160, %v1255
          %v1257 = vpop.f32.mrb[0].mxu0
          %1258 = vmatprep.mubr.bf16.mxu0 0
          %1259 = vmatmul.mubr.bf16.gmra.mrb[0].mxu0 %v843
          %v1260 = vpop.f32.mrb[0].mxu0
          %v1261 = vadd.f32 %v1160, %v1260
          %v1262 = vpop.f32.mrb[0].mxu0
          %v1263 = vpop.f32.mrb[0].mxu0
          %v1264 = vadd.f32 %v1160, %v1263
          %v1265 = vpop.f32.mrb[0].mxu0
          %1266 = vmatprep.mubr.bf16.mxu0 0
          %1267 = vmatmul.mubr.bf16.gmra.mrb[0].mxu0 %v844
          %v1268 = vpop.f32.mrb[0].mxu0
          %v1269 = vadd.f32 %v1160, %v1268
          %v1270 = vpop.f32.mrb[0].mxu0
          %v1271 = vpop.f32.mrb[0].mxu0
          %v1272 = vadd.f32 %v1160, %v1271
          %v1273 = vpop.f32.mrb[0].mxu0
          %1274 = vmatprep.mubr.bf16.mxu0 0
          %1275 = vmatmul.mubr.bf16.gmra.mrb[0].mxu0 %v845
          %v1276 = vpop.f32.mrb[0].mxu0
          %v1277 = vadd.f32 %v1160, %v1276
          %v1278 = vpop.f32.mrb[0].mxu0
          %v1279 = vpop.f32.mrb[0].mxu0
          %v1280 = vadd.f32 %v1160, %v1279
          %v1281 = vpop.f32.mrb[0].mxu0
          %1282 = vmatprep.mubr.bf16.mxu0 0
          %1283 = vmatmul.mubr.bf16.gmra.mrb[0].mxu0 %v846
          %v1284 = vpop.f32.mrb[0].mxu0
          %v1285 = vadd.f32 %v1160, %v1284
          %v1286 = vpop.f32.mrb[0].mxu0
          %v1287 = vpop.f32.mrb[0].mxu0
          %v1288 = vadd.f32 %v1160, %v1287
          %v1289 = vpop.f32.mrb[0].mxu0
          %1290 = vmatprep.mubr.bf16.mxu0 0
          %1291 = vmatmul.mubr.bf16.gmra.mrb[0].mxu0 %v847
          %v1292 = vpop.f32.mrb[0].mxu0
          %v1293 = vadd.f32 %v1160, %v1292
          %v1294 = vpop.f32.mrb[0].mxu0
          %v1295 = vpop.f32.mrb[0].mxu0
          %v1296 = vadd.f32 %v1160, %v1295
          %v1297 = vpop.f32.mrb[0].mxu0
          %1298 = vmatprep.mubr.bf16.mxu0 0
          %1299 = vmatmul.mubr.bf16.gmra.mrb[0].mxu0 %v848
          %v1300 = vpop.f32.mrb[0].mxu0
          %v1301 = vadd.f32 %v1160, %v1300
          %v1302 = vpop.f32.mrb[0].mxu0
          %v1303 = vpop.f32.mrb[0].mxu0
          %v1304 = vadd.f32 %v1160, %v1303
          %v1305 = vpop.f32.mrb[0].mxu0
          %1306 = vdwg.mxu0
          %v1307 = vadd.f32 %v1245, %v1123
          %v1308 = vadd.f32 %v1248, %v1124
          %v1309 = vadd.f32 %v1253, %v1125
          %v1310 = vadd.f32 %v1256, %v1126
          %v1311 = vadd.f32 %v1261, %v1127
          %v1312 = vadd.f32 %v1264, %v1128
          %v1313 = vadd.f32 %v1269, %v1129
          %v1314 = vadd.f32 %v1272, %v1130
          %v1315 = vadd.f32 %v1277, %v1131
          %v1316 = vadd.f32 %v1280, %v1132
          %v1317 = vadd.f32 %v1285, %v1133
          %v1318 = vadd.f32 %v1288, %v1134
          %v1319 = vadd.f32 %v1293, %v1135
          %v1320 = vadd.f32 %v1296, %v1136
          %v1321 = vadd.f32 %v1301, %v1137
          %v1322 = vadd.f32 %v1304, %v1138
          %v1323 = vpack.c.bf16 %v1308, %v1307
          %v1324 = vpack.c.bf16 %v1310, %v1309
          %v1325 = vpack.c.bf16 %v1312, %v1311
          %v1326 = vpack.c.bf16 %v1314, %v1313
          %v1327 = vpack.c.bf16 %v1316, %v1315
          %v1328 = vpack.c.bf16 %v1318, %v1317
          %v1329 = vpack.c.bf16 %v1320, %v1319
          %v1330 = vpack.c.bf16 %v1322, %v1321
          %v1339 = vunpack.c.l.b16 %v1323
          %v1340 = vunpack.c.h.b16 %v1323
          %v1341 = vunpack.c.l.b16 %v1324
          %v1342 = vunpack.c.h.b16 %v1324
          %v1343 = vunpack.c.l.b16 %v1325
          %v1344 = vunpack.c.h.b16 %v1325
          %v1345 = vunpack.c.l.b16 %v1326
          %v1346 = vunpack.c.h.b16 %v1326
          %v1347 = vunpack.c.l.b16 %v1327
          %v1348 = vunpack.c.h.b16 %v1327
          %v1349 = vunpack.c.l.b16 %v1328
          %v1350 = vunpack.c.h.b16 %v1328
          %v1351 = vunpack.c.l.b16 %v1329
          %v1352 = vunpack.c.h.b16 %v1329
          %v1353 = vunpack.c.l.b16 %v1330
          %v1354 = vunpack.c.h.b16 %v1330
          %v1355 = vpack.c.b16 %v1339, %v1339
          %v1356 = vpack.c.b16 %v1340, %v1340
          %v1357 = vpack.c.b16 %v1341, %v1341
          %v1358 = vpack.c.b16 %v1342, %v1342
          %v1359 = vpack.c.b16 %v1343, %v1343
          %v1360 = vpack.c.b16 %v1344, %v1344
          %v1361 = vpack.c.b16 %v1345, %v1345
          %v1362 = vpack.c.b16 %v1346, %v1346
          %v1363 = vpack.c.b16 %v1347, %v1347
          %v1364 = vpack.c.b16 %v1348, %v1348
          %v1365 = vpack.c.b16 %v1349, %v1349
          %v1366 = vpack.c.b16 %v1350, %v1350
          %v1367 = vpack.c.b16 %v1351, %v1351
          %v1368 = vpack.c.b16 %v1352, %v1352
          %v1369 = vpack.c.b16 %v1353, %v1353
          %v1370 = vpack.c.b16 %v1354, %v1354
          %1387 = vst [vmem:[%s469] sm:$0xf] %v1355
          %1388 = vst [vmem:[%s469 + $0x4] sm:$0xf] %v1356
          %1389 = vst [vmem:[%s469 + $0x8] sm:$0xf] %v1357
          %1390 = vst [vmem:[%s469 + $0xc] sm:$0xf] %v1358
          %1391 = vst [vmem:[%s469 + $0x10] sm:$0xf] %v1359
          %1392 = vst [vmem:[%s469 + $0x14] sm:$0xf] %v1360
          %1393 = vst [vmem:[%s469 + $0x18] sm:$0xf] %v1361
          %1394 = vst [vmem:[%s469 + $0x1c] sm:$0xf] %v1362
          %1395 = vst [vmem:[%s469 + $0x20] sm:$0xf] %v1363
          %1396 = vst [vmem:[%s469 + $0x24] sm:$0xf] %v1364
          %1397 = vst [vmem:[%s469 + $0x28] sm:$0xf] %v1365
          %1398 = vst [vmem:[%s469 + $0x2c] sm:$0xf] %v1366
          %1399 = vst [vmem:[%s469 + $0x30] sm:$0xf] %v1367
          %1400 = vst [vmem:[%s469 + $0x34] sm:$0xf] %v1368
          %1401 = vst [vmem:[%s469 + $0x38] sm:$0xf] %v1369
          %1402 = vst [vmem:[%s469 + $0x3c] sm:$0xf] %v1370
        $region101: #{graph_skip_forward.3} parent=88 // pred_fallthru
          _
        %s1403 = smul.u32 16, %s24
        %p1404 = scmp.lt.s32.totalorder %s1403, 47
        %s1405 = scalar_select %p1404, %s1403, 47
        %s1406 = smul.addr %s1405, 4
        %s1407 = scalar_lea.vmem %s8, %s1406
        // Predicated region
        $region102: #{graph_skip_forward.3} parent=88 // pred_check
          %p1408 = pneg %p235
        $region103: #{graph_skip_forward.3} parent=88 // pred_check_branch
          %1410 = sbr.rel (%p1408) target = $region105
        $region104: #{graph_skip_forward.3} parent=88 // pred_region
          %s1411 = smul.u32 16, %s24
        $region105: #{graph_skip_forward.3} parent=88 // pred_fallthru
          _
      $region89: #{graph_skip_forward.3} parent=5 // pred_fallthru
        _
      %p1412 = scmp.le.s32.totalorder 2, %s15
      // Predicated region
      $region106: #{graph_skip_forward.3} parent=5 // pred_check
        %p1413 = pneg %p1412
      $region107: #{graph_skip_forward.3} parent=5 // pred_check_branch
        %1415 = sbr.rel (%p1413) target = $region109
      $region108: #{graph_skip_forward.3} parent=5 // pred_region
        %s1416 = ssub.s32 %s15, 2
        // Predicated region
        $region110: #{graph_skip_forward.3} parent=108 // pred_check
          %p1417 = pneg %p241
        $region111: #{graph_skip_forward.3} parent=108 // pred_check_branch
          %1419 = sbr.rel (%p1417) target = $region113
        $region112: #{graph_skip_forward.3} parent=108 // pred_region
          %s1420 = smul.u32 16, %s26
          %p1421 = scmp.lt.s32.totalorder %s1420, 47
          %s1422 = scalar_select %p1421, %s1420, 47
          %s1423 = smul.addr %s1422, 4
          %s1424 = scalar_lea.vmem %s8, %s1423
        $region113: #{graph_skip_forward.3} parent=108 // pred_fallthru
          _
      $region109: #{graph_skip_forward.3} parent=5 // pred_fallthru
        _
    $region6: #{graph_skip_forward.3} parent=1 // loop_footer
      %s19 = sadd.s32 1, %s15
    $region7: #{graph_skip_forward.3} parent=1 // loop_footer_branch
      %14 = sbr.rel target = $region3
    $region8: #{graph_skip_forward.3} parent=1 // loop_exit
      _

// kernel: graph_skip_forward.5
$region0: #{graph_skip_forward.5}
  #allocation0 [shape = 'u32[]', space=smem, size = 0x4, offset = 0x4, fixed_abs, tag = 'smem constant byte address 0x4 - core index']
  #allocation1 [shape = 'u32[144,128]{1,0:T(1,128)}', space=vmem, size = 0x12000, scoped, tag = 'internal scratch']
  #allocation2 [shape = 'f32[128,128]{1,0:T(8,128)}', space=vmem, size = 0x10000, scoped, tag = 'scratch operand']
  #allocation3 [shape = 'f32[1,1]{1,0:T(1,128)S(6)}', space=smem, size = 0x200, scoped, tag = 'scoped memory for graph_skip_forward.5']
  %s0 = inlined_call_operand.vmem [shape: bf16[384,384], index: 0, kind: input, shape index: {}]
  %s1 = inlined_call_operand.vmem [shape: bf16[384,128], index: 1, kind: input, shape index: {}, may-alias: {1,2}]
  %s2 = inlined_call_operand.vmem [shape: bf16[384,128], index: 2, kind: input, shape index: {}, may-alias: {1,2}]
  %s3 = inlined_call_operand.vmem [shape: bf16[256,128], index: 3, kind: input, shape index: {}]
  %s4 = inlined_call_operand.vmem [shape: f32[1,128], index: 4, kind: input, shape index: {}]
  %s5 = inlined_call_operand.<no memory space> [shape: f32[1,1], index: 5, kind: input, shape index: {}]
  %s6 = inlined_call_operand.vmem [shape: f32[384,128], index: 6, kind: output, shape index: {}]
  %s7 = sld [smem:[#allocation0]]
  $region106: #{graph_skip_forward.5} parent=0
    _
  %s9 = ssub.s32 1, %s7
  %s10 = scalar_select 0, %s9, %s7
  %11 = sst [smem:[#allocation3]] %s5
  $region1: #{graph_skip_forward.5} parent=0
    #allocation4 [shape = 'u8[65536]{0}', space=vmem, size = 0x10000, scoped, tag = 'input window, operand 0']
    loop: start=0, step=1, limit=11
    $region2: #{graph_skip_forward.5} parent=1 // loop_pre_header
      _
    $region3: #{graph_skip_forward.5} parent=1 // loop_header
      %s13 = sphi 0, %s17
      %p14 = scmp.ge.s32.totalorder %s13, 11
      %s20 = sphi 0, %s32
      %s21 = sphi 0, %s28
      %s22 = sphi 0, %s20
      %s23 = sphi 0, %s21
      %s24 = sphi 0, %s22
      %s25 = sphi 0, %s23
      %s37 = sphi 0, %s39
      %s40 = sphi 0, %s37
      %s41 = sphi 0, %s40
      %s57 = sphi 0, %s41
      %s63 = sphi 0, %s65
      %s66 = sphi 0, %s63
      %s67 = sphi 0, %s66
      %s83 = sphi 0, %s67
      %s89 = sphi 0, %s91
      %s92 = sphi 0, %s89
      %s93 = sphi 0, %s92
      %s109 = sphi 0, %s93
      %s113 = sphi 0, %s113
      %s115 = sphi 0, %s113
      %s116 = sphi 0, %s115
      %s130 = sphi 0, %s116
      %s134 = sphi 0, %s134
      %s136 = sphi 0, %s134
      %s137 = sphi 0, %s136
      %s151 = sphi 0, %s137
      %s155 = sphi 0, %s155
      %s157 = sphi 0, %s155
      %s158 = sphi 0, %s157
      %s172 = sphi 0, %s158
      %s178 = sphi 0, %s180
      %s181 = sphi 0, %s178
      %s182 = sphi 0, %s181
      %s198 = sphi 0, %s182
    $region4: #{graph_skip_forward.5} parent=1 // loop_header_branch
      %16 = sbr.rel (%p14) target = $region8
    $region5: #{graph_skip_forward.5} parent=1 // loop_body
      %s18 = ssub.s32 %s13, 1
      %s19 = ssub.s32 %s13, 2
      %s26 = sadd.s32 1, %s21
      %p27 = scmp.ge.s32.totalorder %s26, 3
      %s28 = scalar_select %p27, 0, %s26
      %s29 = sadd.s32 1, %s20
      %s30 = scalar_select %p27, %s29, %s20
      %p31 = scmp.ge.s32.totalorder %s30, 3
      %s32 = scalar_select %p31, 0, %s30
      %s33 = ssub.s32 %s20, %s32
      %s34 = ssub.s32 %s21, %s28
      %s35 = sor.u32 %s33, %s34
      %p36 = scmp.eq.s32.totalorder %s35, 0
      %s38 = sadd.s32 %s37, 1
      %s39 = scalar_select %p36, %s37, %s38
      %p42 = pneg %p36
      %p43 = scmp.eq.s32.totalorder %s13, 8
      %p44 = por %p42, %p43
      %p45 = scmp.ne.s32.totalorder %s37, %s40
      %p46 = scmp.eq.s32.totalorder %s13, 0
      %p47 = por %p45, %p46
      %p48 = scmp.ne.s32.totalorder %s37, %s40
      %p49 = scmp.eq.s32.totalorder %s18, 8
      %p50 = por %p48, %p49
      %p51 = scmp.ne.s32.totalorder %s40, %s41
      %p52 = scmp.eq.s32.totalorder %s18, 0
      %p53 = por %p51, %p52
      %p54 = scmp.ne.s32.totalorder %s40, %s41
      %p55 = scmp.eq.s32.totalorder %s19, 8
      %p56 = por %p54, %p55
      %p58 = scmp.ne.s32.totalorder %s41, %s57
      %p59 = scmp.eq.s32.totalorder %s19, 0
      %p60 = por %p58, %p59
      %s61 = ssub.s32 %s21, %s28
      %p62 = scmp.eq.s32.totalorder %s61, 0
      %s64 = sadd.s32 %s63, 1
      %s65 = scalar_select %p62, %s63, %s64
      %p68 = pneg %p62
      %p69 = scmp.eq.s32.totalorder %s13, 8
      %p70 = por %p68, %p69
      %p71 = scmp.ne.s32.totalorder %s63, %s66
      %p72 = scmp.eq.s32.totalorder %s13, 0
      %p73 = por %p71, %p72
      %p74 = scmp.ne.s32.totalorder %s63, %s66
      %p75 = scmp.eq.s32.totalorder %s18, 8
      %p76 = por %p74, %p75
      %p77 = scmp.ne.s32.totalorder %s66, %s67
      %p78 = scmp.eq.s32.totalorder %s18, 0
      %p79 = por %p77, %p78
      %p80 = scmp.ne.s32.totalorder %s66, %s67
      %p81 = scmp.eq.s32.totalorder %s19, 8
      %p82 = por %p80, %p81
      %p84 = scmp.ne.s32.totalorder %s67, %s83
      %p85 = scmp.eq.s32.totalorder %s19, 0
      %p86 = por %p84, %p85
      %s87 = ssub.s32 %s20, %s32
      %p88 = scmp.eq.s32.totalorder %s87, 0
      %s90 = sadd.s32 %s89, 1
      %s91 = scalar_select %p88, %s89, %s90
      %p94 = pneg %p88
      %p95 = scmp.eq.s32.totalorder %s13, 8
      %p96 = por %p94, %p95
      %p97 = scmp.ne.s32.totalorder %s89, %s92
      %p98 = scmp.eq.s32.totalorder %s13, 0
      %p99 = por %p97, %p98
      %p100 = scmp.ne.s32.totalorder %s89, %s92
      %p101 = scmp.eq.s32.totalorder %s18, 8
      %p102 = por %p100, %p101
      %p103 = scmp.ne.s32.totalorder %s92, %s93
      %p104 = scmp.eq.s32.totalorder %s18, 0
      %p105 = por %p103, %p104
      %p106 = scmp.ne.s32.totalorder %s92, %s93
      %p107 = scmp.eq.s32.totalorder %s19, 8
      %p108 = por %p106, %p107
      %p110 = scmp.ne.s32.totalorder %s93, %s109
      %p111 = scmp.eq.s32.totalorder %s19, 0
      %p112 = por %p110, %p111
      %s114 = sadd.s32 %s113, 1
      %p117 = scmp.eq.s32.totalorder %s13, 8
      %p118 = scmp.ne.s32.totalorder %s113, %s115
      %p119 = scmp.eq.s32.totalorder %s13, 0
      %p120 = por %p118, %p119
      %p121 = scmp.ne.s32.totalorder %s113, %s115
      %p122 = scmp.eq.s32.totalorder %s18, 8
      %p123 = por %p121, %p122
      %p124 = scmp.ne.s32.totalorder %s115, %s116
      %p125 = scmp.eq.s32.totalorder %s18, 0
      %p126 = por %p124, %p125
      %p127 = scmp.ne.s32.totalorder %s115, %s116
      %p128 = scmp.eq.s32.totalorder %s19, 8
      %p129 = por %p127, %p128
      %p131 = scmp.ne.s32.totalorder %s116, %s130
      %p132 = scmp.eq.s32.totalorder %s19, 0
      %p133 = por %p131, %p132
      %s135 = sadd.s32 %s134, 1
      %p138 = scmp.eq.s32.totalorder %s13, 8
      %p139 = scmp.ne.s32.totalorder %s134, %s136
      %p140 = scmp.eq.s32.totalorder %s13, 0
      %p141 = por %p139, %p140
      %p142 = scmp.ne.s32.totalorder %s134, %s136
      %p143 = scmp.eq.s32.totalorder %s18, 8
      %p144 = por %p142, %p143
      %p145 = scmp.ne.s32.totalorder %s136, %s137
      %p146 = scmp.eq.s32.totalorder %s18, 0
      %p147 = por %p145, %p146
      %p148 = scmp.ne.s32.totalorder %s136, %s137
      %p149 = scmp.eq.s32.totalorder %s19, 8
      %p150 = por %p148, %p149
      %p152 = scmp.ne.s32.totalorder %s137, %s151
      %p153 = scmp.eq.s32.totalorder %s19, 0
      %p154 = por %p152, %p153
      %s156 = sadd.s32 %s155, 1
      %p159 = scmp.eq.s32.totalorder %s13, 8
      %p160 = scmp.ne.s32.totalorder %s155, %s157
      %p161 = scmp.eq.s32.totalorder %s13, 0
      %p162 = por %p160, %p161
      %p163 = scmp.ne.s32.totalorder %s155, %s157
      %p164 = scmp.eq.s32.totalorder %s18, 8
      %p165 = por %p163, %p164
      %p166 = scmp.ne.s32.totalorder %s157, %s158
      %p167 = scmp.eq.s32.totalorder %s18, 0
      %p168 = por %p166, %p167
      %p169 = scmp.ne.s32.totalorder %s157, %s158
      %p170 = scmp.eq.s32.totalorder %s19, 8
      %p171 = por %p169, %p170
      %p173 = scmp.ne.s32.totalorder %s158, %s172
      %p174 = scmp.eq.s32.totalorder %s19, 0
      %p175 = por %p173, %p174
      %s176 = ssub.s32 %s20, %s32
      %p177 = scmp.eq.s32.totalorder %s176, 0
      %s179 = sadd.s32 %s178, 1
      %s180 = scalar_select %p177, %s178, %s179
      %p183 = pneg %p177
      %p184 = scmp.eq.s32.totalorder %s13, 8
      %p185 = por %p183, %p184
      %p186 = scmp.ne.s32.totalorder %s178, %s181
      %p187 = scmp.eq.s32.totalorder %s13, 0
      %p188 = por %p186, %p187
      %p189 = scmp.ne.s32.totalorder %s178, %s181
      %p190 = scmp.eq.s32.totalorder %s18, 8
      %p191 = por %p189, %p190
      %p192 = scmp.ne.s32.totalorder %s181, %s182
      %p193 = scmp.eq.s32.totalorder %s18, 0
      %p194 = por %p192, %p193
      %p195 = scmp.ne.s32.totalorder %s181, %s182
      %p196 = scmp.eq.s32.totalorder %s19, 8
      %p197 = por %p195, %p196
      %p199 = scmp.ne.s32.totalorder %s182, %s198
      %p200 = scmp.eq.s32.totalorder %s19, 0
      %p201 = por %p199, %p200
      %p202 = scmp.le.s32.totalorder 1, %s13
      %p203 = scmp.lt.s32.totalorder %s13, 10
      %p204 = pnand %p202, %p203
      %p205 = pneg %p204
      // Predicated region
      $region9: #{graph_skip_forward.5} parent=5 // pred_check
        _
      $region10: #{graph_skip_forward.5} parent=5 // pred_check_branch
        %207 = sbr.rel (%p204) target = $region12
      $region11: #{graph_skip_forward.5} parent=5 // pred_region
        %s208 = ssub.s32 %s13, 1
        // Predicated region
        $region13: #{graph_skip_forward.5} parent=11 // pred_check
          %p209 = pneg %p126
        $region14: #{graph_skip_forward.5} parent=11 // pred_check_branch
          %211 = sbr.rel (%p209) target = $region16
        $region15: #{graph_skip_forward.5} parent=11 // pred_region
          _
        $region16: #{graph_skip_forward.5} parent=11 // pred_fallthru
          _
        // Predicated region
        $region17: #{graph_skip_forward.5} parent=11 // pred_check
          %p212 = pneg %p147
        $region18: #{graph_skip_forward.5} parent=11 // pred_check_branch
          %214 = sbr.rel (%p212) target = $region20
        $region19: #{graph_skip_forward.5} parent=11 // pred_region
          _
        $region20: #{graph_skip_forward.5} parent=11 // pred_fallthru
          _
        // Predicated region
        $region21: #{graph_skip_forward.5} parent=11 // pred_check
          %p215 = pneg %p168
        $region22: #{graph_skip_forward.5} parent=11 // pred_check_branch
          %217 = sbr.rel (%p215) target = $region24
        $region23: #{graph_skip_forward.5} parent=11 // pred_region
          _
        $region24: #{graph_skip_forward.5} parent=11 // pred_fallthru
          _
      $region12: #{graph_skip_forward.5} parent=5 // pred_fallthru
        _
      %p218 = scmp.lt.s32.totalorder %s13, 9
      // Predicated region
      $region25: #{graph_skip_forward.5} parent=5 // pred_check
        %p219 = pneg %p218
      $region26: #{graph_skip_forward.5} parent=5 // pred_check_branch
        %221 = sbr.rel (%p219) target = $region28
      $region27: #{graph_skip_forward.5} parent=5 // pred_region
        // Predicated region
        $region29: #{graph_skip_forward.5} parent=27 // pred_check
          %p222 = pneg %p47
        $region30: #{graph_skip_forward.5} parent=27 // pred_check_branch
          %224 = sbr.rel (%p222) target = $region32
        $region31: #{graph_skip_forward.5} parent=27 // pred_region
          %s225 = sand.u32 %s37, 1
          %s226 = sand.u32 %s37, 1
          %s227 = smul.addr %s226, 64
          %s228 = scalar_lea.vmem [#allocation4], %s227
          %s229 = smul.u32 16, %s20
          %s230 = smul.addr %s229, 3
          %s231 = sadd.s32 %s21, %s230
          %s232 = smul.addr %s231, 4
          %s233 = scalar_lea.vmem %s0, %s232
          // Predicated region
          $region33: #{graph_skip_forward.5} parent=31 // pred_check
            _
          $region34: #{graph_skip_forward.5} parent=31 // pred_check_branch
            %235 = sbr.rel (0) target = $region36
          $region35: #{graph_skip_forward.5} parent=31 // pred_region
            // Predicated region
            $region37: #{graph_skip_forward.5} parent=35 // pred_check
              _
            $region38: #{graph_skip_forward.5} parent=35 // pred_check_branch
              %237 = sbr.rel target = $region40
            $region39: #{graph_skip_forward.5} parent=35 // pred_region
              // Predicated region
              $region52: #{graph_skip_forward.5} parent=39 // pred_check
                _
              $region53: #{graph_skip_forward.5} parent=39 // pred_check_branch
                %282 = sbr.rel (0) target = $region55
              $region54: #{graph_skip_forward.5} parent=39 // pred_region
                loop: start=0, step=1, limit=1
                $region56: #{graph_skip_forward.5} parent=54 // loop_pre_header
                  _
                $region57: #{graph_skip_forward.5} parent=54 // loop_header
                  %s284 = sphi 0, %s288
                  %p285 = scmp.ge.s32.totalorder %s284, 1
                  %s289 = sphi %s233, %s233
                  %s290 = sphi %s228, %s228
                $region58: #{graph_skip_forward.5} parent=54 // loop_header_branch
                  %287 = sbr.rel (%p285) target = $region62
                $region59: #{graph_skip_forward.5} parent=54 // loop_body
                  _
                $region60: #{graph_skip_forward.5} parent=54 // loop_footer
                  %s288 = sadd.s32 1, %s284
                $region61: #{graph_skip_forward.5} parent=54 // loop_footer_branch
                  %283 = sbr.rel target = $region57
                $region62: #{graph_skip_forward.5} parent=54 // loop_exit
                  _
                loop: start=0, step=1, limit=1
                $region63: #{graph_skip_forward.5} parent=54 // loop_pre_header
                  _
                $region64: #{graph_skip_forward.5} parent=54 // loop_header
                  %s293 = sphi 0, %s297
                  %p294 = scmp.ge.s32.totalorder %s293, 1
                  %s298 = sphi %s233, %s233
                  %s299 = sphi %s228, %s228
                $region65: #{graph_skip_forward.5} parent=54 // loop_header_branch
                  %296 = sbr.rel (%p294) target = $region69
                $region66: #{graph_skip_forward.5} parent=54 // loop_body
                  %v300 = vld [vmem:[%s298] sm:$0xf]
                  %301 = vst [vmem:[%s299] sm:$0xf] %v300
                  %v302 = vld [vmem:[%s298 + $0xc] sm:$0xf]
                  %303 = vst [vmem:[%s299 + $0x4] sm:$0xf] %v302
                  %v304 = vld [vmem:[%s298 + $0x18] sm:$0xf]
                  %305 = vst [vmem:[%s299 + $0x8] sm:$0xf] %v304
                  %v306 = vld [vmem:[%s298 + $0x24] sm:$0xf]
                  %307 = vst [vmem:[%s299 + $0xc] sm:$0xf] %v306
                  %v308 = vld [vmem:[%s298 + $0x30] sm:$0xf]
                  %309 = vst [vmem:[%s299 + $0x10] sm:$0xf] %v308
                  %v310 = vld [vmem:[%s298 + $0x3c] sm:$0xf]
                  %311 = vst [vmem:[%s299 + $0x14] sm:$0xf] %v310
                  %v312 = vld [vmem:[%s298 + $0x48] sm:$0xf]
                  %313 = vst [vmem:[%s299 + $0x18] sm:$0xf] %v312
                  %v314 = vld [vmem:[%s298 + $0x54] sm:$0xf]
                  %315 = vst [vmem:[%s299 + $0x1c] sm:$0xf] %v314
                  %v316 = vld [vmem:[%s298 + $0x60] sm:$0xf]
                  %317 = vst [vmem:[%s299 + $0x20] sm:$0xf] %v316
                  %v318 = vld [vmem:[%s298 + $0x6c] sm:$0xf]
                  %319 = vst [vmem:[%s299 + $0x24] sm:$0xf] %v318
                  %v320 = vld [vmem:[%s298 + $0x78] sm:$0xf]
                  %321 = vst [vmem:[%s299 + $0x28] sm:$0xf] %v320
                  %v322 = vld [vmem:[%s298 + $0x84] sm:$0xf]
                  %323 = vst [vmem:[%s299 + $0x2c] sm:$0xf] %v322
                  %v324 = vld [vmem:[%s298 + $0x90] sm:$0xf]
                  %325 = vst [vmem:[%s299 + $0x30] sm:$0xf] %v324
                  %v326 = vld [vmem:[%s298 + $0x9c] sm:$0xf]
                  %327 = vst [vmem:[%s299 + $0x34] sm:$0xf] %v326
                  %v328 = vld [vmem:[%s298 + $0xa8] sm:$0xf]
                  %329 = vst [vmem:[%s299 + $0x38] sm:$0xf] %v328
                  %v330 = vld [vmem:[%s298 + $0xb4] sm:$0xf]
                  %331 = vst [vmem:[%s299 + $0x3c] sm:$0xf] %v330
                $region67: #{graph_skip_forward.5} parent=54 // loop_footer
                  %s297 = sadd.s32 1, %s293
                $region68: #{graph_skip_forward.5} parent=54 // loop_footer_branch
                  %292 = sbr.rel target = $region64
                $region69: #{graph_skip_forward.5} parent=54 // loop_exit
                  _
              $region55: #{graph_skip_forward.5} parent=39 // pred_fallthru
                _
            $region40: #{graph_skip_forward.5} parent=35 // pred_fallthru
              _
            // Predicated region
            $region41: #{graph_skip_forward.5} parent=35 // pred_check
              _
            $region42: #{graph_skip_forward.5} parent=35 // pred_check_branch
              %239 = sbr.rel (0) target = $region44
            $region43: #{graph_skip_forward.5} parent=35 // pred_region
              loop: start=0, step=1, limit=1
              $region45: #{graph_skip_forward.5} parent=43 // loop_pre_header
                _
              $region46: #{graph_skip_forward.5} parent=43 // loop_header
                %s242 = sphi 0, %s246
                %p243 = scmp.ge.s32.totalorder %s242, 1
                %s247 = sphi %s233, %s233
                %s248 = sphi %s228, %s228
              $region47: #{graph_skip_forward.5} parent=43 // loop_header_branch
                %245 = sbr.rel (%p243) target = $region51
              $region48: #{graph_skip_forward.5} parent=43 // loop_body
                %v249 = vld [vmem:[%s247] sm:$0xf]
                %250 = vst [vmem:[%s248] sm:$0xf] %v249
                %v251 = vld [vmem:[%s247 + $0xc] sm:$0xf]
                %252 = vst [vmem:[%s248 + $0x4] sm:$0xf] %v251
                %v253 = vld [vmem:[%s247 + $0x18] sm:$0xf]
                %254 = vst [vmem:[%s248 + $0x8] sm:$0xf] %v253
                %v255 = vld [vmem:[%s247 + $0x24] sm:$0xf]
                %256 = vst [vmem:[%s248 + $0xc] sm:$0xf] %v255
                %v257 = vld [vmem:[%s247 + $0x30] sm:$0xf]
                %258 = vst [vmem:[%s248 + $0x10] sm:$0xf] %v257
                %v259 = vld [vmem:[%s247 + $0x3c] sm:$0xf]
                %260 = vst [vmem:[%s248 + $0x14] sm:$0xf] %v259
                %v261 = vld [vmem:[%s247 + $0x48] sm:$0xf]
                %262 = vst [vmem:[%s248 + $0x18] sm:$0xf] %v261
                %v263 = vld [vmem:[%s247 + $0x54] sm:$0xf]
                %264 = vst [vmem:[%s248 + $0x1c] sm:$0xf] %v263
                %v265 = vld [vmem:[%s247 + $0x60] sm:$0xf]
                %266 = vst [vmem:[%s248 + $0x20] sm:$0xf] %v265
                %v267 = vld [vmem:[%s247 + $0x6c] sm:$0xf]
                %268 = vst [vmem:[%s248 + $0x24] sm:$0xf] %v267
                %v269 = vld [vmem:[%s247 + $0x78] sm:$0xf]
                %270 = vst [vmem:[%s248 + $0x28] sm:$0xf] %v269
                %v271 = vld [vmem:[%s247 + $0x84] sm:$0xf]
                %272 = vst [vmem:[%s248 + $0x2c] sm:$0xf] %v271
                %v273 = vld [vmem:[%s247 + $0x90] sm:$0xf]
                %274 = vst [vmem:[%s248 + $0x30] sm:$0xf] %v273
                %v275 = vld [vmem:[%s247 + $0x9c] sm:$0xf]
                %276 = vst [vmem:[%s248 + $0x34] sm:$0xf] %v275
                %v277 = vld [vmem:[%s247 + $0xa8] sm:$0xf]
                %278 = vst [vmem:[%s248 + $0x38] sm:$0xf] %v277
                %v279 = vld [vmem:[%s247 + $0xb4] sm:$0xf]
                %280 = vst [vmem:[%s248 + $0x3c] sm:$0xf] %v279
              $region49: #{graph_skip_forward.5} parent=43 // loop_footer
                %s246 = sadd.s32 1, %s242
              $region50: #{graph_skip_forward.5} parent=43 // loop_footer_branch
                %241 = sbr.rel target = $region46
              $region51: #{graph_skip_forward.5} parent=43 // loop_exit
                _
            $region44: #{graph_skip_forward.5} parent=35 // pred_fallthru
              _
          $region36: #{graph_skip_forward.5} parent=31 // pred_fallthru
            _
          %332 = vnop
        $region32: #{graph_skip_forward.5} parent=27 // pred_fallthru
          _
        // Predicated region
        $region70: #{graph_skip_forward.5} parent=27 // pred_check
          %p333 = pneg %p73
        $region71: #{graph_skip_forward.5} parent=27 // pred_check_branch
          %335 = sbr.rel (%p333) target = $region73
        $region72: #{graph_skip_forward.5} parent=27 // pred_region
          %s336 = smul.u32 16, %s21
          %p337 = scmp.lt.s32.totalorder %s336, 47
          %s338 = scalar_select %p337, %s336, 47
          %s339 = smul.addr %s338, 4
          %s340 = scalar_lea.vmem %s1, %s339
          %s341 = smul.u32 16, %s21
        $region73: #{graph_skip_forward.5} parent=27 // pred_fallthru
          _
        // Predicated region
        $region74: #{graph_skip_forward.5} parent=27 // pred_check
          %p342 = pneg %p99
        $region75: #{graph_skip_forward.5} parent=27 // pred_check_branch
          %344 = sbr.rel (%p342) target = $region77
        $region76: #{graph_skip_forward.5} parent=27 // pred_region
          %s345 = smul.u32 16, %s20
          %p346 = scmp.lt.s32.totalorder %s345, 47
          %s347 = scalar_select %p346, %s345, 47
          %s348 = smul.addr %s347, 4
          %s349 = scalar_lea.vmem %s2, %s348
          %s350 = smul.u32 16, %s20
        $region77: #{graph_skip_forward.5} parent=27 // pred_fallthru
          _
      $region28: #{graph_skip_forward.5} parent=5 // pred_fallthru
        _
      %p351 = scmp.le.s32.totalorder 1, %s13
      %p352 = scmp.lt.s32.totalorder %s13, 10
      %p353 = pnand %p351, %p352
      %p354 = pneg %p353
      // Predicated region
      $region78: #{graph_skip_forward.5} parent=5 // pred_check
        _
      $region79: #{graph_skip_forward.5} parent=5 // pred_check_branch
        %356 = sbr.rel (%p353) target = $region81
      $region80: #{graph_skip_forward.5} parent=5 // pred_region
        %s357 = ssub.s32 %s13, 1
        %s358 = sand.u32 %s40, 1
        %s359 = sand.u32 %s40, 1
        %s360 = smul.addr %s359, 64
        %s361 = scalar_lea.vmem [#allocation4], %s360
        // Predicated region
        $region82: #{graph_skip_forward.5} parent=80 // pred_check
          %p362 = pneg %p53
        $region83: #{graph_skip_forward.5} parent=80 // pred_check_branch
          %364 = sbr.rel (%p362) target = $region85
        $region84: #{graph_skip_forward.5} parent=80 // pred_region
          _
        $region85: #{graph_skip_forward.5} parent=80 // pred_fallthru
          _
        %s365 = sand.u32 %s40, 1
        %s366 = sand.u32 %s40, 1
        %s367 = smul.addr %s366, 64
        %s368 = scalar_lea.vmem [#allocation4], %s367
        %p369 = pneg %p53
        %p370 = pneg %p50
        %s371 = smul.u32 16, %s23
        %p372 = scmp.lt.s32.totalorder %s371, 47
        %s373 = scalar_select %p372, %s371, 47
        %s374 = smul.addr %s373, 4
        %s375 = scalar_lea.vmem %s1, %s374
        %p376 = pneg %p79
        %p377 = pneg %p76
        %s378 = smul.u32 16, %s22
        %p379 = scmp.lt.s32.totalorder %s378, 47
        %s380 = scalar_select %p379, %s378, 47
        %s381 = smul.addr %s380, 4
        %s382 = scalar_lea.vmem %s2, %s381
        %p383 = pneg %p105
        %p384 = pneg %p102
        %p385 = pneg %p126
        %p386 = pneg %p123
        %p387 = pneg %p147
        %p388 = pneg %p144
        %p389 = pneg %p168
        %p390 = pneg %p165
        %p391 = pneg %p194
        %p392 = pneg %p191
        %s393 = smul.u32 16, %s22
        %p394 = scmp.lt.s32.totalorder %s393, 47
        %s395 = scalar_select %p394, %s393, 47
        %s396 = smul.addr %s395, 8
        %s397 = scalar_lea.vmem %s6, %s396
        %s398 = smul.u32 16, %s22
        %s399 = smul.u32 16, %s23
        %p400 = scmp.lt.s32.totalorder %s399, 47
        %s401 = scalar_select %p400, %s399, 47
        %s402 = smul.addr %s401, 4
        %s403 = scalar_lea.vmem %s1, %s402
        %s404 = smul.u32 16, %s23
        %s405 = smul.u32 16, %s22
        %p406 = scmp.lt.s32.totalorder %s405, 47
        %s407 = scalar_select %p406, %s405, 47
        %s408 = smul.addr %s407, 4
        %s409 = scalar_lea.vmem %s2, %s408
        %s410 = smul.u32 16, %s22
        %s411 = smul.u32 16, %s22
        %p412 = scmp.lt.s32.totalorder %s411, 47
        %s413 = scalar_select %p412, %s411, 47
        %s414 = smul.addr %s413, 8
        %s415 = scalar_lea.vmem %s6, %s414
        %s416 = smul.u32 16, %s22
        %p418 = scmp.eq.s32.totalorder %s23, 0
        // Predicated region
        $region86: #{graph_skip_forward.5} parent=80 // pred_check
          %p419 = pneg %p418
        $region87: #{graph_skip_forward.5} parent=80 // pred_check_branch
          %421 = sbr.rel (%p419) target = $region89
        $region88: #{graph_skip_forward.5} parent=80 // pred_region
          %422 = vst [vmem:[#allocation2] sm:$0xff] 0.0
          %423 = vst [vmem:[#allocation2 + $0x8] sm:$0xff] 0.0
          %424 = vst [vmem:[#allocation2 + $0x10] sm:$0xff] 0.0
          %425 = vst [vmem:[#allocation2 + $0x18] sm:$0xff] 0.0
          %426 = vst [vmem:[#allocation2 + $0x20] sm:$0xff] 0.0
          %427 = vst [vmem:[#allocation2 + $0x28] sm:$0xff] 0.0
          %428 = vst [vmem:[#allocation2 + $0x30] sm:$0xff] 0.0
          %429 = vst [vmem:[#allocation2 + $0x38] sm:$0xff] 0.0
          %430 = vst [vmem:[#allocation2 + $0x40] sm:$0xff] 0.0
          %431 = vst [vmem:[#allocation2 + $0x48] sm:$0xff] 0.0
          %432 = vst [vmem:[#allocation2 + $0x50] sm:$0xff] 0.0
          %433 = vst [vmem:[#allocation2 + $0x58] sm:$0xff] 0.0
          %434 = vst [vmem:[#allocation2 + $0x60] sm:$0xff] 0.0
          %435 = vst [vmem:[#allocation2 + $0x68] sm:$0xff] 0.0
          %436 = vst [vmem:[#allocation2 + $0x70] sm:$0xff] 0.0
          %437 = vst [vmem:[#allocation2 + $0x78] sm:$0xff] 0.0
        $region89: #{graph_skip_forward.5} parent=80 // pred_fallthru
          _
        %v438 = vld [vmem:[#allocation2] sm:$0xff]
        %v439 = vld [vmem:[#allocation2 + $0x8] sm:$0xff]
        %v440 = vld [vmem:[#allocation2 + $0x10] sm:$0xff]
        %v441 = vld [vmem:[#allocation2 + $0x18] sm:$0xff]
        %v442 = vld [vmem:[#allocation2 + $0x20] sm:$0xff]
        %v443 = vld [vmem:[#allocation2 + $0x28] sm:$0xff]
        %v444 = vld [vmem:[#allocation2 + $0x30] sm:$0xff]
        %v445 = vld [vmem:[#allocation2 + $0x38] sm:$0xff]
        %v446 = vld [vmem:[#allocation2 + $0x40] sm:$0xff]
        %v447 = vld [vmem:[#allocation2 + $0x48] sm:$0xff]
        %v448 = vld [vmem:[#allocation2 + $0x50] sm:$0xff]
        %v449 = vld [vmem:[#allocation2 + $0x58] sm:$0xff]
        %v450 = vld [vmem:[#allocation2 + $0x60] sm:$0xff]
        %v451 = vld [vmem:[#allocation2 + $0x68] sm:$0xff]
        %v452 = vld [vmem:[#allocation2 + $0x70] sm:$0xff]
        %v453 = vld [vmem:[#allocation2 + $0x78] sm:$0xff]
        %v454 = vld [vmem:[%s361] sm:$0xf]
        %v455 = vld [vmem:[%s361 + $0x4] sm:$0xf]
        %v456 = vld [vmem:[%s361 + $0x8] sm:$0xf]
        %v457 = vld [vmem:[%s361 + $0xc] sm:$0xf]
        %v458 = vld [vmem:[%s361 + $0x10] sm:$0xf]
        %v459 = vld [vmem:[%s361 + $0x14] sm:$0xf]
        %v460 = vld [vmem:[%s361 + $0x18] sm:$0xf]
        %v461 = vld [vmem:[%s361 + $0x1c] sm:$0xf]
        %v462 = vld [vmem:[%s361 + $0x20] sm:$0xf]
        %v463 = vld [vmem:[%s361 + $0x24] sm:$0xf]
        %v464 = vld [vmem:[%s361 + $0x28] sm:$0xf]
        %v465 = vld [vmem:[%s361 + $0x2c] sm:$0xf]
        %v466 = vld [vmem:[%s361 + $0x30] sm:$0xf]
        %v467 = vld [vmem:[%s361 + $0x34] sm:$0xf]
        %v468 = vld [vmem:[%s361 + $0x38] sm:$0xf]
        %v469 = vld [vmem:[%s361 + $0x3c] sm:$0xf]
        %v470 = vld [vmem:[%s403] sm:$0xf]
        %v471 = vld [vmem:[%s403 + $0x4] sm:$0xf]
        %v472 = vld [vmem:[%s403 + $0x8] sm:$0xf]
        %v473 = vld [vmem:[%s403 + $0xc] sm:$0xf]
        %v474 = vld [vmem:[%s403 + $0x10] sm:$0xf]
        %v475 = vld [vmem:[%s403 + $0x14] sm:$0xf]
        %v476 = vld [vmem:[%s403 + $0x18] sm:$0xf]
        %v477 = vld [vmem:[%s403 + $0x1c] sm:$0xf]
        %v478 = vld [vmem:[%s403 + $0x20] sm:$0xf]
        %v479 = vld [vmem:[%s403 + $0x24] sm:$0xf]
        %v480 = vld [vmem:[%s403 + $0x28] sm:$0xf]
        %v481 = vld [vmem:[%s403 + $0x2c] sm:$0xf]
        %v482 = vld [vmem:[%s403 + $0x30] sm:$0xf]
        %v483 = vld [vmem:[%s403 + $0x34] sm:$0xf]
        %v484 = vld [vmem:[%s403 + $0x38] sm:$0xf]
        %v485 = vld [vmem:[%s403 + $0x3c] sm:$0xf]
        %v502 = vunpack.c.l.b16 %v454
        %v503 = vunpack.c.l.b16 %v455
        %v504 = vunpack.c.l.b16 %v456
        %v505 = vunpack.c.l.b16 %v457
        %v506 = vunpack.c.l.b16 %v458
        %v507 = vunpack.c.l.b16 %v459
        %v508 = vunpack.c.l.b16 %v460
        %v509 = vunpack.c.l.b16 %v461
        %v510 = vunpack.c.l.b16 %v462
        %v511 = vunpack.c.l.b16 %v463
        %v512 = vunpack.c.l.b16 %v464
        %v513 = vunpack.c.l.b16 %v465
        %v514 = vunpack.c.l.b16 %v466
        %v515 = vunpack.c.l.b16 %v467
        %v516 = vunpack.c.l.b16 %v468
        %v517 = vunpack.c.l.b16 %v469
        %v518 = vpack.c.b16 %v503, %v502
        %v519 = vpack.c.b16 %v505, %v504
        %v520 = vpack.c.b16 %v507, %v506
        %v521 = vpack.c.b16 %v509, %v508
        %v522 = vpack.c.b16 %v511, %v510
        %v523 = vpack.c.b16 %v513, %v512
        %v524 = vpack.c.b16 %v515, %v514
        %v525 = vpack.c.b16 %v517, %v516
        %v550 = vunpack.c.l.b16 %v470
        %v551 = vunpack.c.l.b16 %v471
        %v552 = vunpack.c.l.b16 %v472
        %v553 = vunpack.c.l.b16 %v473
        %v554 = vunpack.c.l.b16 %v474
        %v555 = vunpack.c.l.b16 %v475
        %v556 = vunpack.c.l.b16 %v476
        %v557 = vunpack.c.l.b16 %v477
        %v558 = vunpack.c.l.b16 %v478
        %v559 = vunpack.c.l.b16 %v479
        %v560 = vunpack.c.l.b16 %v480
        %v561 = vunpack.c.l.b16 %v481
        %v562 = vunpack.c.l.b16 %v482
        %v563 = vunpack.c.l.b16 %v483
        %v564 = vunpack.c.l.b16 %v484
        %v565 = vunpack.c.l.b16 %v485
        %v566 = vpack.c.b16 %v551, %v550
        %v567 = vpack.c.b16 %v553, %v552
        %v568 = vpack.c.b16 %v555, %v554
        %v569 = vpack.c.b16 %v557, %v556
        %v570 = vpack.c.b16 %v559, %v558
        %v571 = vpack.c.b16 %v561, %v560
        %v572 = vpack.c.b16 %v563, %v562
        %v573 = vpack.c.b16 %v565, %v564
        %582 = vmatprep.subr.bf16.mxu0 0
        %583 = vmatpush1.bf16.msra.mxu0 %v566
        %584 = vmatprep.subr.bf16.mxu0 0
        %585 = vmatpush1.bf16.msra.mxu0 %v567
        %586 = vmatprep.subr.bf16.mxu0 0
        %587 = vmatpush1.bf16.msra.mxu0 %v568
        %588 = vmatprep.subr.bf16.mxu0 0
        %589 = vmatpush1.bf16.msra.mxu0 %v569
        %590 = vmatprep.subr.bf16.mxu0 0
        %591 = vmatpush1.bf16.msra.mxu0 %v570
        %592 = vmatprep.subr.bf16.mxu0 0
        %593 = vmatpush1.bf16.msra.mxu0 %v571
        %594 = vmatprep.subr.bf16.mxu0 0
        %595 = vmatpush1.bf16.msra.mxu0 %v572
        %596 = vmatprep.subr.bf16.mxu0 0
        %597 = vmatpush1.bf16.msra.mxu0 %v573
        %598 = vmatprep.subr.bf16.mxu0 0
        %599 = vmatpush1.bf16.msra.mxu0 0
        %600 = vmatprep.subr.bf16.mxu0 0
        %601 = vmatpush1.bf16.msra.mxu0 0
        %602 = vmatprep.subr.bf16.mxu0 0
        %603 = vmatpush1.bf16.msra.mxu0 0
        %604 = vmatprep.subr.bf16.mxu0 0
        %605 = vmatpush1.bf16.msra.mxu0 0
        %606 = vmatprep.subr.bf16.mxu0 0
        %607 = vmatpush1.bf16.msra.mxu0 0
        %608 = vmatprep.subr.bf16.mxu0 0
        %609 = vmatpush1.bf16.msra.mxu0 0
        %610 = vmatprep.subr.bf16.mxu0 0
        %611 = vmatpush1.bf16.msra.mxu0 0
        %612 = vmatprep.subr.bf16.mxu0 0
        %613 = vmatpush1.bf16.msra.mxu0 0
        %614 = vmatprep.mubr.bf16.mxu0 0
        %615 = vmatmul.mubr.bf16.gmra.mrb[0].mxu0 %v518
        %v616 = vpop.f32.mrb[0].mxu0
        %v617 = vadd.f32 0.0, %v616
        %v618 = vpop.f32.mrb[0].mxu0
        %v619 = vpop.f32.mrb[0].mxu0
        %v620 = vadd.f32 0.0, %v619
        %v621 = vpop.f32.mrb[0].mxu0
        %622 = vmatprep.mubr.bf16.mxu0 0
        %623 = vmatmul.mubr.bf16.gmra.mrb[0].mxu0 %v519
        %v624 = vpop.f32.mrb[0].mxu0
        %v625 = vadd.f32 0.0, %v624
        %v626 = vpop.f32.mrb[0].mxu0
        %v627 = vpop.f32.mrb[0].mxu0
        %v628 = vadd.f32 0.0, %v627
        %v629 = vpop.f32.mrb[0].mxu0
        %630 = vmatprep.mubr.bf16.mxu0 0
        %631 = vmatmul.mubr.bf16.gmra.mrb[0].mxu0 %v520
        %v632 = vpop.f32.mrb[0].mxu0
        %v633 = vadd.f32 0.0, %v632
        %v634 = vpop.f32.mrb[0].mxu0
        %v635 = vpop.f32.mrb[0].mxu0
        %v636 = vadd.f32 0.0, %v635
        %v637 = vpop.f32.mrb[0].mxu0
        %638 = vmatprep.mubr.bf16.mxu0 0
        %639 = vmatmul.mubr.bf16.gmra.mrb[0].mxu0 %v521
        %v640 = vpop.f32.mrb[0].mxu0
        %v641 = vadd.f32 0.0, %v640
        %v642 = vpop.f32.mrb[0].mxu0
        %v643 = vpop.f32.mrb[0].mxu0
        %v644 = vadd.f32 0.0, %v643
        %v645 = vpop.f32.mrb[0].mxu0
        %646 = vmatprep.mubr.bf16.mxu0 0
        %647 = vmatmul.mubr.bf16.gmra.mrb[0].mxu0 %v522
        %v648 = vpop.f32.mrb[0].mxu0
        %v649 = vadd.f32 0.0, %v648
        %v650 = vpop.f32.mrb[0].mxu0
        %v651 = vpop.f32.mrb[0].mxu0
        %v652 = vadd.f32 0.0, %v651
        %v653 = vpop.f32.mrb[0].mxu0
        %654 = vmatprep.mubr.bf16.mxu0 0
        %655 = vmatmul.mubr.bf16.gmra.mrb[0].mxu0 %v523
        %v656 = vpop.f32.mrb[0].mxu0
        %v657 = vadd.f32 0.0, %v656
        %v658 = vpop.f32.mrb[0].mxu0
        %v659 = vpop.f32.mrb[0].mxu0
        %v660 = vadd.f32 0.0, %v659
        %v661 = vpop.f32.mrb[0].mxu0
        %662 = vmatprep.mubr.bf16.mxu0 0
        %663 = vmatmul.mubr.bf16.gmra.mrb[0].mxu0 %v524
        %v664 = vpop.f32.mrb[0].mxu0
        %v665 = vadd.f32 0.0, %v664
        %v666 = vpop.f32.mrb[0].mxu0
        %v667 = vpop.f32.mrb[0].mxu0
        %v668 = vadd.f32 0.0, %v667
        %v669 = vpop.f32.mrb[0].mxu0
        %670 = vmatprep.mubr.bf16.mxu0 0
        %671 = vmatmul.mubr.bf16.gmra.mrb[0].mxu0 %v525
        %v672 = vpop.f32.mrb[0].mxu0
        %v673 = vadd.f32 0.0, %v672
        %v674 = vpop.f32.mrb[0].mxu0
        %v675 = vpop.f32.mrb[0].mxu0
        %v676 = vadd.f32 0.0, %v675
        %v677 = vpop.f32.mrb[0].mxu0
        %678 = vdwg.mxu0
        %v679 = vadd.f32 %v438, %v617
        %v680 = vadd.f32 %v439, %v620
        %v681 = vadd.f32 %v440, %v625
        %v682 = vadd.f32 %v441, %v628
        %v683 = vadd.f32 %v442, %v633
        %v684 = vadd.f32 %v443, %v636
        %v685 = vadd.f32 %v444, %v641
        %v686 = vadd.f32 %v445, %v644
        %v687 = vadd.f32 %v446, %v649
        %v688 = vadd.f32 %v447, %v652
        %v689 = vadd.f32 %v448, %v657
        %v690 = vadd.f32 %v449, %v660
        %v691 = vadd.f32 %v450, %v665
        %v692 = vadd.f32 %v451, %v668
        %v693 = vadd.f32 %v452, %v673
        %v694 = vadd.f32 %v453, %v676
        %695 = vst [vmem:[#allocation2] sm:$0xff] %v679
        %696 = vst [vmem:[#allocation2 + $0x8] sm:$0xff] %v680
        %697 = vst [vmem:[#allocation2 + $0x10] sm:$0xff] %v681
        %698 = vst [vmem:[#allocation2 + $0x18] sm:$0xff] %v682
        %699 = vst [vmem:[#allocation2 + $0x20] sm:$0xff] %v683
        %700 = vst [vmem:[#allocation2 + $0x28] sm:$0xff] %v684
        %701 = vst [vmem:[#allocation2 + $0x30] sm:$0xff] %v685
        %702 = vst [vmem:[#allocation2 + $0x38] sm:$0xff] %v686
        %703 = vst [vmem:[#allocation2 + $0x40] sm:$0xff] %v687
        %704 = vst [vmem:[#allocation2 + $0x48] sm:$0xff] %v688
        %705 = vst [vmem:[#allocation2 + $0x50] sm:$0xff] %v689
        %706 = vst [vmem:[#allocation2 + $0x58] sm:$0xff] %v690
        %707 = vst [vmem:[#allocation2 + $0x60] sm:$0xff] %v691
        %708 = vst [vmem:[#allocation2 + $0x68] sm:$0xff] %v692
        %709 = vst [vmem:[#allocation2 + $0x70] sm:$0xff] %v693
        %710 = vst [vmem:[#allocation2 + $0x78] sm:$0xff] %v694
        %p711 = scmp.eq.s32.totalorder %s23, 2
        // Predicated region
        $region90: #{graph_skip_forward.5} parent=80 // pred_check
          %p712 = pneg %p711
        $region91: #{graph_skip_forward.5} parent=80 // pred_check_branch
          %714 = sbr.rel (%p712) target = $region93
        $region92: #{graph_skip_forward.5} parent=80 // pred_region
          %v715 = vld [vmem:[#allocation2] sm:$0xff]
          %v716 = vld [vmem:[#allocation2 + $0x8] sm:$0xff]
          %v717 = vld [vmem:[#allocation2 + $0x10] sm:$0xff]
          %v718 = vld [vmem:[#allocation2 + $0x18] sm:$0xff]
          %v719 = vld [vmem:[#allocation2 + $0x20] sm:$0xff]
          %v720 = vld [vmem:[#allocation2 + $0x28] sm:$0xff]
          %v721 = vld [vmem:[#allocation2 + $0x30] sm:$0xff]
          %v722 = vld [vmem:[#allocation2 + $0x38] sm:$0xff]
          %v723 = vld [vmem:[#allocation2 + $0x40] sm:$0xff]
          %v724 = vld [vmem:[#allocation2 + $0x48] sm:$0xff]
          %v725 = vld [vmem:[#allocation2 + $0x50] sm:$0xff]
          %v726 = vld [vmem:[#allocation2 + $0x58] sm:$0xff]
          %v727 = vld [vmem:[#allocation2 + $0x60] sm:$0xff]
          %v728 = vld [vmem:[#allocation2 + $0x68] sm:$0xff]
          %v729 = vld [vmem:[#allocation2 + $0x70] sm:$0xff]
          %v730 = vld [vmem:[#allocation2 + $0x78] sm:$0xff]
          %v731 = vpack.c.bf16 %v716, %v715
          %v732 = vpack.c.bf16 %v718, %v717
          %v733 = vpack.c.bf16 %v720, %v719
          %v734 = vpack.c.bf16 %v722, %v721
          %v735 = vpack.c.bf16 %v724, %v723
          %v736 = vpack.c.bf16 %v726, %v725
          %v737 = vpack.c.bf16 %v728, %v727
          %v738 = vpack.c.bf16 %v730, %v729
          %v739 = vld [vmem:[%s409] sm:$0xf]
          %v740 = vld [vmem:[%s409 + $0x4] sm:$0xf]
          %v741 = vld [vmem:[%s409 + $0x8] sm:$0xf]
          %v742 = vld [vmem:[%s409 + $0xc] sm:$0xf]
          %v743 = vld [vmem:[%s409 + $0x10] sm:$0xf]
          %v744 = vld [vmem:[%s409 + $0x14] sm:$0xf]
          %v745 = vld [vmem:[%s409 + $0x18] sm:$0xf]
          %v746 = vld [vmem:[%s409 + $0x1c] sm:$0xf]
          %v747 = vld [vmem:[%s409 + $0x20] sm:$0xf]
          %v748 = vld [vmem:[%s409 + $0x24] sm:$0xf]
          %v749 = vld [vmem:[%s409 + $0x28] sm:$0xf]
          %v750 = vld [vmem:[%s409 + $0x2c] sm:$0xf]
          %v751 = vld [vmem:[%s409 + $0x30] sm:$0xf]
          %v752 = vld [vmem:[%s409 + $0x34] sm:$0xf]
          %v753 = vld [vmem:[%s409 + $0x38] sm:$0xf]
          %v754 = vld [vmem:[%s409 + $0x3c] sm:$0xf]
          %v771 = vunpack.c.l.b16 %v739
          %v772 = vunpack.c.l.b16 %v740
          %v773 = vunpack.c.l.b16 %v741
          %v774 = vunpack.c.l.b16 %v742
          %v775 = vunpack.c.l.b16 %v743
          %v776 = vunpack.c.l.b16 %v744
          %v777 = vunpack.c.l.b16 %v745
          %v778 = vunpack.c.l.b16 %v746
          %v779 = vunpack.c.l.b16 %v747
          %v780 = vunpack.c.l.b16 %v748
          %v781 = vunpack.c.l.b16 %v749
          %v782 = vunpack.c.l.b16 %v750
          %v783 = vunpack.c.l.b16 %v751
          %v784 = vunpack.c.l.b16 %v752
          %v785 = vunpack.c.l.b16 %v753
          %v786 = vunpack.c.l.b16 %v754
          %v787 = vpack.c.b16 %v772, %v771
          %v788 = vpack.c.b16 %v774, %v773
          %v789 = vpack.c.b16 %v776, %v775
          %v790 = vpack.c.b16 %v778, %v777
          %v791 = vpack.c.b16 %v780, %v779
          %v792 = vpack.c.b16 %v782, %v781
          %v793 = vpack.c.b16 %v784, %v783
          %v794 = vpack.c.b16 %v786, %v785
          %v803 = vld [vmem:[%s3] sm:$0xf]
          %v804 = vld [vmem:[%s3 + $0x4] sm:$0xf]
          %v805 = vld [vmem:[%s3 + $0x8] sm:$0xf]
          %v806 = vld [vmem:[%s3 + $0xc] sm:$0xf]
          %v807 = vld [vmem:[%s3 + $0x10] sm:$0xf]
          %v808 = vld [vmem:[%s3 + $0x14] sm:$0xf]
          %v809 = vld [vmem:[%s3 + $0x18] sm:$0xf]
          %v810 = vld [vmem:[%s3 + $0x1c] sm:$0xf]
          %v811 = vld [vmem:[%s3 + $0x20] sm:$0xf]
          %v812 = vld [vmem:[%s3 + $0x24] sm:$0xf]
          %v813 = vld [vmem:[%s3 + $0x28] sm:$0xf]
          %v814 = vld [vmem:[%s3 + $0x2c] sm:$0xf]
          %v815 = vld [vmem:[%s3 + $0x30] sm:$0xf]
          %v816 = vld [vmem:[%s3 + $0x34] sm:$0xf]
          %v817 = vld [vmem:[%s3 + $0x38] sm:$0xf]
          %v818 = vld [vmem:[%s3 + $0x3c] sm:$0xf]
          %v819 = vld [vmem:[%s3 + $0x40] sm:$0xf]
          %v820 = vld [vmem:[%s3 + $0x44] sm:$0xf]
          %v821 = vld [vmem:[%s3 + $0x48] sm:$0xf]
          %v822 = vld [vmem:[%s3 + $0x4c] sm:$0xf]
          %v823 = vld [vmem:[%s3 + $0x50] sm:$0xf]
          %v824 = vld [vmem:[%s3 + $0x54] sm:$0xf]
          %v825 = vld [vmem:[%s3 + $0x58] sm:$0xf]
          %v826 = vld [vmem:[%s3 + $0x5c] sm:$0xf]
          %v827 = vld [vmem:[%s3 + $0x60] sm:$0xf]
          %v828 = vld [vmem:[%s3 + $0x64] sm:$0xf]
          %v829 = vld [vmem:[%s3 + $0x68] sm:$0xf]
          %v830 = vld [vmem:[%s3 + $0x6c] sm:$0xf]
          %v831 = vld [vmem:[%s3 + $0x70] sm:$0xf]
          %v832 = vld [vmem:[%s3 + $0x74] sm:$0xf]
          %v833 = vld [vmem:[%s3 + $0x78] sm:$0xf]
          %v834 = vld [vmem:[%s3 + $0x7c] sm:$0xf]
          %v835 = vld [vmem:[%s4] sm:$0x1]
          %v837 = vlaneseq
          %v838 = vshrl.u32 %v837, 7
          %v839 = vsub.s32 0, %v838
          %v840 = vrot.slane %v835, %v839
          %v874 = vunpack.c.l.b16 %v803
          %v875 = vunpack.c.l.b16 %v804
          %v876 = vunpack.c.l.b16 %v805
          %v877 = vunpack.c.l.b16 %v806
          %v878 = vunpack.c.l.b16 %v807
          %v879 = vunpack.c.l.b16 %v808
          %v880 = vunpack.c.l.b16 %v809
          %v881 = vunpack.c.l.b16 %v810
          %v882 = vunpack.c.l.b16 %v811
          %v883 = vunpack.c.l.b16 %v812
          %v884 = vunpack.c.l.b16 %v813
          %v885 = vunpack.c.l.b16 %v814
          %v886 = vunpack.c.l.b16 %v815
          %v887 = vunpack.c.l.b16 %v816
          %v888 = vunpack.c.l.b16 %v817
          %v889 = vunpack.c.l.b16 %v818
          %v890 = vunpack.c.l.b16 %v819
          %v891 = vunpack.c.l.b16 %v820
          %v892 = vunpack.c.l.b16 %v821
          %v893 = vunpack.c.l.b16 %v822
          %v894 = vunpack.c.l.b16 %v823
          %v895 = vunpack.c.l.b16 %v824
          %v896 = vunpack.c.l.b16 %v825
          %v897 = vunpack.c.l.b16 %v826
          %v898 = vunpack.c.l.b16 %v827
          %v899 = vunpack.c.l.b16 %v828
          %v900 = vunpack.c.l.b16 %v829
          %v901 = vunpack.c.l.b16 %v830
          %v902 = vunpack.c.l.b16 %v831
          %v903 = vunpack.c.l.b16 %v832
          %v904 = vunpack.c.l.b16 %v833
          %v905 = vunpack.c.l.b16 %v834
          %v906 = vpack.c.b16 %v875, %v874
          %v907 = vpack.c.b16 %v877, %v876
          %v908 = vpack.c.b16 %v879, %v878
          %v909 = vpack.c.b16 %v881, %v880
          %v910 = vpack.c.b16 %v883, %v882
          %v911 = vpack.c.b16 %v885, %v884
          %v912 = vpack.c.b16 %v887, %v886
          %v913 = vpack.c.b16 %v889, %v888
          %v914 = vpack.c.b16 %v891, %v890
          %v915 = vpack.c.b16 %v893, %v892
          %v916 = vpack.c.b16 %v895, %v894
          %v917 = vpack.c.b16 %v897, %v896
          %v918 = vpack.c.b16 %v899, %v898
          %v919 = vpack.c.b16 %v901, %v900
          %v920 = vpack.c.b16 %v903, %v902
          %v921 = vpack.c.b16 %v905, %v904
          %938 = vmatprep.subr.bf16.mxu0 0
          %939 = vmatpush1.bf16.msra.mxu0 %v906
          %940 = vmatprep.subr.bf16.mxu0 0
          %941 = vmatpush1.bf16.msra.mxu0 %v907
          %942 = vmatprep.subr.bf16.mxu0 0
          %943 = vmatpush1.bf16.msra.mxu0 %v908
          %944 = vmatprep.subr.bf16.mxu0 0
          %945 = vmatpush1.bf16.msra.mxu0 %v909
          %946 = vmatprep.subr.bf16.mxu0 0
          %947 = vmatpush1.bf16.msra.mxu0 %v910
          %948 = vmatprep.subr.bf16.mxu0 0
          %949 = vmatpush1.bf16.msra.mxu0 %v911
          %950 = vmatprep.subr.bf16.mxu0 0
          %951 = vmatpush1.bf16.msra.mxu0 %v912
          %952 = vmatprep.subr.bf16.mxu0 0
          %953 = vmatpush1.bf16.msra.mxu0 %v913
          %954 = vmatprep.subr.bf16.mxu0 0
          %955 = vmatpush1.bf16.msra.mxu0 %v914
          %956 = vmatprep.subr.bf16.mxu0 0
          %957 = vmatpush1.bf16.msra.mxu0 %v915
          %958 = vmatprep.subr.bf16.mxu0 0
          %959 = vmatpush1.bf16.msra.mxu0 %v916
          %960 = vmatprep.subr.bf16.mxu0 0
          %961 = vmatpush1.bf16.msra.mxu0 %v917
          %962 = vmatprep.subr.bf16.mxu0 0
          %963 = vmatpush1.bf16.msra.mxu0 %v918
          %964 = vmatprep.subr.bf16.mxu0 0
          %965 = vmatpush1.bf16.msra.mxu0 %v919
          %966 = vmatprep.subr.bf16.mxu0 0
          %967 = vmatpush1.bf16.msra.mxu0 %v920
          %968 = vmatprep.subr.bf16.mxu0 0
          %969 = vmatpush1.bf16.msra.mxu0 %v921
          %970 = vmatprep.mubr.bf16.mxu0 %v787
          %971 = vmatmul.mubr.bf16.gmra.mrb[0].mxu0 %v731
          %v972 = vpop.f32.mrb[0].mxu0
          %v973 = vadd.f32 %v840, %v972
          %v974 = vpop.f32.mrb[0].mxu0
          %v975 = vpop.f32.mrb[0].mxu0
          %v976 = vadd.f32 %v840, %v975
          %v977 = vpop.f32.mrb[0].mxu0
          %978 = vmatprep.mubr.bf16.mxu0 %v788
          %979 = vmatmul.mubr.bf16.gmra.mrb[0].mxu0 %v732
          %v980 = vpop.f32.mrb[0].mxu0
          %v981 = vadd.f32 %v840, %v980
          %v982 = vpop.f32.mrb[0].mxu0
          %v983 = vpop.f32.mrb[0].mxu0
          %v984 = vadd.f32 %v840, %v983
          %v985 = vpop.f32.mrb[0].mxu0
          %986 = vmatprep.mubr.bf16.mxu0 %v789
          %987 = vmatmul.mubr.bf16.gmra.mrb[0].mxu0 %v733
          %v988 = vpop.f32.mrb[0].mxu0
          %v989 = vadd.f32 %v840, %v988
          %v990 = vpop.f32.mrb[0].mxu0
          %v991 = vpop.f32.mrb[0].mxu0
          %v992 = vadd.f32 %v840, %v991
          %v993 = vpop.f32.mrb[0].mxu0
          %994 = vmatprep.mubr.bf16.mxu0 %v790
          %995 = vmatmul.mubr.bf16.gmra.mrb[0].mxu0 %v734
          %v996 = vpop.f32.mrb[0].mxu0
          %v997 = vadd.f32 %v840, %v996
          %v998 = vpop.f32.mrb[0].mxu0
          %v999 = vpop.f32.mrb[0].mxu0
          %v1000 = vadd.f32 %v840, %v999
          %v1001 = vpop.f32.mrb[0].mxu0
          %1002 = vmatprep.mubr.bf16.mxu0 %v791
          %1003 = vmatmul.mubr.bf16.gmra.mrb[0].mxu0 %v735
          %v1004 = vpop.f32.mrb[0].mxu0
          %v1005 = vadd.f32 %v840, %v1004
          %v1006 = vpop.f32.mrb[0].mxu0
          %v1007 = vpop.f32.mrb[0].mxu0
          %v1008 = vadd.f32 %v840, %v1007
          %v1009 = vpop.f32.mrb[0].mxu0
          %1010 = vmatprep.mubr.bf16.mxu0 %v792
          %1011 = vmatmul.mubr.bf16.gmra.mrb[0].mxu0 %v736
          %v1012 = vpop.f32.mrb[0].mxu0
          %v1013 = vadd.f32 %v840, %v1012
          %v1014 = vpop.f32.mrb[0].mxu0
          %v1015 = vpop.f32.mrb[0].mxu0
          %v1016 = vadd.f32 %v840, %v1015
          %v1017 = vpop.f32.mrb[0].mxu0
          %1018 = vmatprep.mubr.bf16.mxu0 %v793
          %1019 = vmatmul.mubr.bf16.gmra.mrb[0].mxu0 %v737
          %v1020 = vpop.f32.mrb[0].mxu0
          %v1021 = vadd.f32 %v840, %v1020
          %v1022 = vpop.f32.mrb[0].mxu0
          %v1023 = vpop.f32.mrb[0].mxu0
          %v1024 = vadd.f32 %v840, %v1023
          %v1025 = vpop.f32.mrb[0].mxu0
          %1026 = vmatprep.mubr.bf16.mxu0 %v794
          %1027 = vmatmul.mubr.bf16.gmra.mrb[0].mxu0 %v738
          %v1028 = vpop.f32.mrb[0].mxu0
          %v1029 = vadd.f32 %v840, %v1028
          %v1030 = vpop.f32.mrb[0].mxu0
          %v1031 = vpop.f32.mrb[0].mxu0
          %v1032 = vadd.f32 %v840, %v1031
          %v1033 = vpop.f32.mrb[0].mxu0
          %1034 = vdwg.mxu0
          %s1035 = sld [smem:[#allocation3]]
          %vm1036 = vcmp.ge.f32.partialorder %v973, 0.0
          %vm1037 = vcmp.ge.f32.partialorder %v976, 0.0
          %vm1038 = vcmp.ge.f32.partialorder %v981, 0.0
          %vm1039 = vcmp.ge.f32.partialorder %v984, 0.0
          %vm1040 = vcmp.ge.f32.partialorder %v989, 0.0
          %vm1041 = vcmp.ge.f32.partialorder %v992, 0.0
          %vm1042 = vcmp.ge.f32.partialorder %v997, 0.0
          %vm1043 = vcmp.ge.f32.partialorder %v1000, 0.0
          %vm1044 = vcmp.ge.f32.partialorder %v1005, 0.0
          %vm1045 = vcmp.ge.f32.partialorder %v1008, 0.0
          %vm1046 = vcmp.ge.f32.partialorder %v1013, 0.0
          %vm1047 = vcmp.ge.f32.partialorder %v1016, 0.0
          %vm1048 = vcmp.ge.f32.partialorder %v1021, 0.0
          %vm1049 = vcmp.ge.f32.partialorder %v1024, 0.0
          %vm1050 = vcmp.ge.f32.partialorder %v1029, 0.0
          %vm1051 = vcmp.ge.f32.partialorder %v1032, 0.0
          %v1052 = vstv %s1035
          %v1053 = vmul.f32 %v1052, %v973
          %v1054 = vmul.f32 %v1052, %v976
          %v1055 = vmul.f32 %v1052, %v981
          %v1056 = vmul.f32 %v1052, %v984
          %v1057 = vmul.f32 %v1052, %v989
          %v1058 = vmul.f32 %v1052, %v992
          %v1059 = vmul.f32 %v1052, %v997
          %v1060 = vmul.f32 %v1052, %v1000
          %v1061 = vmul.f32 %v1052, %v1005
          %v1062 = vmul.f32 %v1052, %v1008
          %v1063 = vmul.f32 %v1052, %v1013
          %v1064 = vmul.f32 %v1052, %v1016
          %v1065 = vmul.f32 %v1052, %v1021
          %v1066 = vmul.f32 %v1052, %v1024
          %v1067 = vmul.f32 %v1052, %v1029
          %v1068 = vmul.f32 %v1052, %v1032
          %v1069 = vsel %vm1036, %v973, %v1053
          %v1070 = vsel %vm1037, %v976, %v1054
          %v1071 = vsel %vm1038, %v981, %v1055
          %v1072 = vsel %vm1039, %v984, %v1056
          %v1073 = vsel %vm1040, %v989, %v1057
          %v1074 = vsel %vm1041, %v992, %v1058
          %v1075 = vsel %vm1042, %v997, %v1059
          %v1076 = vsel %vm1043, %v1000, %v1060
          %v1077 = vsel %vm1044, %v1005, %v1061
          %v1078 = vsel %vm1045, %v1008, %v1062
          %v1079 = vsel %vm1046, %v1013, %v1063
          %v1080 = vsel %vm1047, %v1016, %v1064
          %v1081 = vsel %vm1048, %v1021, %v1065
          %v1082 = vsel %vm1049, %v1024, %v1066
          %v1083 = vsel %vm1050, %v1029, %v1067
          %v1084 = vsel %vm1051, %v1032, %v1068
          %1085 = vst [vmem:[%s415] sm:$0xff] %v1069
          %1086 = vst [vmem:[%s415 + $0x8] sm:$0xff] %v1070
          %1087 = vst [vmem:[%s415 + $0x10] sm:$0xff] %v1071
          %1088 = vst [vmem:[%s415 + $0x18] sm:$0xff] %v1072
          %1089 = vst [vmem:[%s415 + $0x20] sm:$0xff] %v1073
          %1090 = vst [vmem:[%s415 + $0x28] sm:$0xff] %v1074
          %1091 = vst [vmem:[%s415 + $0x30] sm:$0xff] %v1075
          %1092 = vst [vmem:[%s415 + $0x38] sm:$0xff] %v1076
          %1093 = vst [vmem:[%s415 + $0x40] sm:$0xff] %v1077
          %1094 = vst [vmem:[%s415 + $0x48] sm:$0xff] %v1078
          %1095 = vst [vmem:[%s415 + $0x50] sm:$0xff] %v1079
          %1096 = vst [vmem:[%s415 + $0x58] sm:$0xff] %v1080
          %1097 = vst [vmem:[%s415 + $0x60] sm:$0xff] %v1081
          %1098 = vst [vmem:[%s415 + $0x68] sm:$0xff] %v1082
          %1099 = vst [vmem:[%s415 + $0x70] sm:$0xff] %v1083
          %1100 = vst [vmem:[%s415 + $0x78] sm:$0xff] %v1084
        $region93: #{graph_skip_forward.5} parent=80 // pred_fallthru
          _
        %s1101 = smul.u32 16, %s22
        %p1102 = scmp.lt.s32.totalorder %s1101, 47
        %s1103 = scalar_select %p1102, %s1101, 47
        %s1104 = smul.addr %s1103, 8
        %s1105 = scalar_lea.vmem %s6, %s1104
        // Predicated region
        $region94: #{graph_skip_forward.5} parent=80 // pred_check
          %p1106 = pneg %p191
        $region95: #{graph_skip_forward.5} parent=80 // pred_check_branch
          %1108 = sbr.rel (%p1106) target = $region97
        $region96: #{graph_skip_forward.5} parent=80 // pred_region
          %s1109 = smul.u32 16, %s22
        $region97: #{graph_skip_forward.5} parent=80 // pred_fallthru
          _
      $region81: #{graph_skip_forward.5} parent=5 // pred_fallthru
        _
      %p1110 = scmp.le.s32.totalorder 2, %s13
      // Predicated region
      $region98: #{graph_skip_forward.5} parent=5 // pred_check
        %p1111 = pneg %p1110
      $region99: #{graph_skip_forward.5} parent=5 // pred_check_branch
        %1113 = sbr.rel (%p1111) target = $region101
      $region100: #{graph_skip_forward.5} parent=5 // pred_region
        %s1114 = ssub.s32 %s13, 2
        // Predicated region
        $region102: #{graph_skip_forward.5} parent=100 // pred_check
          %p1115 = pneg %p197
        $region103: #{graph_skip_forward.5} parent=100 // pred_check_branch
          %1117 = sbr.rel (%p1115) target = $region105
        $region104: #{graph_skip_forward.5} parent=100 // pred_region
          %s1118 = smul.u32 16, %s24
          %p1119 = scmp.lt.s32.totalorder %s1118, 47
          %s1120 = scalar_select %p1119, %s1118, 47
          %s1121 = smul.addr %s1120, 8
          %s1122 = scalar_lea.vmem %s6, %s1121
        $region105: #{graph_skip_forward.5} parent=100 // pred_fallthru
          _
      $region101: #{graph_skip_forward.5} parent=5 // pred_fallthru
        _
    $region6: #{graph_skip_forward.5} parent=1 // loop_footer
      %s17 = sadd.s32 1, %s13
    $region7: #{graph_skip_forward.5} parent=1 // loop_footer_branch
      %12 = sbr.rel target = $region3
    $region8: #{graph_skip_forward.5} parent=1 // loop_exit
      _

</llo_original>
